<compile_context>
chip_gen: v5e
topology: v5e:2x2
jax: 0.10.0
libtpu: 0.0.40
codegen_flags: <defaults>
</compile_context>

<pallas_src>
import functools
import math

import jax
import jax.numpy as jnp
from jax.experimental import pallas as pl
from jax.experimental.pallas import tpu as pltpu

_MB = 1024 * 1024


# ---------------------------------------------------------------------------
# Per-generation tiling / VMEM configuration
# ---------------------------------------------------------------------------

def _round_up(x, m):
    return ((x + m - 1) // m) * m


def _cdiv(a, b):
    return -(-a // b)


def _chip_config():
    try:
        kind = jax.devices()[0].device_kind.lower()
    except Exception:
        kind = ""
    if "v7" in kind:
        # v7x: 64 MiB physical VMEM / TC, 2 TCs -> bigger N tiles, modest budget.
        return dict(tm_cap=512, tn_cap=1024, tk_cap=512, k_full_cap=4096,
                    vmem=48 * _MB, bn_budget=24 * _MB)
    if "v6" in kind or "v5e" in kind or "v5 lite" in kind or "v5lite" in kind:
        # 128 MiB VMEM: larger balanced M tiles, higher scoped-VMEM budget.
        return dict(tm_cap=1024, tn_cap=512, tk_cap=512, k_full_cap=4096,
                    vmem=100 * _MB, bn_budget=48 * _MB)
    return dict(tm_cap=512, tn_cap=512, tk_cap=512, k_full_cap=2048,
                vmem=48 * _MB, bn_budget=24 * _MB)


def _pick_m_tile(m, cap):
    """Balanced M tiling: full extent if it fits, else near-equal multiples of 16."""
    if m <= cap:
        return m, 1
    n_t = _cdiv(m, cap)
    tm = _round_up(_cdiv(m, n_t), 16)
    return tm, _cdiv(m, tm)


def _pick_lane_tile(size, cap, full_cap):
    """Lane-ish dim (K or N): full extent if it fits, else an exact 128-multiple
    divisor <= cap, else (rare fallback) pad up to a multiple of cap."""
    if size <= full_cap:
        return size, 1, size
    for t in range(cap, 0, -128):
        if size % t == 0:
            return t, size // t, size
    padded = _round_up(size, cap)
    return cap, padded // cap, padded


def _pick_bn_rows(m, n_cols, budget):
    """Streaming row-tile for the elementwise BN pass (independent of matmul tiles)."""
    per_row = n_cols * (4 + 2) * 2          # f32 input + bf16 output, double-buffered
    rows = max(8, (budget // per_row) // 8 * 8)
    rows = min(rows, 4096)
    if m <= rows:
        return m, 1
    n_t = _cdiv(m, rows)
    rows = _round_up(_cdiv(m, n_t), 8)
    return rows, _cdiv(m, rows)


# ---------------------------------------------------------------------------
# Pallas kernels
# ---------------------------------------------------------------------------

def _matmul_stats_kernel(x_ref, w_ref, y_ref, s1_ref, s2_ref, *, n_k, m_true, tm):
    """Tiled bf16 matmul, f32 accumulation directly in the k-resident output block;
    on the last K step also emits per-(M-tile, channel) sum / sum-of-squares.
    `m_true` (static) enables masking of the ragged last M tile for exact stats."""
    if n_k == 1:
        y_ref[...] = jnp.dot(x_ref[...], w_ref[...],
                             preferred_element_type=jnp.float32)
    else:
        @pl.when(pl.program_id(2) == 0)
        def _():
            y_ref[...] = jnp.zeros_like(y_ref)
        y_ref[...] += jnp.dot(x_ref[...], w_ref[...],
                              preferred_element_type=jnp.float32)

    def _stats():
        y = y_ref[...]
        if m_true is not None:
            rows = (pl.program_id(0) * tm
                    + jax.lax.broadcasted_iota(jnp.int32, y.shape, 0))
            y = jnp.where(rows < m_true, y, 0.0)
        s1_ref[...] = jnp.sum(y, axis=0, keepdims=True)[None]        # (1, 1, tn)
        s2_ref[...] = jnp.sum(y * y, axis=0, keepdims=True)[None]    # (1, 1, tn)

    if n_k == 1:
        _stats()
    else:
        pl.when(pl.program_id(2) == n_k - 1)(_stats)


def _bn_act_kernel(y_ref, scale_ref, shift_ref, o_ref, *, relu):
    """Elementwise BN apply (+ ReLU) in f32, bf16 store."""
    y = y_ref[...] * scale_ref[...] + shift_ref[...]
    if relu:
        y = jnp.maximum(y, 0.0)
    o_ref[...] = y.astype(o_ref.dtype)


# ---------------------------------------------------------------------------
# Fused conv (as matmul) + training-mode BatchNorm + ReLU
# ---------------------------------------------------------------------------

def conv_matmul_bn(x2d, w2d, gamma, beta, *, relu, eps=1e-5):
    """x2d: (M, K) bf16 patches; w2d: (K, Cout) bf16; returns (M, Cout) bf16."""
    m, k = x2d.shape
    n = w2d.shape[1]
    cfg = _chip_config()

    tm, n_m = _pick_m_tile(m, cfg["tm_cap"])
    tk, n_k, kp = _pick_lane_tile(k, cfg["tk_cap"], cfg["k_full_cap"])
    tn, n_n, np_ = _pick_lane_tile(n, cfg["tn_cap"], cfg["tn_cap"])

    gamma = gamma.astype(jnp.float32)
    beta = beta.astype(jnp.float32)
    # Rare fallback paths only (K/N with no exact tiling); normal layers pad nothing.
    if kp > k:
        x2d = jnp.pad(x2d, ((0, 0), (0, kp - k)))
        w2d = jnp.pad(w2d, ((0, kp - k), (0, 0)))
    if np_ > n:
        w2d = jnp.pad(w2d, ((0, 0), (0, np_ - n)))
        gamma = jnp.pad(gamma, (0, np_ - n), constant_values=1.0)
        beta = jnp.pad(beta, (0, np_ - n))

    # Ragged last M tile -> mask rows in the stats epilogue (output writes past M are
    # dropped automatically by Pallas).
    mask_m = m if (m % tm) != 0 else None

    y, s1, s2 = pl.pallas_call(
        functools.partial(_matmul_stats_kernel, n_k=n_k, m_true=mask_m, tm=tm),
        out_shape=(
            jax.ShapeDtypeStruct((m, np_), jnp.float32),
            jax.ShapeDtypeStruct((n_m, 1, np_), jnp.float32),
            jax.ShapeDtypeStruct((n_m, 1, np_), jnp.float32),
        ),
        grid=(n_m, n_n, n_k),
        in_specs=[
            pl.BlockSpec((tm, tk), lambda i, j, kk: (i, kk)),
            pl.BlockSpec((tk, tn), lambda i, j, kk: (kk, j)),
        ],
        out_specs=(
            pl.BlockSpec((tm, tn), lambda i, j, kk: (i, j)),
            pl.BlockSpec((1, 1, tn), lambda i, j, kk: (i, 0, j)),
            pl.BlockSpec((1, 1, tn), lambda i, j, kk: (i, 0, j)),
        ),
        compiler_params=pltpu.CompilerParams(
            dimension_semantics=("parallel", "parallel", "arbitrary"),
            vmem_limit_bytes=cfg["vmem"]),
    )(x2d, w2d)

    # Combine tiny per-M-tile partial stats and fold BN into scale/shift vectors.
    inv_m = 1.0 / float(m)
    csum = jnp.sum(s1, axis=(0, 1))
    csq = jnp.sum(s2, axis=(0, 1))
    mean = csum * inv_m
    var = jnp.maximum(csq * inv_m - mean * mean, 0.0)   # biased variance (PyTorch BN)
    scale = gamma * jax.lax.rsqrt(var + eps)
    shift = beta - mean * scale

    rows, n_bn = _pick_bn_rows(m, np_, cfg["bn_budget"])
    out = pl.pallas_call(
        functools.partial(_bn_act_kernel, relu=relu),
        out_shape=jax.ShapeDtypeStruct((m, np_), jnp.bfloat16),
        grid=(n_bn,),
        in_specs=[
            pl.BlockSpec((rows, np_), lambda i: (i, 0)),
            pl.BlockSpec((1, np_), lambda i: (0, 0)),
            pl.BlockSpec((1, np_), lambda i: (0, 0)),
        ],
        out_specs=pl.BlockSpec((rows, np_), lambda i: (i, 0)),
        compiler_params=pltpu.CompilerParams(
            dimension_semantics=("parallel",),
            vmem_limit_bytes=cfg["vmem"]),
    )(y, scale.reshape(1, np_), shift.reshape(1, np_))

    if np_ > n:
        out = out[:, :n]
    return out


# ---------------------------------------------------------------------------
# Plain-JAX glue: im2col / maxpool / layout plumbing
# ---------------------------------------------------------------------------

def _im2col(x_nhwc, kh, kw, stride, pad):
    # TODO(synk): replace with implicit GEMM inside the Pallas matmul (halo-resident
    # input slab + in-kernel tap gather); stride-2 window gathers are not expressible
    # via BlockSpec, so the patch matrix is still materialized by XLA here.
    n, h, w, c = x_nhwc.shape
    ho = (h + 2 * pad - kh) // stride + 1
    wo = (w + 2 * pad - kw) // stride + 1
    xp = jnp.pad(x_nhwc, ((0, 0), (pad, pad), (pad, pad), (0, 0)))
    cols = []
    for dy in range(kh):
        for dx in range(kw):
            cols.append(xp[:, dy:dy + stride * (ho - 1) + 1:stride,
                           dx:dx + stride * (wo - 1) + 1:stride, :])
    patches = jnp.concatenate(cols, axis=-1)            # (N, Ho, Wo, kh*kw*C), tap-major
    return patches.reshape(n * ho * wo, kh * kw * c), ho, wo


def conv_bn(x_nhwc, wmat, gamma, beta, *, kh, kw, stride, pad, relu=True):
    """x_nhwc: bf16 activations; wmat: prepared (kh*kw*Cin, Cout) bf16 weights."""
    n, h, w, cin = x_nhwc.shape
    cout = wmat.shape[1]
    if kh == 1 and kw == 1 and stride == 1 and pad == 0:
        patches, ho, wo = x_nhwc.reshape(n * h * w, cin), h, w   # 1x1 conv: no im2col
    else:
        patches, ho, wo = _im2col(x_nhwc, kh, kw, stride, pad)
    # Note: any constant conv bias is dropped — training-mode BN cancels it exactly.
    out = conv_matmul_bn(patches, wmat, gamma, beta, relu=relu)  # (M, Cout) bf16
    return out.reshape(n, ho, wo, cout)


def maxpool_3x3_s2_p1(x_nhwc):
    # Pairwise-maximum tree; XLA fuses this into one streaming pass over HBM (bf16).
    n, h, w, c = x_nhwc.shape
    ho = (h + 2 - 3) // 2 + 1
    wo = (w + 2 - 3) // 2 + 1
    xp = jnp.pad(x_nhwc, ((0, 0), (1, 1), (1, 1), (0, 0)),
                 constant_values=-jnp.inf)
    out = None
    for dy in range(3):
        for dx in range(3):
            win = xp[:, dy:dy + 2 * (ho - 1) + 1:2, dx:dx + 2 * (wo - 1) + 1:2, :]
            out = win if out is None else jnp.maximum(out, win)
    return out


# ---------------------------------------------------------------------------
# Model: parameter init + one-time prep + forward
# ---------------------------------------------------------------------------

def _init_conv(key, cout, cin, kh, kw):
    bound = 1.0 / math.sqrt(cin * kh * kw)
    return jax.random.uniform(key, (cout, cin, kh, kw), jnp.float32, -bound, bound)


def _init_bn(key, c):
    k1, k2 = jax.random.split(key)
    gamma = 1.0 + 0.1 * jax.random.normal(k1, (c,), jnp.float32)
    beta = 0.05 * jax.random.normal(k2, (c,), jnp.float32)
    return gamma, beta


def _init_bottleneck(key, in_c, out_c):
    k = jax.random.split(key, 6)
    g1, b1 = _init_bn(k[3], out_c)
    g2, b2 = _init_bn(k[4], out_c)
    g3, b3 = _init_bn(k[5], out_c * 4)
    return {
        "w1": _init_conv(k[0], out_c, in_c, 1, 1), "g1": g1, "b1": b1,
        "w2": _init_conv(k[1], out_c, out_c, 3, 3), "g2": g2, "b2": b2,
        "w3": _init_conv(k[2], out_c * 4, out_c, 1, 1), "g3": g3, "b3": b3,
    }


def init_arvn_resnet50(key, in_channels, base_channels=64):
    keys = jax.random.split(key, 18)
    kw_, kb_ = jax.random.split(keys[0])
    g, b = _init_bn(keys[1], base_channels)
    params = {
        "base": {
            "w": _init_conv(kw_, base_channels, in_channels, 7, 7),
            # Kept for parameter parity; unused in forward (cancels under training BN).
            "bias": 0.01 * jax.random.normal(kb_, (base_channels,), jnp.float32),
            "g": g, "b": b,
        },
    }
    layer_cfg = [
        ("layer1", base_channels,      base_channels,     3, 1),
        ("layer2", base_channels * 4,  base_channels * 2, 4, 2),
        ("layer3", base_channels * 8,  base_channels * 4, 6, 2),
        ("layer4", base_channels * 16, base_channels * 8, 3, 2),
    ]
    strides = {}
    kidx = 2
    for name, in_c, out_c, nlayers, stride in layer_cfg:
        blk_strides = [stride] + [1] * (nlayers - 1)
        blocks = []
        ic = in_c
        for s in blk_strides:
            blocks.append(_init_bottleneck(keys[kidx], ic, out_c))
            ic = out_c * 4
            kidx += 1
        params[name] = blocks
        strides[name] = blk_strides
    return params, strides


def _prep_w(w_oihw):
    """(Cout,Cin,kh,kw) -> (kh*kw*Cin, Cout) bf16, matching im2col tap order."""
    cout, cin, kh, kw = w_oihw.shape
    return (jnp.transpose(w_oihw, (2, 3, 1, 0))
            .reshape(kh * kw * cin, cout).astype(jnp.bfloat16))


def prepare_params(params):
    """One-time weight layout/cast prep, hoisted out of the per-forward path."""
    prep = {"base": {"wmat": _prep_w(params["base"]["w"]),
                     "g": params["base"]["g"], "b": params["base"]["b"]}}
    for name in ("layer1", "layer2", "layer3", "layer4"):
        blocks = []
        for p in params[name]:
            blocks.append({
                "w1": _prep_w(p["w1"]), "g1": p["g1"], "b1": p["b1"],
                "w2": _prep_w(p["w2"]), "g2": p["g2"], "b2": p["b2"],
                "w3": _prep_w(p["w3"]), "g3": p["g3"], "b3": p["b3"],
            })
        prep[name] = blocks
    return prep


def bottleneck_forward(x, p, stride):
    y = conv_bn(x, p["w1"], p["g1"], p["b1"], kh=1, kw=1, stride=1, pad=0, relu=True)
    y = conv_bn(y, p["w2"], p["g2"], p["b2"], kh=3, kw=3, stride=stride, pad=1, relu=True)
    # The PyTorch block returns self.ac(xp): the third conv's BN output goes straight
    # through ReLU; the residual/downsample branch is computed-then-discarded upstream.
    y = conv_bn(y, p["w3"], p["g3"], p["b3"], kh=1, kw=1, stride=1, pad=0, relu=True)
    return y


def arvn_resnet50_forward(x_nchw, prep, strides):
    x = jnp.transpose(x_nchw, (0, 2, 3, 1)).astype(jnp.bfloat16)   # NCHW -> NHWC, bf16
    bp = prep["base"]
    x = conv_bn(x, bp["wmat"], bp["g"], bp["b"], kh=7, kw=7, stride=2, pad=3, relu=True)
    x = maxpool_3x3_s2_p1(x)
    for name in ("layer1", "layer2", "layer3", "layer4"):
        for p, s in zip(prep[name], strides[name]):
            x = bottleneck_forward(x, p, s)
    return jnp.transpose(x.astype(jnp.float32), (0, 3, 1, 2))      # NHWC -> NCHW


if __name__ == "__main__":
    key = jax.random.PRNGKey(0)
    kp, kx = jax.random.split(key)
    in_channels, base_channels = 4, 8           # small but structure-consistent
    params, strides = init_arvn_resnet50(kp, in_channels, base_channels)
    prep = prepare_params(params)               # hoisted weight layout/cast prep
    x = jax.random.normal(kx, (2, in_channels, 16, 16), jnp.float32)

    fwd = jax.jit(lambda inp, p: arvn_resnet50_forward(inp, p, strides))
    out = jax.block_until_ready(fwd(x, prep))
    assert out.shape == (2, base_channels * 8 * 4, 1, 1), out.shape
    assert bool(jnp.all(jnp.isfinite(out)))
    print("KERNEL_OK")
</pallas_src>

<mosaic_0001>
module attributes {stable_mosaic.version = 11 : i64} {
  func.func @_matmul_stats_kernel(%arg0: i32, %arg1: i32, %arg2: i32, %arg3: memref<128x196xbf16, #tpu.memory_space<vmem>>, %arg4: memref<196x8xbf16, #tpu.memory_space<vmem>>, %arg5: memref<128x8xf32, #tpu.memory_space<vmem>>, %arg6: memref<1x1x8xf32, #tpu.memory_space<vmem>>, %arg7: memref<1x1x8xf32, #tpu.memory_space<vmem>>) attributes {dimension_semantics = [#tpu.dimension_semantics<parallel>, #tpu.dimension_semantics<parallel>, #tpu.dimension_semantics<arbitrary>], iteration_bounds = array<i64: 1, 1, 1>, scalar_prefetch = 0 : i64, scratch_operands = 0 : i64, tpu.core_type = #tpu.core_type<tc>, window_params = [{transform_indices = @transform_0, window_bounds = array<i64: 128, 196>}, {transform_indices = @transform_1, window_bounds = array<i64: 196, 8>}, {transform_indices = @transform_2, window_bounds = array<i64: 128, 8>}, {transform_indices = @transform_3, window_bounds = array<i64: 1, 1, 8>}, {transform_indices = @transform_4, window_bounds = array<i64: 1, 1, 8>}]} {
    %c0 = arith.constant 0 : index
    %c0_0 = arith.constant 0 : index
    %0 = vector.load %arg3[%c0, %c0_0] : memref<128x196xbf16, #tpu.memory_space<vmem>>, vector<128x196xbf16>
    %c0_1 = arith.constant 0 : index
    %c0_2 = arith.constant 0 : index
    %1 = vector.load %arg4[%c0_1, %c0_2] : memref<196x8xbf16, #tpu.memory_space<vmem>>, vector<196x8xbf16>
    %cst = arith.constant dense<0.000000e+00> : vector<128x8xf32>
    %2 = tpu.matmul %0, %1, %cst {dimension_numbers = #tpu.dot_dimension_numbers<[1], [0], [0], [1], [0, 0, 1, 1], [], []>} : vector<128x196xbf16>, vector<196x8xbf16>, vector<128x8xf32> -> vector<128x8xf32>
    %c0_3 = arith.constant 0 : index
    %c0_4 = arith.constant 0 : index
    %3 = vector.load %arg5[%c0_3, %c0_4] : memref<128x8xf32, #tpu.memory_space<vmem>>, vector<128x8xf32>
    tpu.vector_store %arg5[%c0_3, %c0_4], %2 {strides = array<i32>} : memref<128x8xf32, #tpu.memory_space<vmem>>, vector<128x8xf32>,
    %c0_5 = arith.constant 0 : index
    %c0_6 = arith.constant 0 : index
    %4 = vector.load %arg5[%c0_5, %c0_6] : memref<128x8xf32, #tpu.memory_space<vmem>>, vector<128x8xf32>
    %cst_7 = arith.constant dense<0.000000e+00> : vector<8xf32>
    %5 = vector.multi_reduction <add>, %4, %cst_7 [0] : vector<128x8xf32> to vector<8xf32>
    %6 = vector.shape_cast %5 : vector<8xf32> to vector<1x8xf32>
    %7 = vector.shape_cast %6 : vector<1x8xf32> to vector<1x1x8xf32>
    %c0_8 = arith.constant 0 : index
    %c0_9 = arith.constant 0 : index
    %c0_10 = arith.constant 0 : index
    %8 = vector.load %arg6[%c0_8, %c0_9, %c0_10] : memref<1x1x8xf32, #tpu.memory_space<vmem>>, vector<1x1x8xf32>
    tpu.vector_store %arg6[%c0_8, %c0_9, %c0_10], %7 {strides = array<i32>} : memref<1x1x8xf32, #tpu.memory_space<vmem>>, vector<1x1x8xf32>,
    %9 = arith.mulf %4, %4 : vector<128x8xf32>
    %cst_11 = arith.constant dense<0.000000e+00> : vector<8xf32>
    %10 = vector.multi_reduction <add>, %9, %cst_11 [0] : vector<128x8xf32> to vector<8xf32>
    %11 = vector.shape_cast %10 : vector<8xf32> to vector<1x8xf32>
    %12 = vector.shape_cast %11 : vector<1x8xf32> to vector<1x1x8xf32>
    %c0_12 = arith.constant 0 : index
    %c0_13 = arith.constant 0 : index
    %c0_14 = arith.constant 0 : index
    %13 = vector.load %arg7[%c0_12, %c0_13, %c0_14] : memref<1x1x8xf32, #tpu.memory_space<vmem>>, vector<1x1x8xf32>
    tpu.vector_store %arg7[%c0_12, %c0_13, %c0_14], %12 {strides = array<i32>} : memref<1x1x8xf32, #tpu.memory_space<vmem>>, vector<1x1x8xf32>,
    return
  }
  func.func @transform_0(%arg0: i32, %arg1: i32, %arg2: i32) -> (i32, i32) {
    %c0_i32 = arith.constant 0 : i32
    return %arg0, %arg2 : i32, i32
  }
  func.func @transform_1(%arg0: i32, %arg1: i32, %arg2: i32) -> (i32, i32) {
    %c0_i32 = arith.constant 0 : i32
    return %arg2, %arg1 : i32, i32
  }
  func.func @transform_2(%arg0: i32, %arg1: i32, %arg2: i32) -> (i32, i32) {
    %c0_i32 = arith.constant 0 : i32
    return %arg0, %arg1 : i32, i32
  }
  func.func @transform_3(%arg0: i32, %arg1: i32, %arg2: i32) -> (i32, i32, i32) {
    %c0_i32 = arith.constant 0 : i32
    %c0_i32_0 = arith.constant 0 : i32
    return %arg0, %c0_i32, %arg1 : i32, i32, i32
  }
  func.func @transform_4(%arg0: i32, %arg1: i32, %arg2: i32) -> (i32, i32, i32) {
    %c0_i32 = arith.constant 0 : i32
    %c0_i32_0 = arith.constant 0 : i32
    return %arg0, %c0_i32, %arg1 : i32, i32, i32
  }
}

module attributes {stable_mosaic.version = 11 : i64} {
  func.func @_bn_act_kernel(%arg0: i32, %arg1: memref<128x8xf32, #tpu.memory_space<vmem>>, %arg2: memref<1x8xf32, #tpu.memory_space<vmem>>, %arg3: memref<1x8xf32, #tpu.memory_space<vmem>>, %arg4: memref<128x8xbf16, #tpu.memory_space<vmem>>) attributes {dimension_semantics = [#tpu.dimension_semantics<parallel>], iteration_bounds = array<i64: 1>, scalar_prefetch = 0 : i64, scratch_operands = 0 : i64, tpu.core_type = #tpu.core_type<tc>, window_params = [{transform_indices = @transform_0, window_bounds = array<i64: 128, 8>}, {pipeline_mode = #tpu.pipeline_mode<synchronous>, transform_indices = @transform_1, window_bounds = array<i64: 1, 8>}, {pipeline_mode = #tpu.pipeline_mode<synchronous>, transform_indices = @transform_2, window_bounds = array<i64: 1, 8>}, {transform_indices = @transform_3, window_bounds = array<i64: 128, 8>}]} {
    %c0 = arith.constant 0 : index
    %c0_0 = arith.constant 0 : index
    %0 = vector.load %arg1[%c0, %c0_0] : memref<128x8xf32, #tpu.memory_space<vmem>>, vector<128x8xf32>
    %c0_1 = arith.constant 0 : index
    %c0_2 = arith.constant 0 : index
    %1 = vector.load %arg2[%c0_1, %c0_2] : memref<1x8xf32, #tpu.memory_space<vmem>>, vector<1x8xf32>
    %2 = vector.broadcast %1 : vector<1x8xf32> to vector<128x8xf32>
    %3 = arith.mulf %0, %2 : vector<128x8xf32>
    %c0_3 = arith.constant 0 : index
    %c0_4 = arith.constant 0 : index
    %4 = vector.load %arg3[%c0_3, %c0_4] : memref<1x8xf32, #tpu.memory_space<vmem>>, vector<1x8xf32>
    %5 = vector.broadcast %4 : vector<1x8xf32> to vector<128x8xf32>
    %6 = arith.addf %3, %5 : vector<128x8xf32>
    %cst = arith.constant 0.000000e+00 : f32
    %7 = vector.broadcast %cst : f32 to vector<128x8xf32>
    %8 = arith.maximumf %6, %7 : vector<128x8xf32>
    %9 = arith.truncf %8 : vector<128x8xf32> to vector<128x8xbf16>
    %c0_5 = arith.constant 0 : index
    %c0_6 = arith.constant 0 : index
    %10 = vector.load %arg4[%c0_5, %c0_6] : memref<128x8xbf16, #tpu.memory_space<vmem>>, vector<128x8xbf16>
    tpu.vector_store %arg4[%c0_5, %c0_6], %9 {strides = array<i32>} : memref<128x8xbf16, #tpu.memory_space<vmem>>, vector<128x8xbf16>,
    return
  }
  func.func @transform_0(%arg0: i32) -> (i32, i32) {
    %c0_i32 = arith.constant 0 : i32
    %c0_i32_0 = arith.constant 0 : i32
    return %arg0, %c0_i32 : i32, i32
  }
  func.func @transform_1(%arg0: i32) -> (i32, i32) {
    %c0_i32 = arith.constant 0 : i32
    %c0_i32_0 = arith.constant 0 : i32
    %c0_i32_1 = arith.constant 0 : i32
    return %c0_i32, %c0_i32_0 : i32, i32
  }
  func.func @transform_2(%arg0: i32) -> (i32, i32) {
    %c0_i32 = arith.constant 0 : i32
    %c0_i32_0 = arith.constant 0 : i32
    %c0_i32_1 = arith.constant 0 : i32
    return %c0_i32, %c0_i32_0 : i32, i32
  }
  func.func @transform_3(%arg0: i32) -> (i32, i32) {
    %c0_i32 = arith.constant 0 : i32
    %c0_i32_0 = arith.constant 0 : i32
    return %arg0, %c0_i32 : i32, i32
  }
}

module attributes {stable_mosaic.version = 11 : i64} {
  func.func @_matmul_stats_kernel(%arg0: i32, %arg1: i32, %arg2: i32, %arg3: memref<32x8xbf16, #tpu.memory_space<vmem>>, %arg4: memref<8x8xbf16, #tpu.memory_space<vmem>>, %arg5: memref<32x8xf32, #tpu.memory_space<vmem>>, %arg6: memref<1x1x8xf32, #tpu.memory_space<vmem>>, %arg7: memref<1x1x8xf32, #tpu.memory_space<vmem>>) attributes {dimension_semantics = [#tpu.dimension_semantics<parallel>, #tpu.dimension_semantics<parallel>, #tpu.dimension_semantics<arbitrary>], iteration_bounds = array<i64: 1, 1, 1>, scalar_prefetch = 0 : i64, scratch_operands = 0 : i64, tpu.core_type = #tpu.core_type<tc>, window_params = [{transform_indices = @transform_0, window_bounds = array<i64: 32, 8>}, {transform_indices = @transform_1, window_bounds = array<i64: 8, 8>}, {transform_indices = @transform_2, window_bounds = array<i64: 32, 8>}, {transform_indices = @transform_3, window_bounds = array<i64: 1, 1, 8>}, {transform_indices = @transform_4, window_bounds = array<i64: 1, 1, 8>}]} {
    %c0 = arith.constant 0 : index
    %c0_0 = arith.constant 0 : index
    %0 = vector.load %arg3[%c0, %c0_0] : memref<32x8xbf16, #tpu.memory_space<vmem>>, vector<32x8xbf16>
    %c0_1 = arith.constant 0 : index
    %c0_2 = arith.constant 0 : index
    %1 = vector.load %arg4[%c0_1, %c0_2] : memref<8x8xbf16, #tpu.memory_space<vmem>>, vector<8x8xbf16>
    %cst = arith.constant dense<0.000000e+00> : vector<32x8xf32>
    %2 = tpu.matmul %0, %1, %cst {dimension_numbers = #tpu.dot_dimension_numbers<[1], [0], [0], [1], [0, 0, 1, 1], [], []>} : vector<32x8xbf16>, vector<8x8xbf16>, vector<32x8xf32> -> vector<32x8xf32>
    %c0_3 = arith.constant 0 : index
    %c0_4 = arith.constant 0 : index
    %3 = vector.load %arg5[%c0_3, %c0_4] : memref<32x8xf32, #tpu.memory_space<vmem>>, vector<32x8xf32>
    tpu.vector_store %arg5[%c0_3, %c0_4], %2 {strides = array<i32>} : memref<32x8xf32, #tpu.memory_space<vmem>>, vector<32x8xf32>,
    %c0_5 = arith.constant 0 : index
    %c0_6 = arith.constant 0 : index
    %4 = vector.load %arg5[%c0_5, %c0_6] : memref<32x8xf32, #tpu.memory_space<vmem>>, vector<32x8xf32>
    %cst_7 = arith.constant dense<0.000000e+00> : vector<8xf32>
    %5 = vector.multi_reduction <add>, %4, %cst_7 [0] : vector<32x8xf32> to vector<8xf32>
    %6 = vector.shape_cast %5 : vector<8xf32> to vector<1x8xf32>
    %7 = vector.shape_cast %6 : vector<1x8xf32> to vector<1x1x8xf32>
    %c0_8 = arith.constant 0 : index
    %c0_9 = arith.constant 0 : index
    %c0_10 = arith.constant 0 : index
    %8 = vector.load %arg6[%c0_8, %c0_9, %c0_10] : memref<1x1x8xf32, #tpu.memory_space<vmem>>, vector<1x1x8xf32>
    tpu.vector_store %arg6[%c0_8, %c0_9, %c0_10], %7 {strides = array<i32>} : memref<1x1x8xf32, #tpu.memory_space<vmem>>, vector<1x1x8xf32>,
    %9 = arith.mulf %4, %4 : vector<32x8xf32>
    %cst_11 = arith.constant dense<0.000000e+00> : vector<8xf32>
    %10 = vector.multi_reduction <add>, %9, %cst_11 [0] : vector<32x8xf32> to vector<8xf32>
    %11 = vector.shape_cast %10 : vector<8xf32> to vector<1x8xf32>
    %12 = vector.shape_cast %11 : vector<1x8xf32> to vector<1x1x8xf32>
    %c0_12 = arith.constant 0 : index
    %c0_13 = arith.constant 0 : index
    %c0_14 = arith.constant 0 : index
    %13 = vector.load %arg7[%c0_12, %c0_13, %c0_14] : memref<1x1x8xf32, #tpu.memory_space<vmem>>, vector<1x1x8xf32>
    tpu.vector_store %arg7[%c0_12, %c0_13, %c0_14], %12 {strides = array<i32>} : memref<1x1x8xf32, #tpu.memory_space<vmem>>, vector<1x1x8xf32>,
    return
  }
  func.func @transform_0(%arg0: i32, %arg1: i32, %arg2: i32) -> (i32, i32) {
    %c0_i32 = arith.constant 0 : i32
    return %arg0, %arg2 : i32, i32
  }
  func.func @transform_1(%arg0: i32, %arg1: i32, %arg2: i32) -> (i32, i32) {
    %c0_i32 = arith.constant 0 : i32
    return %arg2, %arg1 : i32, i32
  }
  func.func @transform_2(%arg0: i32, %arg1: i32, %arg2: i32) -> (i32, i32) {
    %c0_i32 = arith.constant 0 : i32
    return %arg0, %arg1 : i32, i32
  }
  func.func @transform_3(%arg0: i32, %arg1: i32, %arg2: i32) -> (i32, i32, i32) {
    %c0_i32 = arith.constant 0 : i32
    %c0_i32_0 = arith.constant 0 : i32
    return %arg0, %c0_i32, %arg1 : i32, i32, i32
  }
  func.func @transform_4(%arg0: i32, %arg1: i32, %arg2: i32) -> (i32, i32, i32) {
    %c0_i32 = arith.constant 0 : i32
    %c0_i32_0 = arith.constant 0 : i32
    return %arg0, %c0_i32, %arg1 : i32, i32, i32
  }
}

module attributes {stable_mosaic.version = 11 : i64} {
  func.func @_bn_act_kernel(%arg0: i32, %arg1: memref<32x8xf32, #tpu.memory_space<vmem>>, %arg2: memref<1x8xf32, #tpu.memory_space<vmem>>, %arg3: memref<1x8xf32, #tpu.memory_space<vmem>>, %arg4: memref<32x8xbf16, #tpu.memory_space<vmem>>) attributes {dimension_semantics = [#tpu.dimension_semantics<parallel>], iteration_bounds = array<i64: 1>, scalar_prefetch = 0 : i64, scratch_operands = 0 : i64, tpu.core_type = #tpu.core_type<tc>, window_params = [{transform_indices = @transform_0, window_bounds = array<i64: 32, 8>}, {pipeline_mode = #tpu.pipeline_mode<synchronous>, transform_indices = @transform_1, window_bounds = array<i64: 1, 8>}, {pipeline_mode = #tpu.pipeline_mode<synchronous>, transform_indices = @transform_2, window_bounds = array<i64: 1, 8>}, {transform_indices = @transform_3, window_bounds = array<i64: 32, 8>}]} {
    %c0 = arith.constant 0 : index
    %c0_0 = arith.constant 0 : index
    %0 = vector.load %arg1[%c0, %c0_0] : memref<32x8xf32, #tpu.memory_space<vmem>>, vector<32x8xf32>
    %c0_1 = arith.constant 0 : index
    %c0_2 = arith.constant 0 : index
    %1 = vector.load %arg2[%c0_1, %c0_2] : memref<1x8xf32, #tpu.memory_space<vmem>>, vector<1x8xf32>
    %2 = vector.broadcast %1 : vector<1x8xf32> to vector<32x8xf32>
    %3 = arith.mulf %0, %2 : vector<32x8xf32>
    %c0_3 = arith.constant 0 : index
    %c0_4 = arith.constant 0 : index
    %4 = vector.load %arg3[%c0_3, %c0_4] : memref<1x8xf32, #tpu.memory_space<vmem>>, vector<1x8xf32>
    %5 = vector.broadcast %4 : vector<1x8xf32> to vector<32x8xf32>
    %6 = arith.addf %3, %5 : vector<32x8xf32>
    %cst = arith.constant 0.000000e+00 : f32
    %7 = vector.broadcast %cst : f32 to vector<32x8xf32>
    %8 = arith.maximumf %6, %7 : vector<32x8xf32>
    %9 = arith.truncf %8 : vector<32x8xf32> to vector<32x8xbf16>
    %c0_5 = arith.constant 0 : index
    %c0_6 = arith.constant 0 : index
    %10 = vector.load %arg4[%c0_5, %c0_6] : memref<32x8xbf16, #tpu.memory_space<vmem>>, vector<32x8xbf16>
    tpu.vector_store %arg4[%c0_5, %c0_6], %9 {strides = array<i32>} : memref<32x8xbf16, #tpu.memory_space<vmem>>, vector<32x8xbf16>,
    return
  }
  func.func @transform_0(%arg0: i32) -> (i32, i32) {
    %c0_i32 = arith.constant 0 : i32
    %c0_i32_0 = arith.constant 0 : i32
    return %arg0, %c0_i32 : i32, i32
  }
  func.func @transform_1(%arg0: i32) -> (i32, i32) {
    %c0_i32 = arith.constant 0 : i32
    %c0_i32_0 = arith.constant 0 : i32
    %c0_i32_1 = arith.constant 0 : i32
    return %c0_i32, %c0_i32_0 : i32, i32
  }
  func.func @transform_2(%arg0: i32) -> (i32, i32) {
    %c0_i32 = arith.constant 0 : i32
    %c0_i32_0 = arith.constant 0 : i32
    %c0_i32_1 = arith.constant 0 : i32
    return %c0_i32, %c0_i32_0 : i32, i32
  }
  func.func @transform_3(%arg0: i32) -> (i32, i32) {
    %c0_i32 = arith.constant 0 : i32
    %c0_i32_0 = arith.constant 0 : i32
    return %arg0, %c0_i32 : i32, i32
  }
}

module attributes {stable_mosaic.version = 11 : i64} {
  func.func @_matmul_stats_kernel(%arg0: i32, %arg1: i32, %arg2: i32, %arg3: memref<32x72xbf16, #tpu.memory_space<vmem>>, %arg4: memref<72x8xbf16, #tpu.memory_space<vmem>>, %arg5: memref<32x8xf32, #tpu.memory_space<vmem>>, %arg6: memref<1x1x8xf32, #tpu.memory_space<vmem>>, %arg7: memref<1x1x8xf32, #tpu.memory_space<vmem>>) attributes {dimension_semantics = [#tpu.dimension_semantics<parallel>, #tpu.dimension_semantics<parallel>, #tpu.dimension_semantics<arbitrary>], iteration_bounds = array<i64: 1, 1, 1>, scalar_prefetch = 0 : i64, scratch_operands = 0 : i64, tpu.core_type = #tpu.core_type<tc>, window_params = [{transform_indices = @transform_0, window_bounds = array<i64: 32, 72>}, {transform_indices = @transform_1, window_bounds = array<i64: 72, 8>}, {transform_indices = @transform_2, window_bounds = array<i64: 32, 8>}, {transform_indices = @transform_3, window_bounds = array<i64: 1, 1, 8>}, {transform_indices = @transform_4, window_bounds = array<i64: 1, 1, 8>}]} {
    %c0 = arith.constant 0 : index
    %c0_0 = arith.constant 0 : index
    %0 = vector.load %arg3[%c0, %c0_0] : memref<32x72xbf16, #tpu.memory_space<vmem>>, vector<32x72xbf16>
    %c0_1 = arith.constant 0 : index
    %c0_2 = arith.constant 0 : index
    %1 = vector.load %arg4[%c0_1, %c0_2] : memref<72x8xbf16, #tpu.memory_space<vmem>>, vector<72x8xbf16>
    %cst = arith.constant dense<0.000000e+00> : vector<32x8xf32>
    %2 = tpu.matmul %0, %1, %cst {dimension_numbers = #tpu.dot_dimension_numbers<[1], [0], [0], [1], [0, 0, 1, 1], [], []>} : vector<32x72xbf16>, vector<72x8xbf16>, vector<32x8xf32> -> vector<32x8xf32>
    %c0_3 = arith.constant 0 : index
    %c0_4 = arith.constant 0 : index
    %3 = vector.load %arg5[%c0_3, %c0_4] : memref<32x8xf32, #tpu.memory_space<vmem>>, vector<32x8xf32>
    tpu.vector_store %arg5[%c0_3, %c0_4], %2 {strides = array<i32>} : memref<32x8xf32, #tpu.memory_space<vmem>>, vector<32x8xf32>,
    %c0_5 = arith.constant 0 : index
    %c0_6 = arith.constant 0 : index
    %4 = vector.load %arg5[%c0_5, %c0_6] : memref<32x8xf32, #tpu.memory_space<vmem>>, vector<32x8xf32>
    %cst_7 = arith.constant dense<0.000000e+00> : vector<8xf32>
    %5 = vector.multi_reduction <add>, %4, %cst_7 [0] : vector<32x8xf32> to vector<8xf32>
    %6 = vector.shape_cast %5 : vector<8xf32> to vector<1x8xf32>
    %7 = vector.shape_cast %6 : vector<1x8xf32> to vector<1x1x8xf32>
    %c0_8 = arith.constant 0 : index
    %c0_9 = arith.constant 0 : index
    %c0_10 = arith.constant 0 : index
    %8 = vector.load %arg6[%c0_8, %c0_9, %c0_10] : memref<1x1x8xf32, #tpu.memory_space<vmem>>, vector<1x1x8xf32>
    tpu.vector_store %arg6[%c0_8, %c0_9, %c0_10], %7 {strides = array<i32>} : memref<1x1x8xf32, #tpu.memory_space<vmem>>, vector<1x1x8xf32>,
    %9 = arith.mulf %4, %4 : vector<32x8xf32>
    %cst_11 = arith.constant dense<0.000000e+00> : vector<8xf32>
    %10 = vector.multi_reduction <add>, %9, %cst_11 [0] : vector<32x8xf32> to vector<8xf32>
    %11 = vector.shape_cast %10 : vector<8xf32> to vector<1x8xf32>
    %12 = vector.shape_cast %11 : vector<1x8xf32> to vector<1x1x8xf32>
    %c0_12 = arith.constant 0 : index
    %c0_13 = arith.constant 0 : index
    %c0_14 = arith.constant 0 : index
    %13 = vector.load %arg7[%c0_12, %c0_13, %c0_14] : memref<1x1x8xf32, #tpu.memory_space<vmem>>, vector<1x1x8xf32>
    tpu.vector_store %arg7[%c0_12, %c0_13, %c0_14], %12 {strides = array<i32>} : memref<1x1x8xf32, #tpu.memory_space<vmem>>, vector<1x1x8xf32>,
    return
  }
  func.func @transform_0(%arg0: i32, %arg1: i32, %arg2: i32) -> (i32, i32) {
    %c0_i32 = arith.constant 0 : i32
    return %arg0, %arg2 : i32, i32
  }
  func.func @transform_1(%arg0: i32, %arg1: i32, %arg2: i32) -> (i32, i32) {
    %c0_i32 = arith.constant 0 : i32
    return %arg2, %arg1 : i32, i32
  }
  func.func @transform_2(%arg0: i32, %arg1: i32, %arg2: i32) -> (i32, i32) {
    %c0_i32 = arith.constant 0 : i32
    return %arg0, %arg1 : i32, i32
  }
  func.func @transform_3(%arg0: i32, %arg1: i32, %arg2: i32) -> (i32, i32, i32) {
    %c0_i32 = arith.constant 0 : i32
    %c0_i32_0 = arith.constant 0 : i32
    return %arg0, %c0_i32, %arg1 : i32, i32, i32
  }
  func.func @transform_4(%arg0: i32, %arg1: i32, %arg2: i32) -> (i32, i32, i32) {
    %c0_i32 = arith.constant 0 : i32
    %c0_i32_0 = arith.constant 0 : i32
    return %arg0, %c0_i32, %arg1 : i32, i32, i32
  }
}

module attributes {stable_mosaic.version = 11 : i64} {
  func.func @_matmul_stats_kernel(%arg0: i32, %arg1: i32, %arg2: i32, %arg3: memref<32x8xbf16, #tpu.memory_space<vmem>>, %arg4: memref<8x32xbf16, #tpu.memory_space<vmem>>, %arg5: memref<32x32xf32, #tpu.memory_space<vmem>>, %arg6: memref<1x1x32xf32, #tpu.memory_space<vmem>>, %arg7: memref<1x1x32xf32, #tpu.memory_space<vmem>>) attributes {dimension_semantics = [#tpu.dimension_semantics<parallel>, #tpu.dimension_semantics<parallel>, #tpu.dimension_semantics<arbitrary>], iteration_bounds = array<i64: 1, 1, 1>, scalar_prefetch = 0 : i64, scratch_operands = 0 : i64, tpu.core_type = #tpu.core_type<tc>, window_params = [{transform_indices = @transform_0, window_bounds = array<i64: 32, 8>}, {transform_indices = @transform_1, window_bounds = array<i64: 8, 32>}, {transform_indices = @transform_2, window_bounds = array<i64: 32, 32>}, {transform_indices = @transform_3, window_bounds = array<i64: 1, 1, 32>}, {transform_indices = @transform_4, window_bounds = array<i64: 1, 1, 32>}]} {
    %c0 = arith.constant 0 : index
    %c0_0 = arith.constant 0 : index
    %0 = vector.load %arg3[%c0, %c0_0] : memref<32x8xbf16, #tpu.memory_space<vmem>>, vector<32x8xbf16>
    %c0_1 = arith.constant 0 : index
    %c0_2 = arith.constant 0 : index
    %1 = vector.load %arg4[%c0_1, %c0_2] : memref<8x32xbf16, #tpu.memory_space<vmem>>, vector<8x32xbf16>
    %cst = arith.constant dense<0.000000e+00> : vector<32x32xf32>
    %2 = tpu.matmul %0, %1, %cst {dimension_numbers = #tpu.dot_dimension_numbers<[1], [0], [0], [1], [0, 0, 1, 1], [], []>} : vector<32x8xbf16>, vector<8x32xbf16>, vector<32x32xf32> -> vector<32x32xf32>
    %c0_3 = arith.constant 0 : index
    %c0_4 = arith.constant 0 : index
    %3 = vector.load %arg5[%c0_3, %c0_4] : memref<32x32xf32, #tpu.memory_space<vmem>>, vector<32x32xf32>
    tpu.vector_store %arg5[%c0_3, %c0_4], %2 {strides = array<i32>} : memref<32x32xf32, #tpu.memory_space<vmem>>, vector<32x32xf32>,
    %c0_5 = arith.constant 0 : index
    %c0_6 = arith.constant 0 : index
    %4 = vector.load %arg5[%c0_5, %c0_6] : memref<32x32xf32, #tpu.memory_space<vmem>>, vector<32x32xf32>
    %cst_7 = arith.constant dense<0.000000e+00> : vector<32xf32>
    %5 = vector.multi_reduction <add>, %4, %cst_7 [0] : vector<32x32xf32> to vector<32xf32>
    %6 = vector.shape_cast %5 : vector<32xf32> to vector<1x32xf32>
    %7 = vector.shape_cast %6 : vector<1x32xf32> to vector<1x1x32xf32>
    %c0_8 = arith.constant 0 : index
    %c0_9 = arith.constant 0 : index
    %c0_10 = arith.constant 0 : index
    %8 = vector.load %arg6[%c0_8, %c0_9, %c0_10] : memref<1x1x32xf32, #tpu.memory_space<vmem>>, vector<1x1x32xf32>
    tpu.vector_store %arg6[%c0_8, %c0_9, %c0_10], %7 {strides = array<i32>} : memref<1x1x32xf32, #tpu.memory_space<vmem>>, vector<1x1x32xf32>,
    %9 = arith.mulf %4, %4 : vector<32x32xf32>
    %cst_11 = arith.constant dense<0.000000e+00> : vector<32xf32>
    %10 = vector.multi_reduction <add>, %9, %cst_11 [0] : vector<32x32xf32> to vector<32xf32>
    %11 = vector.shape_cast %10 : vector<32xf32> to vector<1x32xf32>
    %12 = vector.shape_cast %11 : vector<1x32xf32> to vector<1x1x32xf32>
    %c0_12 = arith.constant 0 : index
    %c0_13 = arith.constant 0 : index
    %c0_14 = arith.constant 0 : index
    %13 = vector.load %arg7[%c0_12, %c0_13, %c0_14] : memref<1x1x32xf32, #tpu.memory_space<vmem>>, vector<1x1x32xf32>
    tpu.vector_store %arg7[%c0_12, %c0_13, %c0_14], %12 {strides = array<i32>} : memref<1x1x32xf32, #tpu.memory_space<vmem>>, vector<1x1x32xf32>,
    return
  }
  func.func @transform_0(%arg0: i32, %arg1: i32, %arg2: i32) -> (i32, i32) {
    %c0_i32 = arith.constant 0 : i32
    return %arg0, %arg2 : i32, i32
  }
  func.func @transform_1(%arg0: i32, %arg1: i32, %arg2: i32) -> (i32, i32) {
    %c0_i32 = arith.constant 0 : i32
    return %arg2, %arg1 : i32, i32
  }
  func.func @transform_2(%arg0: i32, %arg1: i32, %arg2: i32) -> (i32, i32) {
    %c0_i32 = arith.constant 0 : i32
    return %arg0, %arg1 : i32, i32
  }
  func.func @transform_3(%arg0: i32, %arg1: i32, %arg2: i32) -> (i32, i32, i32) {
    %c0_i32 = arith.constant 0 : i32
    %c0_i32_0 = arith.constant 0 : i32
    return %arg0, %c0_i32, %arg1 : i32, i32, i32
  }
  func.func @transform_4(%arg0: i32, %arg1: i32, %arg2: i32) -> (i32, i32, i32) {
    %c0_i32 = arith.constant 0 : i32
    %c0_i32_0 = arith.constant 0 : i32
    return %arg0, %c0_i32, %arg1 : i32, i32, i32
  }
}

module attributes {stable_mosaic.version = 11 : i64} {
  func.func @_bn_act_kernel(%arg0: i32, %arg1: memref<32x32xf32, #tpu.memory_space<vmem>>, %arg2: memref<1x32xf32, #tpu.memory_space<vmem>>, %arg3: memref<1x32xf32, #tpu.memory_space<vmem>>, %arg4: memref<32x32xbf16, #tpu.memory_space<vmem>>) attributes {dimension_semantics = [#tpu.dimension_semantics<parallel>], iteration_bounds = array<i64: 1>, scalar_prefetch = 0 : i64, scratch_operands = 0 : i64, tpu.core_type = #tpu.core_type<tc>, window_params = [{transform_indices = @transform_0, window_bounds = array<i64: 32, 32>}, {pipeline_mode = #tpu.pipeline_mode<synchronous>, transform_indices = @transform_1, window_bounds = array<i64: 1, 32>}, {pipeline_mode = #tpu.pipeline_mode<synchronous>, transform_indices = @transform_2, window_bounds = array<i64: 1, 32>}, {transform_indices = @transform_3, window_bounds = array<i64: 32, 32>}]} {
    %c0 = arith.constant 0 : index
    %c0_0 = arith.constant 0 : index
    %0 = vector.load %arg1[%c0, %c0_0] : memref<32x32xf32, #tpu.memory_space<vmem>>, vector<32x32xf32>
    %c0_1 = arith.constant 0 : index
    %c0_2 = arith.constant 0 : index
    %1 = vector.load %arg2[%c0_1, %c0_2] : memref<1x32xf32, #tpu.memory_space<vmem>>, vector<1x32xf32>
    %2 = vector.broadcast %1 : vector<1x32xf32> to vector<32x32xf32>
    %3 = arith.mulf %0, %2 : vector<32x32xf32>
    %c0_3 = arith.constant 0 : index
    %c0_4 = arith.constant 0 : index
    %4 = vector.load %arg3[%c0_3, %c0_4] : memref<1x32xf32, #tpu.memory_space<vmem>>, vector<1x32xf32>
    %5 = vector.broadcast %4 : vector<1x32xf32> to vector<32x32xf32>
    %6 = arith.addf %3, %5 : vector<32x32xf32>
    %cst = arith.constant 0.000000e+00 : f32
    %7 = vector.broadcast %cst : f32 to vector<32x32xf32>
    %8 = arith.maximumf %6, %7 : vector<32x32xf32>
    %9 = arith.truncf %8 : vector<32x32xf32> to vector<32x32xbf16>
    %c0_5 = arith.constant 0 : index
    %c0_6 = arith.constant 0 : index
    %10 = vector.load %arg4[%c0_5, %c0_6] : memref<32x32xbf16, #tpu.memory_space<vmem>>, vector<32x32xbf16>
    tpu.vector_store %arg4[%c0_5, %c0_6], %9 {strides = array<i32>} : memref<32x32xbf16, #tpu.memory_space<vmem>>, vector<32x32xbf16>,
    return
  }
  func.func @transform_0(%arg0: i32) -> (i32, i32) {
    %c0_i32 = arith.constant 0 : i32
    %c0_i32_0 = arith.constant 0 : i32
    return %arg0, %c0_i32 : i32, i32
  }
  func.func @transform_1(%arg0: i32) -> (i32, i32) {
    %c0_i32 = arith.constant 0 : i32
    %c0_i32_0 = arith.constant 0 : i32
    %c0_i32_1 = arith.constant 0 : i32
    return %c0_i32, %c0_i32_0 : i32, i32
  }
  func.func @transform_2(%arg0: i32) -> (i32, i32) {
    %c0_i32 = arith.constant 0 : i32
    %c0_i32_0 = arith.constant 0 : i32
    %c0_i32_1 = arith.constant 0 : i32
    return %c0_i32, %c0_i32_0 : i32, i32
  }
  func.func @transform_3(%arg0: i32) -> (i32, i32) {
    %c0_i32 = arith.constant 0 : i32
    %c0_i32_0 = arith.constant 0 : i32
    return %arg0, %c0_i32 : i32, i32
  }
}

module attributes {stable_mosaic.version = 11 : i64} {
  func.func @_matmul_stats_kernel(%arg0: i32, %arg1: i32, %arg2: i32, %arg3: memref<32x32xbf16, #tpu.memory_space<vmem>>, %arg4: memref<32x8xbf16, #tpu.memory_space<vmem>>, %arg5: memref<32x8xf32, #tpu.memory_space<vmem>>, %arg6: memref<1x1x8xf32, #tpu.memory_space<vmem>>, %arg7: memref<1x1x8xf32, #tpu.memory_space<vmem>>) attributes {dimension_semantics = [#tpu.dimension_semantics<parallel>, #tpu.dimension_semantics<parallel>, #tpu.dimension_semantics<arbitrary>], iteration_bounds = array<i64: 1, 1, 1>, scalar_prefetch = 0 : i64, scratch_operands = 0 : i64, tpu.core_type = #tpu.core_type<tc>, window_params = [{transform_indices = @transform_0, window_bounds = array<i64: 32, 32>}, {transform_indices = @transform_1, window_bounds = array<i64: 32, 8>}, {transform_indices = @transform_2, window_bounds = array<i64: 32, 8>}, {transform_indices = @transform_3, window_bounds = array<i64: 1, 1, 8>}, {transform_indices = @transform_4, window_bounds = array<i64: 1, 1, 8>}]} {
    %c0 = arith.constant 0 : index
    %c0_0 = arith.constant 0 : index
    %0 = vector.load %arg3[%c0, %c0_0] : memref<32x32xbf16, #tpu.memory_space<vmem>>, vector<32x32xbf16>
    %c0_1 = arith.constant 0 : index
    %c0_2 = arith.constant 0 : index
    %1 = vector.load %arg4[%c0_1, %c0_2] : memref<32x8xbf16, #tpu.memory_space<vmem>>, vector<32x8xbf16>
    %cst = arith.constant dense<0.000000e+00> : vector<32x8xf32>
    %2 = tpu.matmul %0, %1, %cst {dimension_numbers = #tpu.dot_dimension_numbers<[1], [0], [0], [1], [0, 0, 1, 1], [], []>} : vector<32x32xbf16>, vector<32x8xbf16>, vector<32x8xf32> -> vector<32x8xf32>
    %c0_3 = arith.constant 0 : index
    %c0_4 = arith.constant 0 : index
    %3 = vector.load %arg5[%c0_3, %c0_4] : memref<32x8xf32, #tpu.memory_space<vmem>>, vector<32x8xf32>
    tpu.vector_store %arg5[%c0_3, %c0_4], %2 {strides = array<i32>} : memref<32x8xf32, #tpu.memory_space<vmem>>, vector<32x8xf32>,
    %c0_5 = arith.constant 0 : index
    %c0_6 = arith.constant 0 : index
    %4 = vector.load %arg5[%c0_5, %c0_6] : memref<32x8xf32, #tpu.memory_space<vmem>>, vector<32x8xf32>
    %cst_7 = arith.constant dense<0.000000e+00> : vector<8xf32>
    %5 = vector.multi_reduction <add>, %4, %cst_7 [0] : vector<32x8xf32> to vector<8xf32>
    %6 = vector.shape_cast %5 : vector<8xf32> to vector<1x8xf32>
    %7 = vector.shape_cast %6 : vector<1x8xf32> to vector<1x1x8xf32>
    %c0_8 = arith.constant 0 : index
    %c0_9 = arith.constant 0 : index
    %c0_10 = arith.constant 0 : index
    %8 = vector.load %arg6[%c0_8, %c0_9, %c0_10] : memref<1x1x8xf32, #tpu.memory_space<vmem>>, vector<1x1x8xf32>
    tpu.vector_store %arg6[%c0_8, %c0_9, %c0_10], %7 {strides = array<i32>} : memref<1x1x8xf32, #tpu.memory_space<vmem>>, vector<1x1x8xf32>,
    %9 = arith.mulf %4, %4 : vector<32x8xf32>
    %cst_11 = arith.constant dense<0.000000e+00> : vector<8xf32>
    %10 = vector.multi_reduction <add>, %9, %cst_11 [0] : vector<32x8xf32> to vector<8xf32>
    %11 = vector.shape_cast %10 : vector<8xf32> to vector<1x8xf32>
    %12 = vector.shape_cast %11 : vector<1x8xf32> to vector<1x1x8xf32>
    %c0_12 = arith.constant 0 : index
    %c0_13 = arith.constant 0 : index
    %c0_14 = arith.constant 0 : index
    %13 = vector.load %arg7[%c0_12, %c0_13, %c0_14] : memref<1x1x8xf32, #tpu.memory_space<vmem>>, vector<1x1x8xf32>
    tpu.vector_store %arg7[%c0_12, %c0_13, %c0_14], %12 {strides = array<i32>} : memref<1x1x8xf32, #tpu.memory_space<vmem>>, vector<1x1x8xf32>,
    return
  }
  func.func @transform_0(%arg0: i32, %arg1: i32, %arg2: i32) -> (i32, i32) {
    %c0_i32 = arith.constant 0 : i32
    return %arg0, %arg2 : i32, i32
  }
  func.func @transform_1(%arg0: i32, %arg1: i32, %arg2: i32) -> (i32, i32) {
    %c0_i32 = arith.constant 0 : i32
    return %arg2, %arg1 : i32, i32
  }
  func.func @transform_2(%arg0: i32, %arg1: i32, %arg2: i32) -> (i32, i32) {
    %c0_i32 = arith.constant 0 : i32
    return %arg0, %arg1 : i32, i32
  }
  func.func @transform_3(%arg0: i32, %arg1: i32, %arg2: i32) -> (i32, i32, i32) {
    %c0_i32 = arith.constant 0 : i32
    %c0_i32_0 = arith.constant 0 : i32
    return %arg0, %c0_i32, %arg1 : i32, i32, i32
  }
  func.func @transform_4(%arg0: i32, %arg1: i32, %arg2: i32) -> (i32, i32, i32) {
    %c0_i32 = arith.constant 0 : i32
    %c0_i32_0 = arith.constant 0 : i32
    return %arg0, %c0_i32, %arg1 : i32, i32, i32
  }
}

module attributes {stable_mosaic.version = 11 : i64} {
  func.func @_matmul_stats_kernel(%arg0: i32, %arg1: i32, %arg2: i32, %arg3: memref<32x32xbf16, #tpu.memory_space<vmem>>, %arg4: memref<32x16xbf16, #tpu.memory_space<vmem>>, %arg5: memref<32x16xf32, #tpu.memory_space<vmem>>, %arg6: memref<1x1x16xf32, #tpu.memory_space<vmem>>, %arg7: memref<1x1x16xf32, #tpu.memory_space<vmem>>) attributes {dimension_semantics = [#tpu.dimension_semantics<parallel>, #tpu.dimension_semantics<parallel>, #tpu.dimension_semantics<arbitrary>], iteration_bounds = array<i64: 1, 1, 1>, scalar_prefetch = 0 : i64, scratch_operands = 0 : i64, tpu.core_type = #tpu.core_type<tc>, window_params = [{transform_indices = @transform_0, window_bounds = array<i64: 32, 32>}, {transform_indices = @transform_1, window_bounds = array<i64: 32, 16>}, {transform_indices = @transform_2, window_bounds = array<i64: 32, 16>}, {transform_indices = @transform_3, window_bounds = array<i64: 1, 1, 16>}, {transform_indices = @transform_4, window_bounds = array<i64: 1, 1, 16>}]} {
    %c0 = arith.constant 0 : index
    %c0_0 = arith.constant 0 : index
    %0 = vector.load %arg3[%c0, %c0_0] : memref<32x32xbf16, #tpu.memory_space<vmem>>, vector<32x32xbf16>
    %c0_1 = arith.constant 0 : index
    %c0_2 = arith.constant 0 : index
    %1 = vector.load %arg4[%c0_1, %c0_2] : memref<32x16xbf16, #tpu.memory_space<vmem>>, vector<32x16xbf16>
    %cst = arith.constant dense<0.000000e+00> : vector<32x16xf32>
    %2 = tpu.matmul %0, %1, %cst {dimension_numbers = #tpu.dot_dimension_numbers<[1], [0], [0], [1], [0, 0, 1, 1], [], []>} : vector<32x32xbf16>, vector<32x16xbf16>, vector<32x16xf32> -> vector<32x16xf32>
    %c0_3 = arith.constant 0 : index
    %c0_4 = arith.constant 0 : index
    %3 = vector.load %arg5[%c0_3, %c0_4] : memref<32x16xf32, #tpu.memory_space<vmem>>, vector<32x16xf32>
    tpu.vector_store %arg5[%c0_3, %c0_4], %2 {strides = array<i32>} : memref<32x16xf32, #tpu.memory_space<vmem>>, vector<32x16xf32>,
    %c0_5 = arith.constant 0 : index
    %c0_6 = arith.constant 0 : index
    %4 = vector.load %arg5[%c0_5, %c0_6] : memref<32x16xf32, #tpu.memory_space<vmem>>, vector<32x16xf32>
    %cst_7 = arith.constant dense<0.000000e+00> : vector<16xf32>
    %5 = vector.multi_reduction <add>, %4, %cst_7 [0] : vector<32x16xf32> to vector<16xf32>
    %6 = vector.shape_cast %5 : vector<16xf32> to vector<1x16xf32>
    %7 = vector.shape_cast %6 : vector<1x16xf32> to vector<1x1x16xf32>
    %c0_8 = arith.constant 0 : index
    %c0_9 = arith.constant 0 : index
    %c0_10 = arith.constant 0 : index
    %8 = vector.load %arg6[%c0_8, %c0_9, %c0_10] : memref<1x1x16xf32, #tpu.memory_space<vmem>>, vector<1x1x16xf32>
    tpu.vector_store %arg6[%c0_8, %c0_9, %c0_10], %7 {strides = array<i32>} : memref<1x1x16xf32, #tpu.memory_space<vmem>>, vector<1x1x16xf32>,
    %9 = arith.mulf %4, %4 : vector<32x16xf32>
    %cst_11 = arith.constant dense<0.000000e+00> : vector<16xf32>
    %10 = vector.multi_reduction <add>, %9, %cst_11 [0] : vector<32x16xf32> to vector<16xf32>
    %11 = vector.shape_cast %10 : vector<16xf32> to vector<1x16xf32>
    %12 = vector.shape_cast %11 : vector<1x16xf32> to vector<1x1x16xf32>
    %c0_12 = arith.constant 0 : index
    %c0_13 = arith.constant 0 : index
    %c0_14 = arith.constant 0 : index
    %13 = vector.load %arg7[%c0_12, %c0_13, %c0_14] : memref<1x1x16xf32, #tpu.memory_space<vmem>>, vector<1x1x16xf32>
    tpu.vector_store %arg7[%c0_12, %c0_13, %c0_14], %12 {strides = array<i32>} : memref<1x1x16xf32, #tpu.memory_space<vmem>>, vector<1x1x16xf32>,
    return
  }
  func.func @transform_0(%arg0: i32, %arg1: i32, %arg2: i32) -> (i32, i32) {
    %c0_i32 = arith.constant 0 : i32
    return %arg0, %arg2 : i32, i32
  }
  func.func @transform_1(%arg0: i32, %arg1: i32, %arg2: i32) -> (i32, i32) {
    %c0_i32 = arith.constant 0 : i32
    return %arg2, %arg1 : i32, i32
  }
  func.func @transform_2(%arg0: i32, %arg1: i32, %arg2: i32) -> (i32, i32) {
    %c0_i32 = arith.constant 0 : i32
    return %arg0, %arg1 : i32, i32
  }
  func.func @transform_3(%arg0: i32, %arg1: i32, %arg2: i32) -> (i32, i32, i32) {
    %c0_i32 = arith.constant 0 : i32
    %c0_i32_0 = arith.constant 0 : i32
    return %arg0, %c0_i32, %arg1 : i32, i32, i32
  }
  func.func @transform_4(%arg0: i32, %arg1: i32, %arg2: i32) -> (i32, i32, i32) {
    %c0_i32 = arith.constant 0 : i32
    %c0_i32_0 = arith.constant 0 : i32
    return %arg0, %c0_i32, %arg1 : i32, i32, i32
  }
}

module attributes {stable_mosaic.version = 11 : i64} {
  func.func @_bn_act_kernel(%arg0: i32, %arg1: memref<32x16xf32, #tpu.memory_space<vmem>>, %arg2: memref<1x16xf32, #tpu.memory_space<vmem>>, %arg3: memref<1x16xf32, #tpu.memory_space<vmem>>, %arg4: memref<32x16xbf16, #tpu.memory_space<vmem>>) attributes {dimension_semantics = [#tpu.dimension_semantics<parallel>], iteration_bounds = array<i64: 1>, scalar_prefetch = 0 : i64, scratch_operands = 0 : i64, tpu.core_type = #tpu.core_type<tc>, window_params = [{transform_indices = @transform_0, window_bounds = array<i64: 32, 16>}, {pipeline_mode = #tpu.pipeline_mode<synchronous>, transform_indices = @transform_1, window_bounds = array<i64: 1, 16>}, {pipeline_mode = #tpu.pipeline_mode<synchronous>, transform_indices = @transform_2, window_bounds = array<i64: 1, 16>}, {transform_indices = @transform_3, window_bounds = array<i64: 32, 16>}]} {
    %c0 = arith.constant 0 : index
    %c0_0 = arith.constant 0 : index
    %0 = vector.load %arg1[%c0, %c0_0] : memref<32x16xf32, #tpu.memory_space<vmem>>, vector<32x16xf32>
    %c0_1 = arith.constant 0 : index
    %c0_2 = arith.constant 0 : index
    %1 = vector.load %arg2[%c0_1, %c0_2] : memref<1x16xf32, #tpu.memory_space<vmem>>, vector<1x16xf32>
    %2 = vector.broadcast %1 : vector<1x16xf32> to vector<32x16xf32>
    %3 = arith.mulf %0, %2 : vector<32x16xf32>
    %c0_3 = arith.constant 0 : index
    %c0_4 = arith.constant 0 : index
    %4 = vector.load %arg3[%c0_3, %c0_4] : memref<1x16xf32, #tpu.memory_space<vmem>>, vector<1x16xf32>
    %5 = vector.broadcast %4 : vector<1x16xf32> to vector<32x16xf32>
    %6 = arith.addf %3, %5 : vector<32x16xf32>
    %cst = arith.constant 0.000000e+00 : f32
    %7 = vector.broadcast %cst : f32 to vector<32x16xf32>
    %8 = arith.maximumf %6, %7 : vector<32x16xf32>
    %9 = arith.truncf %8 : vector<32x16xf32> to vector<32x16xbf16>
    %c0_5 = arith.constant 0 : index
    %c0_6 = arith.constant 0 : index
    %10 = vector.load %arg4[%c0_5, %c0_6] : memref<32x16xbf16, #tpu.memory_space<vmem>>, vector<32x16xbf16>
    tpu.vector_store %arg4[%c0_5, %c0_6], %9 {strides = array<i32>} : memref<32x16xbf16, #tpu.memory_space<vmem>>, vector<32x16xbf16>,
    return
  }
  func.func @transform_0(%arg0: i32) -> (i32, i32) {
    %c0_i32 = arith.constant 0 : i32
    %c0_i32_0 = arith.constant 0 : i32
    return %arg0, %c0_i32 : i32, i32
  }
  func.func @transform_1(%arg0: i32) -> (i32, i32) {
    %c0_i32 = arith.constant 0 : i32
    %c0_i32_0 = arith.constant 0 : i32
    %c0_i32_1 = arith.constant 0 : i32
    return %c0_i32, %c0_i32_0 : i32, i32
  }
  func.func @transform_2(%arg0: i32) -> (i32, i32) {
    %c0_i32 = arith.constant 0 : i32
    %c0_i32_0 = arith.constant 0 : i32
    %c0_i32_1 = arith.constant 0 : i32
    return %c0_i32, %c0_i32_0 : i32, i32
  }
  func.func @transform_3(%arg0: i32) -> (i32, i32) {
    %c0_i32 = arith.constant 0 : i32
    %c0_i32_0 = arith.constant 0 : i32
    return %arg0, %c0_i32 : i32, i32
  }
}

module attributes {stable_mosaic.version = 11 : i64} {
  func.func @_matmul_stats_kernel(%arg0: i32, %arg1: i32, %arg2: i32, %arg3: memref<8x144xbf16, #tpu.memory_space<vmem>>, %arg4: memref<144x16xbf16, #tpu.memory_space<vmem>>, %arg5: memref<8x16xf32, #tpu.memory_space<vmem>>, %arg6: memref<1x1x16xf32, #tpu.memory_space<vmem>>, %arg7: memref<1x1x16xf32, #tpu.memory_space<vmem>>) attributes {dimension_semantics = [#tpu.dimension_semantics<parallel>, #tpu.dimension_semantics<parallel>, #tpu.dimension_semantics<arbitrary>], iteration_bounds = array<i64: 1, 1, 1>, scalar_prefetch = 0 : i64, scratch_operands = 0 : i64, tpu.core_type = #tpu.core_type<tc>, window_params = [{transform_indices = @transform_0, window_bounds = array<i64: 8, 144>}, {transform_indices = @transform_1, window_bounds = array<i64: 144, 16>}, {transform_indices = @transform_2, window_bounds = array<i64: 8, 16>}, {transform_indices = @transform_3, window_bounds = array<i64: 1, 1, 16>}, {transform_indices = @transform_4, window_bounds = array<i64: 1, 1, 16>}]} {
    %c0 = arith.constant 0 : index
    %c0_0 = arith.constant 0 : index
    %0 = vector.load %arg3[%c0, %c0_0] : memref<8x144xbf16, #tpu.memory_space<vmem>>, vector<8x144xbf16>
    %c0_1 = arith.constant 0 : index
    %c0_2 = arith.constant 0 : index
    %1 = vector.load %arg4[%c0_1, %c0_2] : memref<144x16xbf16, #tpu.memory_space<vmem>>, vector<144x16xbf16>
    %cst = arith.constant dense<0.000000e+00> : vector<8x16xf32>
    %2 = tpu.matmul %0, %1, %cst {dimension_numbers = #tpu.dot_dimension_numbers<[1], [0], [0], [1], [0, 0, 1, 1], [], []>} : vector<8x144xbf16>, vector<144x16xbf16>, vector<8x16xf32> -> vector<8x16xf32>
    %c0_3 = arith.constant 0 : index
    %c0_4 = arith.constant 0 : index
    %3 = vector.load %arg5[%c0_3, %c0_4] : memref<8x16xf32, #tpu.memory_space<vmem>>, vector<8x16xf32>
    tpu.vector_store %arg5[%c0_3, %c0_4], %2 {strides = array<i32>} : memref<8x16xf32, #tpu.memory_space<vmem>>, vector<8x16xf32>,
    %c0_5 = arith.constant 0 : index
    %c0_6 = arith.constant 0 : index
    %4 = vector.load %arg5[%c0_5, %c0_6] : memref<8x16xf32, #tpu.memory_space<vmem>>, vector<8x16xf32>
    %cst_7 = arith.constant dense<0.000000e+00> : vector<16xf32>
    %5 = vector.multi_reduction <add>, %4, %cst_7 [0] : vector<8x16xf32> to vector<16xf32>
    %6 = vector.shape_cast %5 : vector<16xf32> to vector<1x16xf32>
    %7 = vector.shape_cast %6 : vector<1x16xf32> to vector<1x1x16xf32>
    %c0_8 = arith.constant 0 : index
    %c0_9 = arith.constant 0 : index
    %c0_10 = arith.constant 0 : index
    %8 = vector.load %arg6[%c0_8, %c0_9, %c0_10] : memref<1x1x16xf32, #tpu.memory_space<vmem>>, vector<1x1x16xf32>
    tpu.vector_store %arg6[%c0_8, %c0_9, %c0_10], %7 {strides = array<i32>} : memref<1x1x16xf32, #tpu.memory_space<vmem>>, vector<1x1x16xf32>,
    %9 = arith.mulf %4, %4 : vector<8x16xf32>
    %cst_11 = arith.constant dense<0.000000e+00> : vector<16xf32>
    %10 = vector.multi_reduction <add>, %9, %cst_11 [0] : vector<8x16xf32> to vector<16xf32>
    %11 = vector.shape_cast %10 : vector<16xf32> to vector<1x16xf32>
    %12 = vector.shape_cast %11 : vector<1x16xf32> to vector<1x1x16xf32>
    %c0_12 = arith.constant 0 : index
    %c0_13 = arith.constant 0 : index
    %c0_14 = arith.constant 0 : index
    %13 = vector.load %arg7[%c0_12, %c0_13, %c0_14] : memref<1x1x16xf32, #tpu.memory_space<vmem>>, vector<1x1x16xf32>
    tpu.vector_store %arg7[%c0_12, %c0_13, %c0_14], %12 {strides = array<i32>} : memref<1x1x16xf32, #tpu.memory_space<vmem>>, vector<1x1x16xf32>,
    return
  }
  func.func @transform_0(%arg0: i32, %arg1: i32, %arg2: i32) -> (i32, i32) {
    %c0_i32 = arith.constant 0 : i32
    return %arg0, %arg2 : i32, i32
  }
  func.func @transform_1(%arg0: i32, %arg1: i32, %arg2: i32) -> (i32, i32) {
    %c0_i32 = arith.constant 0 : i32
    return %arg2, %arg1 : i32, i32
  }
  func.func @transform_2(%arg0: i32, %arg1: i32, %arg2: i32) -> (i32, i32) {
    %c0_i32 = arith.constant 0 : i32
    return %arg0, %arg1 : i32, i32
  }
  func.func @transform_3(%arg0: i32, %arg1: i32, %arg2: i32) -> (i32, i32, i32) {
    %c0_i32 = arith.constant 0 : i32
    %c0_i32_0 = arith.constant 0 : i32
    return %arg0, %c0_i32, %arg1 : i32, i32, i32
  }
  func.func @transform_4(%arg0: i32, %arg1: i32, %arg2: i32) -> (i32, i32, i32) {
    %c0_i32 = arith.constant 0 : i32
    %c0_i32_0 = arith.constant 0 : i32
    return %arg0, %c0_i32, %arg1 : i32, i32, i32
  }
}

module attributes {stable_mosaic.version = 11 : i64} {
  func.func @_bn_act_kernel(%arg0: i32, %arg1: memref<8x16xf32, #tpu.memory_space<vmem>>, %arg2: memref<1x16xf32, #tpu.memory_space<vmem>>, %arg3: memref<1x16xf32, #tpu.memory_space<vmem>>, %arg4: memref<8x16xbf16, #tpu.memory_space<vmem>>) attributes {dimension_semantics = [#tpu.dimension_semantics<parallel>], iteration_bounds = array<i64: 1>, scalar_prefetch = 0 : i64, scratch_operands = 0 : i64, tpu.core_type = #tpu.core_type<tc>, window_params = [{transform_indices = @transform_0, window_bounds = array<i64: 8, 16>}, {pipeline_mode = #tpu.pipeline_mode<synchronous>, transform_indices = @transform_1, window_bounds = array<i64: 1, 16>}, {pipeline_mode = #tpu.pipeline_mode<synchronous>, transform_indices = @transform_2, window_bounds = array<i64: 1, 16>}, {transform_indices = @transform_3, window_bounds = array<i64: 8, 16>}]} {
    %c0 = arith.constant 0 : index
    %c0_0 = arith.constant 0 : index
    %0 = vector.load %arg1[%c0, %c0_0] : memref<8x16xf32, #tpu.memory_space<vmem>>, vector<8x16xf32>
    %c0_1 = arith.constant 0 : index
    %c0_2 = arith.constant 0 : index
    %1 = vector.load %arg2[%c0_1, %c0_2] : memref<1x16xf32, #tpu.memory_space<vmem>>, vector<1x16xf32>
    %2 = vector.broadcast %1 : vector<1x16xf32> to vector<8x16xf32>
    %3 = arith.mulf %0, %2 : vector<8x16xf32>
    %c0_3 = arith.constant 0 : index
    %c0_4 = arith.constant 0 : index
    %4 = vector.load %arg3[%c0_3, %c0_4] : memref<1x16xf32, #tpu.memory_space<vmem>>, vector<1x16xf32>
    %5 = vector.broadcast %4 : vector<1x16xf32> to vector<8x16xf32>
    %6 = arith.addf %3, %5 : vector<8x16xf32>
    %cst = arith.constant 0.000000e+00 : f32
    %7 = vector.broadcast %cst : f32 to vector<8x16xf32>
    %8 = arith.maximumf %6, %7 : vector<8x16xf32>
    %9 = arith.truncf %8 : vector<8x16xf32> to vector<8x16xbf16>
    %c0_5 = arith.constant 0 : index
    %c0_6 = arith.constant 0 : index
    %10 = vector.load %arg4[%c0_5, %c0_6] : memref<8x16xbf16, #tpu.memory_space<vmem>>, vector<8x16xbf16>
    tpu.vector_store %arg4[%c0_5, %c0_6], %9 {strides = array<i32>} : memref<8x16xbf16, #tpu.memory_space<vmem>>, vector<8x16xbf16>,
    return
  }
  func.func @transform_0(%arg0: i32) -> (i32, i32) {
    %c0_i32 = arith.constant 0 : i32
    %c0_i32_0 = arith.constant 0 : i32
    return %arg0, %c0_i32 : i32, i32
  }
  func.func @transform_1(%arg0: i32) -> (i32, i32) {
    %c0_i32 = arith.constant 0 : i32
    %c0_i32_0 = arith.constant 0 : i32
    %c0_i32_1 = arith.constant 0 : i32
    return %c0_i32, %c0_i32_0 : i32, i32
  }
  func.func @transform_2(%arg0: i32) -> (i32, i32) {
    %c0_i32 = arith.constant 0 : i32
    %c0_i32_0 = arith.constant 0 : i32
    %c0_i32_1 = arith.constant 0 : i32
    return %c0_i32, %c0_i32_0 : i32, i32
  }
  func.func @transform_3(%arg0: i32) -> (i32, i32) {
    %c0_i32 = arith.constant 0 : i32
    %c0_i32_0 = arith.constant 0 : i32
    return %arg0, %c0_i32 : i32, i32
  }
}

module attributes {stable_mosaic.version = 11 : i64} {
  func.func @_matmul_stats_kernel(%arg0: i32, %arg1: i32, %arg2: i32, %arg3: memref<8x16xbf16, #tpu.memory_space<vmem>>, %arg4: memref<16x64xbf16, #tpu.memory_space<vmem>>, %arg5: memref<8x64xf32, #tpu.memory_space<vmem>>, %arg6: memref<1x1x64xf32, #tpu.memory_space<vmem>>, %arg7: memref<1x1x64xf32, #tpu.memory_space<vmem>>) attributes {dimension_semantics = [#tpu.dimension_semantics<parallel>, #tpu.dimension_semantics<parallel>, #tpu.dimension_semantics<arbitrary>], iteration_bounds = array<i64: 1, 1, 1>, scalar_prefetch = 0 : i64, scratch_operands = 0 : i64, tpu.core_type = #tpu.core_type<tc>, window_params = [{transform_indices = @transform_0, window_bounds = array<i64: 8, 16>}, {transform_indices = @transform_1, window_bounds = array<i64: 16, 64>}, {transform_indices = @transform_2, window_bounds = array<i64: 8, 64>}, {transform_indices = @transform_3, window_bounds = array<i64: 1, 1, 64>}, {transform_indices = @transform_4, window_bounds = array<i64: 1, 1, 64>}]} {
    %c0 = arith.constant 0 : index
    %c0_0 = arith.constant 0 : index
    %0 = vector.load %arg3[%c0, %c0_0] : memref<8x16xbf16, #tpu.memory_space<vmem>>, vector<8x16xbf16>
    %c0_1 = arith.constant 0 : index
    %c0_2 = arith.constant 0 : index
    %1 = vector.load %arg4[%c0_1, %c0_2] : memref<16x64xbf16, #tpu.memory_space<vmem>>, vector<16x64xbf16>
    %cst = arith.constant dense<0.000000e+00> : vector<8x64xf32>
    %2 = tpu.matmul %0, %1, %cst {dimension_numbers = #tpu.dot_dimension_numbers<[1], [0], [0], [1], [0, 0, 1, 1], [], []>} : vector<8x16xbf16>, vector<16x64xbf16>, vector<8x64xf32> -> vector<8x64xf32>
    %c0_3 = arith.constant 0 : index
    %c0_4 = arith.constant 0 : index
    %3 = vector.load %arg5[%c0_3, %c0_4] : memref<8x64xf32, #tpu.memory_space<vmem>>, vector<8x64xf32>
    tpu.vector_store %arg5[%c0_3, %c0_4], %2 {strides = array<i32>} : memref<8x64xf32, #tpu.memory_space<vmem>>, vector<8x64xf32>,
    %c0_5 = arith.constant 0 : index
    %c0_6 = arith.constant 0 : index
    %4 = vector.load %arg5[%c0_5, %c0_6] : memref<8x64xf32, #tpu.memory_space<vmem>>, vector<8x64xf32>
    %cst_7 = arith.constant dense<0.000000e+00> : vector<64xf32>
    %5 = vector.multi_reduction <add>, %4, %cst_7 [0] : vector<8x64xf32> to vector<64xf32>
    %6 = vector.shape_cast %5 : vector<64xf32> to vector<1x64xf32>
    %7 = vector.shape_cast %6 : vector<1x64xf32> to vector<1x1x64xf32>
    %c0_8 = arith.constant 0 : index
    %c0_9 = arith.constant 0 : index
    %c0_10 = arith.constant 0 : index
    %8 = vector.load %arg6[%c0_8, %c0_9, %c0_10] : memref<1x1x64xf32, #tpu.memory_space<vmem>>, vector<1x1x64xf32>
    tpu.vector_store %arg6[%c0_8, %c0_9, %c0_10], %7 {strides = array<i32>} : memref<1x1x64xf32, #tpu.memory_space<vmem>>, vector<1x1x64xf32>,
    %9 = arith.mulf %4, %4 : vector<8x64xf32>
    %cst_11 = arith.constant dense<0.000000e+00> : vector<64xf32>
    %10 = vector.multi_reduction <add>, %9, %cst_11 [0] : vector<8x64xf32> to vector<64xf32>
    %11 = vector.shape_cast %10 : vector<64xf32> to vector<1x64xf32>
    %12 = vector.shape_cast %11 : vector<1x64xf32> to vector<1x1x64xf32>
    %c0_12 = arith.constant 0 : index
    %c0_13 = arith.constant 0 : index
    %c0_14 = arith.constant 0 : index
    %13 = vector.load %arg7[%c0_12, %c0_13, %c0_14] : memref<1x1x64xf32, #tpu.memory_space<vmem>>, vector<1x1x64xf32>
    tpu.vector_store %arg7[%c0_12, %c0_13, %c0_14], %12 {strides = array<i32>} : memref<1x1x64xf32, #tpu.memory_space<vmem>>, vector<1x1x64xf32>,
    return
  }
  func.func @transform_0(%arg0: i32, %arg1: i32, %arg2: i32) -> (i32, i32) {
    %c0_i32 = arith.constant 0 : i32
    return %arg0, %arg2 : i32, i32
  }
  func.func @transform_1(%arg0: i32, %arg1: i32, %arg2: i32) -> (i32, i32) {
    %c0_i32 = arith.constant 0 : i32
    return %arg2, %arg1 : i32, i32
  }
  func.func @transform_2(%arg0: i32, %arg1: i32, %arg2: i32) -> (i32, i32) {
    %c0_i32 = arith.constant 0 : i32
    return %arg0, %arg1 : i32, i32
  }
  func.func @transform_3(%arg0: i32, %arg1: i32, %arg2: i32) -> (i32, i32, i32) {
    %c0_i32 = arith.constant 0 : i32
    %c0_i32_0 = arith.constant 0 : i32
    return %arg0, %c0_i32, %arg1 : i32, i32, i32
  }
  func.func @transform_4(%arg0: i32, %arg1: i32, %arg2: i32) -> (i32, i32, i32) {
    %c0_i32 = arith.constant 0 : i32
    %c0_i32_0 = arith.constant 0 : i32
    return %arg0, %c0_i32, %arg1 : i32, i32, i32
  }
}

module attributes {stable_mosaic.version = 11 : i64} {
  func.func @_bn_act_kernel(%arg0: i32, %arg1: memref<8x64xf32, #tpu.memory_space<vmem>>, %arg2: memref<1x64xf32, #tpu.memory_space<vmem>>, %arg3: memref<1x64xf32, #tpu.memory_space<vmem>>, %arg4: memref<8x64xbf16, #tpu.memory_space<vmem>>) attributes {dimension_semantics = [#tpu.dimension_semantics<parallel>], iteration_bounds = array<i64: 1>, scalar_prefetch = 0 : i64, scratch_operands = 0 : i64, tpu.core_type = #tpu.core_type<tc>, window_params = [{transform_indices = @transform_0, window_bounds = array<i64: 8, 64>}, {pipeline_mode = #tpu.pipeline_mode<synchronous>, transform_indices = @transform_1, window_bounds = array<i64: 1, 64>}, {pipeline_mode = #tpu.pipeline_mode<synchronous>, transform_indices = @transform_2, window_bounds = array<i64: 1, 64>}, {transform_indices = @transform_3, window_bounds = array<i64: 8, 64>}]} {
    %c0 = arith.constant 0 : index
    %c0_0 = arith.constant 0 : index
    %0 = vector.load %arg1[%c0, %c0_0] : memref<8x64xf32, #tpu.memory_space<vmem>>, vector<8x64xf32>
    %c0_1 = arith.constant 0 : index
    %c0_2 = arith.constant 0 : index
    %1 = vector.load %arg2[%c0_1, %c0_2] : memref<1x64xf32, #tpu.memory_space<vmem>>, vector<1x64xf32>
    %2 = vector.broadcast %1 : vector<1x64xf32> to vector<8x64xf32>
    %3 = arith.mulf %0, %2 : vector<8x64xf32>
    %c0_3 = arith.constant 0 : index
    %c0_4 = arith.constant 0 : index
    %4 = vector.load %arg3[%c0_3, %c0_4] : memref<1x64xf32, #tpu.memory_space<vmem>>, vector<1x64xf32>
    %5 = vector.broadcast %4 : vector<1x64xf32> to vector<8x64xf32>
    %6 = arith.addf %3, %5 : vector<8x64xf32>
    %cst = arith.constant 0.000000e+00 : f32
    %7 = vector.broadcast %cst : f32 to vector<8x64xf32>
    %8 = arith.maximumf %6, %7 : vector<8x64xf32>
    %9 = arith.truncf %8 : vector<8x64xf32> to vector<8x64xbf16>
    %c0_5 = arith.constant 0 : index
    %c0_6 = arith.constant 0 : index
    %10 = vector.load %arg4[%c0_5, %c0_6] : memref<8x64xbf16, #tpu.memory_space<vmem>>, vector<8x64xbf16>
    tpu.vector_store %arg4[%c0_5, %c0_6], %9 {strides = array<i32>} : memref<8x64xbf16, #tpu.memory_space<vmem>>, vector<8x64xbf16>,
    return
  }
  func.func @transform_0(%arg0: i32) -> (i32, i32) {
    %c0_i32 = arith.constant 0 : i32
    %c0_i32_0 = arith.constant 0 : i32
    return %arg0, %c0_i32 : i32, i32
  }
  func.func @transform_1(%arg0: i32) -> (i32, i32) {
    %c0_i32 = arith.constant 0 : i32
    %c0_i32_0 = arith.constant 0 : i32
    %c0_i32_1 = arith.constant 0 : i32
    return %c0_i32, %c0_i32_0 : i32, i32
  }
  func.func @transform_2(%arg0: i32) -> (i32, i32) {
    %c0_i32 = arith.constant 0 : i32
    %c0_i32_0 = arith.constant 0 : i32
    %c0_i32_1 = arith.constant 0 : i32
    return %c0_i32, %c0_i32_0 : i32, i32
  }
  func.func @transform_3(%arg0: i32) -> (i32, i32) {
    %c0_i32 = arith.constant 0 : i32
    %c0_i32_0 = arith.constant 0 : i32
    return %arg0, %c0_i32 : i32, i32
  }
}

module attributes {stable_mosaic.version = 11 : i64} {
  func.func @_matmul_stats_kernel(%arg0: i32, %arg1: i32, %arg2: i32, %arg3: memref<8x64xbf16, #tpu.memory_space<vmem>>, %arg4: memref<64x16xbf16, #tpu.memory_space<vmem>>, %arg5: memref<8x16xf32, #tpu.memory_space<vmem>>, %arg6: memref<1x1x16xf32, #tpu.memory_space<vmem>>, %arg7: memref<1x1x16xf32, #tpu.memory_space<vmem>>) attributes {dimension_semantics = [#tpu.dimension_semantics<parallel>, #tpu.dimension_semantics<parallel>, #tpu.dimension_semantics<arbitrary>], iteration_bounds = array<i64: 1, 1, 1>, scalar_prefetch = 0 : i64, scratch_operands = 0 : i64, tpu.core_type = #tpu.core_type<tc>, window_params = [{transform_indices = @transform_0, window_bounds = array<i64: 8, 64>}, {transform_indices = @transform_1, window_bounds = array<i64: 64, 16>}, {transform_indices = @transform_2, window_bounds = array<i64: 8, 16>}, {transform_indices = @transform_3, window_bounds = array<i64: 1, 1, 16>}, {transform_indices = @transform_4, window_bounds = array<i64: 1, 1, 16>}]} {
    %c0 = arith.constant 0 : index
    %c0_0 = arith.constant 0 : index
    %0 = vector.load %arg3[%c0, %c0_0] : memref<8x64xbf16, #tpu.memory_space<vmem>>, vector<8x64xbf16>
    %c0_1 = arith.constant 0 : index
    %c0_2 = arith.constant 0 : index
    %1 = vector.load %arg4[%c0_1, %c0_2] : memref<64x16xbf16, #tpu.memory_space<vmem>>, vector<64x16xbf16>
    %cst = arith.constant dense<0.000000e+00> : vector<8x16xf32>
    %2 = tpu.matmul %0, %1, %cst {dimension_numbers = #tpu.dot_dimension_numbers<[1], [0], [0], [1], [0, 0, 1, 1], [], []>} : vector<8x64xbf16>, vector<64x16xbf16>, vector<8x16xf32> -> vector<8x16xf32>
    %c0_3 = arith.constant 0 : index
    %c0_4 = arith.constant 0 : index
    %3 = vector.load %arg5[%c0_3, %c0_4] : memref<8x16xf32, #tpu.memory_space<vmem>>, vector<8x16xf32>
    tpu.vector_store %arg5[%c0_3, %c0_4], %2 {strides = array<i32>} : memref<8x16xf32, #tpu.memory_space<vmem>>, vector<8x16xf32>,
    %c0_5 = arith.constant 0 : index
    %c0_6 = arith.constant 0 : index
    %4 = vector.load %arg5[%c0_5, %c0_6] : memref<8x16xf32, #tpu.memory_space<vmem>>, vector<8x16xf32>
    %cst_7 = arith.constant dense<0.000000e+00> : vector<16xf32>
    %5 = vector.multi_reduction <add>, %4, %cst_7 [0] : vector<8x16xf32> to vector<16xf32>
    %6 = vector.shape_cast %5 : vector<16xf32> to vector<1x16xf32>
    %7 = vector.shape_cast %6 : vector<1x16xf32> to vector<1x1x16xf32>
    %c0_8 = arith.constant 0 : index
    %c0_9 = arith.constant 0 : index
    %c0_10 = arith.constant 0 : index
    %8 = vector.load %arg6[%c0_8, %c0_9, %c0_10] : memref<1x1x16xf32, #tpu.memory_space<vmem>>, vector<1x1x16xf32>
    tpu.vector_store %arg6[%c0_8, %c0_9, %c0_10], %7 {strides = array<i32>} : memref<1x1x16xf32, #tpu.memory_space<vmem>>, vector<1x1x16xf32>,
    %9 = arith.mulf %4, %4 : vector<8x16xf32>
    %cst_11 = arith.constant dense<0.000000e+00> : vector<16xf32>
    %10 = vector.multi_reduction <add>, %9, %cst_11 [0] : vector<8x16xf32> to vector<16xf32>
    %11 = vector.shape_cast %10 : vector<16xf32> to vector<1x16xf32>
    %12 = vector.shape_cast %11 : vector<1x16xf32> to vector<1x1x16xf32>
    %c0_12 = arith.constant 0 : index
    %c0_13 = arith.constant 0 : index
    %c0_14 = arith.constant 0 : index
    %13 = vector.load %arg7[%c0_12, %c0_13, %c0_14] : memref<1x1x16xf32, #tpu.memory_space<vmem>>, vector<1x1x16xf32>
    tpu.vector_store %arg7[%c0_12, %c0_13, %c0_14], %12 {strides = array<i32>} : memref<1x1x16xf32, #tpu.memory_space<vmem>>, vector<1x1x16xf32>,
    return
  }
  func.func @transform_0(%arg0: i32, %arg1: i32, %arg2: i32) -> (i32, i32) {
    %c0_i32 = arith.constant 0 : i32
    return %arg0, %arg2 : i32, i32
  }
  func.func @transform_1(%arg0: i32, %arg1: i32, %arg2: i32) -> (i32, i32) {
    %c0_i32 = arith.constant 0 : i32
    return %arg2, %arg1 : i32, i32
  }
  func.func @transform_2(%arg0: i32, %arg1: i32, %arg2: i32) -> (i32, i32) {
    %c0_i32 = arith.constant 0 : i32
    return %arg0, %arg1 : i32, i32
  }
  func.func @transform_3(%arg0: i32, %arg1: i32, %arg2: i32) -> (i32, i32, i32) {
    %c0_i32 = arith.constant 0 : i32
    %c0_i32_0 = arith.constant 0 : i32
    return %arg0, %c0_i32, %arg1 : i32, i32, i32
  }
  func.func @transform_4(%arg0: i32, %arg1: i32, %arg2: i32) -> (i32, i32, i32) {
    %c0_i32 = arith.constant 0 : i32
    %c0_i32_0 = arith.constant 0 : i32
    return %arg0, %c0_i32, %arg1 : i32, i32, i32
  }
}

module attributes {stable_mosaic.version = 11 : i64} {
  func.func @_matmul_stats_kernel(%arg0: i32, %arg1: i32, %arg2: i32, %arg3: memref<8x64xbf16, #tpu.memory_space<vmem>>, %arg4: memref<64x32xbf16, #tpu.memory_space<vmem>>, %arg5: memref<8x32xf32, #tpu.memory_space<vmem>>, %arg6: memref<1x1x32xf32, #tpu.memory_space<vmem>>, %arg7: memref<1x1x32xf32, #tpu.memory_space<vmem>>) attributes {dimension_semantics = [#tpu.dimension_semantics<parallel>, #tpu.dimension_semantics<parallel>, #tpu.dimension_semantics<arbitrary>], iteration_bounds = array<i64: 1, 1, 1>, scalar_prefetch = 0 : i64, scratch_operands = 0 : i64, tpu.core_type = #tpu.core_type<tc>, window_params = [{transform_indices = @transform_0, window_bounds = array<i64: 8, 64>}, {transform_indices = @transform_1, window_bounds = array<i64: 64, 32>}, {transform_indices = @transform_2, window_bounds = array<i64: 8, 32>}, {transform_indices = @transform_3, window_bounds = array<i64: 1, 1, 32>}, {transform_indices = @transform_4, window_bounds = array<i64: 1, 1, 32>}]} {
    %c0 = arith.constant 0 : index
    %c0_0 = arith.constant 0 : index
    %0 = vector.load %arg3[%c0, %c0_0] : memref<8x64xbf16, #tpu.memory_space<vmem>>, vector<8x64xbf16>
    %c0_1 = arith.constant 0 : index
    %c0_2 = arith.constant 0 : index
    %1 = vector.load %arg4[%c0_1, %c0_2] : memref<64x32xbf16, #tpu.memory_space<vmem>>, vector<64x32xbf16>
    %cst = arith.constant dense<0.000000e+00> : vector<8x32xf32>
    %2 = tpu.matmul %0, %1, %cst {dimension_numbers = #tpu.dot_dimension_numbers<[1], [0], [0], [1], [0, 0, 1, 1], [], []>} : vector<8x64xbf16>, vector<64x32xbf16>, vector<8x32xf32> -> vector<8x32xf32>
    %c0_3 = arith.constant 0 : index
    %c0_4 = arith.constant 0 : index
    %3 = vector.load %arg5[%c0_3, %c0_4] : memref<8x32xf32, #tpu.memory_space<vmem>>, vector<8x32xf32>
    tpu.vector_store %arg5[%c0_3, %c0_4], %2 {strides = array<i32>} : memref<8x32xf32, #tpu.memory_space<vmem>>, vector<8x32xf32>,
    %c0_5 = arith.constant 0 : index
    %c0_6 = arith.constant 0 : index
    %4 = vector.load %arg5[%c0_5, %c0_6] : memref<8x32xf32, #tpu.memory_space<vmem>>, vector<8x32xf32>
    %cst_7 = arith.constant dense<0.000000e+00> : vector<32xf32>
    %5 = vector.multi_reduction <add>, %4, %cst_7 [0] : vector<8x32xf32> to vector<32xf32>
    %6 = vector.shape_cast %5 : vector<32xf32> to vector<1x32xf32>
    %7 = vector.shape_cast %6 : vector<1x32xf32> to vector<1x1x32xf32>
    %c0_8 = arith.constant 0 : index
    %c0_9 = arith.constant 0 : index
    %c0_10 = arith.constant 0 : index
    %8 = vector.load %arg6[%c0_8, %c0_9, %c0_10] : memref<1x1x32xf32, #tpu.memory_space<vmem>>, vector<1x1x32xf32>
    tpu.vector_store %arg6[%c0_8, %c0_9, %c0_10], %7 {strides = array<i32>} : memref<1x1x32xf32, #tpu.memory_space<vmem>>, vector<1x1x32xf32>,
    %9 = arith.mulf %4, %4 : vector<8x32xf32>
    %cst_11 = arith.constant dense<0.000000e+00> : vector<32xf32>
    %10 = vector.multi_reduction <add>, %9, %cst_11 [0] : vector<8x32xf32> to vector<32xf32>
    %11 = vector.shape_cast %10 : vector<32xf32> to vector<1x32xf32>
    %12 = vector.shape_cast %11 : vector<1x32xf32> to vector<1x1x32xf32>
    %c0_12 = arith.constant 0 : index
    %c0_13 = arith.constant 0 : index
    %c0_14 = arith.constant 0 : index
    %13 = vector.load %arg7[%c0_12, %c0_13, %c0_14] : memref<1x1x32xf32, #tpu.memory_space<vmem>>, vector<1x1x32xf32>
    tpu.vector_store %arg7[%c0_12, %c0_13, %c0_14], %12 {strides = array<i32>} : memref<1x1x32xf32, #tpu.memory_space<vmem>>, vector<1x1x32xf32>,
    return
  }
  func.func @transform_0(%arg0: i32, %arg1: i32, %arg2: i32) -> (i32, i32) {
    %c0_i32 = arith.constant 0 : i32
    return %arg0, %arg2 : i32, i32
  }
  func.func @transform_1(%arg0: i32, %arg1: i32, %arg2: i32) -> (i32, i32) {
    %c0_i32 = arith.constant 0 : i32
    return %arg2, %arg1 : i32, i32
  }
  func.func @transform_2(%arg0: i32, %arg1: i32, %arg2: i32) -> (i32, i32) {
    %c0_i32 = arith.constant 0 : i32
    return %arg0, %arg1 : i32, i32
  }
  func.func @transform_3(%arg0: i32, %arg1: i32, %arg2: i32) -> (i32, i32, i32) {
    %c0_i32 = arith.constant 0 : i32
    %c0_i32_0 = arith.constant 0 : i32
    return %arg0, %c0_i32, %arg1 : i32, i32, i32
  }
  func.func @transform_4(%arg0: i32, %arg1: i32, %arg2: i32) -> (i32, i32, i32) {
    %c0_i32 = arith.constant 0 : i32
    %c0_i32_0 = arith.constant 0 : i32
    return %arg0, %c0_i32, %arg1 : i32, i32, i32
  }
}

module attributes {stable_mosaic.version = 11 : i64} {
  func.func @_bn_act_kernel(%arg0: i32, %arg1: memref<8x32xf32, #tpu.memory_space<vmem>>, %arg2: memref<1x32xf32, #tpu.memory_space<vmem>>, %arg3: memref<1x32xf32, #tpu.memory_space<vmem>>, %arg4: memref<8x32xbf16, #tpu.memory_space<vmem>>) attributes {dimension_semantics = [#tpu.dimension_semantics<parallel>], iteration_bounds = array<i64: 1>, scalar_prefetch = 0 : i64, scratch_operands = 0 : i64, tpu.core_type = #tpu.core_type<tc>, window_params = [{transform_indices = @transform_0, window_bounds = array<i64: 8, 32>}, {pipeline_mode = #tpu.pipeline_mode<synchronous>, transform_indices = @transform_1, window_bounds = array<i64: 1, 32>}, {pipeline_mode = #tpu.pipeline_mode<synchronous>, transform_indices = @transform_2, window_bounds = array<i64: 1, 32>}, {transform_indices = @transform_3, window_bounds = array<i64: 8, 32>}]} {
    %c0 = arith.constant 0 : index
    %c0_0 = arith.constant 0 : index
    %0 = vector.load %arg1[%c0, %c0_0] : memref<8x32xf32, #tpu.memory_space<vmem>>, vector<8x32xf32>
    %c0_1 = arith.constant 0 : index
    %c0_2 = arith.constant 0 : index
    %1 = vector.load %arg2[%c0_1, %c0_2] : memref<1x32xf32, #tpu.memory_space<vmem>>, vector<1x32xf32>
    %2 = vector.broadcast %1 : vector<1x32xf32> to vector<8x32xf32>
    %3 = arith.mulf %0, %2 : vector<8x32xf32>
    %c0_3 = arith.constant 0 : index
    %c0_4 = arith.constant 0 : index
    %4 = vector.load %arg3[%c0_3, %c0_4] : memref<1x32xf32, #tpu.memory_space<vmem>>, vector<1x32xf32>
    %5 = vector.broadcast %4 : vector<1x32xf32> to vector<8x32xf32>
    %6 = arith.addf %3, %5 : vector<8x32xf32>
    %cst = arith.constant 0.000000e+00 : f32
    %7 = vector.broadcast %cst : f32 to vector<8x32xf32>
    %8 = arith.maximumf %6, %7 : vector<8x32xf32>
    %9 = arith.truncf %8 : vector<8x32xf32> to vector<8x32xbf16>
    %c0_5 = arith.constant 0 : index
    %c0_6 = arith.constant 0 : index
    %10 = vector.load %arg4[%c0_5, %c0_6] : memref<8x32xbf16, #tpu.memory_space<vmem>>, vector<8x32xbf16>
    tpu.vector_store %arg4[%c0_5, %c0_6], %9 {strides = array<i32>} : memref<8x32xbf16, #tpu.memory_space<vmem>>, vector<8x32xbf16>,
    return
  }
  func.func @transform_0(%arg0: i32) -> (i32, i32) {
    %c0_i32 = arith.constant 0 : i32
    %c0_i32_0 = arith.constant 0 : i32
    return %arg0, %c0_i32 : i32, i32
  }
  func.func @transform_1(%arg0: i32) -> (i32, i32) {
    %c0_i32 = arith.constant 0 : i32
    %c0_i32_0 = arith.constant 0 : i32
    %c0_i32_1 = arith.constant 0 : i32
    return %c0_i32, %c0_i32_0 : i32, i32
  }
  func.func @transform_2(%arg0: i32) -> (i32, i32) {
    %c0_i32 = arith.constant 0 : i32
    %c0_i32_0 = arith.constant 0 : i32
    %c0_i32_1 = arith.constant 0 : i32
    return %c0_i32, %c0_i32_0 : i32, i32
  }
  func.func @transform_3(%arg0: i32) -> (i32, i32) {
    %c0_i32 = arith.constant 0 : i32
    %c0_i32_0 = arith.constant 0 : i32
    return %arg0, %c0_i32 : i32, i32
  }
}

module attributes {stable_mosaic.version = 11 : i64} {
  func.func @_matmul_stats_kernel(%arg0: i32, %arg1: i32, %arg2: i32, %arg3: memref<2x288xbf16, #tpu.memory_space<vmem>>, %arg4: memref<288x32xbf16, #tpu.memory_space<vmem>>, %arg5: memref<2x32xf32, #tpu.memory_space<vmem>>, %arg6: memref<1x1x32xf32, #tpu.memory_space<vmem>>, %arg7: memref<1x1x32xf32, #tpu.memory_space<vmem>>) attributes {dimension_semantics = [#tpu.dimension_semantics<parallel>, #tpu.dimension_semantics<parallel>, #tpu.dimension_semantics<arbitrary>], iteration_bounds = array<i64: 1, 1, 1>, scalar_prefetch = 0 : i64, scratch_operands = 0 : i64, tpu.core_type = #tpu.core_type<tc>, window_params = [{transform_indices = @transform_0, window_bounds = array<i64: 2, 288>}, {transform_indices = @transform_1, window_bounds = array<i64: 288, 32>}, {transform_indices = @transform_2, window_bounds = array<i64: 2, 32>}, {transform_indices = @transform_3, window_bounds = array<i64: 1, 1, 32>}, {transform_indices = @transform_4, window_bounds = array<i64: 1, 1, 32>}]} {
    %c0 = arith.constant 0 : index
    %c0_0 = arith.constant 0 : index
    %0 = vector.load %arg3[%c0, %c0_0] : memref<2x288xbf16, #tpu.memory_space<vmem>>, vector<2x288xbf16>
    %c0_1 = arith.constant 0 : index
    %c0_2 = arith.constant 0 : index
    %1 = vector.load %arg4[%c0_1, %c0_2] : memref<288x32xbf16, #tpu.memory_space<vmem>>, vector<288x32xbf16>
    %cst = arith.constant dense<0.000000e+00> : vector<2x32xf32>
    %2 = tpu.matmul %0, %1, %cst {dimension_numbers = #tpu.dot_dimension_numbers<[1], [0], [0], [1], [0, 0, 1, 1], [], []>} : vector<2x288xbf16>, vector<288x32xbf16>, vector<2x32xf32> -> vector<2x32xf32>
    %c0_3 = arith.constant 0 : index
    %c0_4 = arith.constant 0 : index
    %3 = vector.load %arg5[%c0_3, %c0_4] : memref<2x32xf32, #tpu.memory_space<vmem>>, vector<2x32xf32>
    tpu.vector_store %arg5[%c0_3, %c0_4], %2 {strides = array<i32>} : memref<2x32xf32, #tpu.memory_space<vmem>>, vector<2x32xf32>,
    %c0_5 = arith.constant 0 : index
    %c0_6 = arith.constant 0 : index
    %4 = vector.load %arg5[%c0_5, %c0_6] : memref<2x32xf32, #tpu.memory_space<vmem>>, vector<2x32xf32>
    %cst_7 = arith.constant dense<0.000000e+00> : vector<32xf32>
    %5 = vector.multi_reduction <add>, %4, %cst_7 [0] : vector<2x32xf32> to vector<32xf32>
    %6 = vector.shape_cast %5 : vector<32xf32> to vector<1x32xf32>
    %7 = vector.shape_cast %6 : vector<1x32xf32> to vector<1x1x32xf32>
    %c0_8 = arith.constant 0 : index
    %c0_9 = arith.constant 0 : index
    %c0_10 = arith.constant 0 : index
    %8 = vector.load %arg6[%c0_8, %c0_9, %c0_10] : memref<1x1x32xf32, #tpu.memory_space<vmem>>, vector<1x1x32xf32>
    tpu.vector_store %arg6[%c0_8, %c0_9, %c0_10], %7 {strides = array<i32>} : memref<1x1x32xf32, #tpu.memory_space<vmem>>, vector<1x1x32xf32>,
    %9 = arith.mulf %4, %4 : vector<2x32xf32>
    %cst_11 = arith.constant dense<0.000000e+00> : vector<32xf32>
    %10 = vector.multi_reduction <add>, %9, %cst_11 [0] : vector<2x32xf32> to vector<32xf32>
    %11 = vector.shape_cast %10 : vector<32xf32> to vector<1x32xf32>
    %12 = vector.shape_cast %11 : vector<1x32xf32> to vector<1x1x32xf32>
    %c0_12 = arith.constant 0 : index
    %c0_13 = arith.constant 0 : index
    %c0_14 = arith.constant 0 : index
    %13 = vector.load %arg7[%c0_12, %c0_13, %c0_14] : memref<1x1x32xf32, #tpu.memory_space<vmem>>, vector<1x1x32xf32>
    tpu.vector_store %arg7[%c0_12, %c0_13, %c0_14], %12 {strides = array<i32>} : memref<1x1x32xf32, #tpu.memory_space<vmem>>, vector<1x1x32xf32>,
    return
  }
  func.func @transform_0(%arg0: i32, %arg1: i32, %arg2: i32) -> (i32, i32) {
    %c0_i32 = arith.constant 0 : i32
    return %arg0, %arg2 : i32, i32
  }
  func.func @transform_1(%arg0: i32, %arg1: i32, %arg2: i32) -> (i32, i32) {
    %c0_i32 = arith.constant 0 : i32
    return %arg2, %arg1 : i32, i32
  }
  func.func @transform_2(%arg0: i32, %arg1: i32, %arg2: i32) -> (i32, i32) {
    %c0_i32 = arith.constant 0 : i32
    return %arg0, %arg1 : i32, i32
  }
  func.func @transform_3(%arg0: i32, %arg1: i32, %arg2: i32) -> (i32, i32, i32) {
    %c0_i32 = arith.constant 0 : i32
    %c0_i32_0 = arith.constant 0 : i32
    return %arg0, %c0_i32, %arg1 : i32, i32, i32
  }
  func.func @transform_4(%arg0: i32, %arg1: i32, %arg2: i32) -> (i32, i32, i32) {
    %c0_i32 = arith.constant 0 : i32
    %c0_i32_0 = arith.constant 0 : i32
    return %arg0, %c0_i32, %arg1 : i32, i32, i32
  }
}

module attributes {stable_mosaic.version = 11 : i64} {
  func.func @_matmul_stats_kernel(%arg0: i32, %arg1: i32, %arg2: i32, %arg3: memref<2x32xbf16, #tpu.memory_space<vmem>>, %arg4: memref<32x128xbf16, #tpu.memory_space<vmem>>, %arg5: memref<2x128xf32, #tpu.memory_space<vmem>>, %arg6: memref<1x1x128xf32, #tpu.memory_space<vmem>>, %arg7: memref<1x1x128xf32, #tpu.memory_space<vmem>>) attributes {dimension_semantics = [#tpu.dimension_semantics<parallel>, #tpu.dimension_semantics<parallel>, #tpu.dimension_semantics<arbitrary>], iteration_bounds = array<i64: 1, 1, 1>, scalar_prefetch = 0 : i64, scratch_operands = 0 : i64, tpu.core_type = #tpu.core_type<tc>, window_params = [{transform_indices = @transform_0, window_bounds = array<i64: 2, 32>}, {transform_indices = @transform_1, window_bounds = array<i64: 32, 128>}, {transform_indices = @transform_2, window_bounds = array<i64: 2, 128>}, {transform_indices = @transform_3, window_bounds = array<i64: 1, 1, 128>}, {transform_indices = @transform_4, window_bounds = array<i64: 1, 1, 128>}]} {
    %c0 = arith.constant 0 : index
    %c0_0 = arith.constant 0 : index
    %0 = vector.load %arg3[%c0, %c0_0] : memref<2x32xbf16, #tpu.memory_space<vmem>>, vector<2x32xbf16>
    %c0_1 = arith.constant 0 : index
    %c0_2 = arith.constant 0 : index
    %1 = vector.load %arg4[%c0_1, %c0_2] : memref<32x128xbf16, #tpu.memory_space<vmem>>, vector<32x128xbf16>
    %cst = arith.constant dense<0.000000e+00> : vector<2x128xf32>
    %2 = tpu.matmul %0, %1, %cst {dimension_numbers = #tpu.dot_dimension_numbers<[1], [0], [0], [1], [0, 0, 1, 1], [], []>} : vector<2x32xbf16>, vector<32x128xbf16>, vector<2x128xf32> -> vector<2x128xf32>
    %c0_3 = arith.constant 0 : index
    %c0_4 = arith.constant 0 : index
    %3 = vector.load %arg5[%c0_3, %c0_4] : memref<2x128xf32, #tpu.memory_space<vmem>>, vector<2x128xf32>
    tpu.vector_store %arg5[%c0_3, %c0_4], %2 {strides = array<i32>} : memref<2x128xf32, #tpu.memory_space<vmem>>, vector<2x128xf32>,
    %c0_5 = arith.constant 0 : index
    %c0_6 = arith.constant 0 : index
    %4 = vector.load %arg5[%c0_5, %c0_6] : memref<2x128xf32, #tpu.memory_space<vmem>>, vector<2x128xf32>
    %cst_7 = arith.constant dense<0.000000e+00> : vector<128xf32>
    %5 = vector.multi_reduction <add>, %4, %cst_7 [0] : vector<2x128xf32> to vector<128xf32>
    %6 = vector.shape_cast %5 : vector<128xf32> to vector<1x128xf32>
    %7 = vector.shape_cast %6 : vector<1x128xf32> to vector<1x1x128xf32>
    %c0_8 = arith.constant 0 : index
    %c0_9 = arith.constant 0 : index
    %c0_10 = arith.constant 0 : index
    %8 = vector.load %arg6[%c0_8, %c0_9, %c0_10] : memref<1x1x128xf32, #tpu.memory_space<vmem>>, vector<1x1x128xf32>
    tpu.vector_store %arg6[%c0_8, %c0_9, %c0_10], %7 {strides = array<i32>} : memref<1x1x128xf32, #tpu.memory_space<vmem>>, vector<1x1x128xf32>,
    %9 = arith.mulf %4, %4 : vector<2x128xf32>
    %cst_11 = arith.constant dense<0.000000e+00> : vector<128xf32>
    %10 = vector.multi_reduction <add>, %9, %cst_11 [0] : vector<2x128xf32> to vector<128xf32>
    %11 = vector.shape_cast %10 : vector<128xf32> to vector<1x128xf32>
    %12 = vector.shape_cast %11 : vector<1x128xf32> to vector<1x1x128xf32>
    %c0_12 = arith.constant 0 : index
    %c0_13 = arith.constant 0 : index
    %c0_14 = arith.constant 0 : index
    %13 = vector.load %arg7[%c0_12, %c0_13, %c0_14] : memref<1x1x128xf32, #tpu.memory_space<vmem>>, vector<1x1x128xf32>
    tpu.vector_store %arg7[%c0_12, %c0_13, %c0_14], %12 {strides = array<i32>} : memref<1x1x128xf32, #tpu.memory_space<vmem>>, vector<1x1x128xf32>,
    return
  }
  func.func @transform_0(%arg0: i32, %arg1: i32, %arg2: i32) -> (i32, i32) {
    %c0_i32 = arith.constant 0 : i32
    return %arg0, %arg2 : i32, i32
  }
  func.func @transform_1(%arg0: i32, %arg1: i32, %arg2: i32) -> (i32, i32) {
    %c0_i32 = arith.constant 0 : i32
    return %arg2, %arg1 : i32, i32
  }
  func.func @transform_2(%arg0: i32, %arg1: i32, %arg2: i32) -> (i32, i32) {
    %c0_i32 = arith.constant 0 : i32
    return %arg0, %arg1 : i32, i32
  }
  func.func @transform_3(%arg0: i32, %arg1: i32, %arg2: i32) -> (i32, i32, i32) {
    %c0_i32 = arith.constant 0 : i32
    %c0_i32_0 = arith.constant 0 : i32
    return %arg0, %c0_i32, %arg1 : i32, i32, i32
  }
  func.func @transform_4(%arg0: i32, %arg1: i32, %arg2: i32) -> (i32, i32, i32) {
    %c0_i32 = arith.constant 0 : i32
    %c0_i32_0 = arith.constant 0 : i32
    return %arg0, %c0_i32, %arg1 : i32, i32, i32
  }
}

module attributes {stable_mosaic.version = 11 : i64} {
  func.func @_bn_act_kernel(%arg0: i32, %arg1: memref<2x32xf32, #tpu.memory_space<vmem>>, %arg2: memref<1x32xf32, #tpu.memory_space<vmem>>, %arg3: memref<1x32xf32, #tpu.memory_space<vmem>>, %arg4: memref<2x32xbf16, #tpu.memory_space<vmem>>) attributes {dimension_semantics = [#tpu.dimension_semantics<parallel>], iteration_bounds = array<i64: 1>, scalar_prefetch = 0 : i64, scratch_operands = 0 : i64, tpu.core_type = #tpu.core_type<tc>, window_params = [{transform_indices = @transform_0, window_bounds = array<i64: 2, 32>}, {pipeline_mode = #tpu.pipeline_mode<synchronous>, transform_indices = @transform_1, window_bounds = array<i64: 1, 32>}, {pipeline_mode = #tpu.pipeline_mode<synchronous>, transform_indices = @transform_2, window_bounds = array<i64: 1, 32>}, {transform_indices = @transform_3, window_bounds = array<i64: 2, 32>}]} {
    %c0 = arith.constant 0 : index
    %c0_0 = arith.constant 0 : index
    %0 = vector.load %arg1[%c0, %c0_0] : memref<2x32xf32, #tpu.memory_space<vmem>>, vector<2x32xf32>
    %c0_1 = arith.constant 0 : index
    %c0_2 = arith.constant 0 : index
    %1 = vector.load %arg2[%c0_1, %c0_2] : memref<1x32xf32, #tpu.memory_space<vmem>>, vector<1x32xf32>
    %2 = vector.broadcast %1 : vector<1x32xf32> to vector<2x32xf32>
    %3 = arith.mulf %0, %2 : vector<2x32xf32>
    %c0_3 = arith.constant 0 : index
    %c0_4 = arith.constant 0 : index
    %4 = vector.load %arg3[%c0_3, %c0_4] : memref<1x32xf32, #tpu.memory_space<vmem>>, vector<1x32xf32>
    %5 = vector.broadcast %4 : vector<1x32xf32> to vector<2x32xf32>
    %6 = arith.addf %3, %5 : vector<2x32xf32>
    %cst = arith.constant 0.000000e+00 : f32
    %7 = vector.broadcast %cst : f32 to vector<2x32xf32>
    %8 = arith.maximumf %6, %7 : vector<2x32xf32>
    %9 = arith.truncf %8 : vector<2x32xf32> to vector<2x32xbf16>
    %c0_5 = arith.constant 0 : index
    %c0_6 = arith.constant 0 : index
    %10 = vector.load %arg4[%c0_5, %c0_6] : memref<2x32xbf16, #tpu.memory_space<vmem>>, vector<2x32xbf16>
    tpu.vector_store %arg4[%c0_5, %c0_6], %9 {strides = array<i32>} : memref<2x32xbf16, #tpu.memory_space<vmem>>, vector<2x32xbf16>,
    return
  }
  func.func @transform_0(%arg0: i32) -> (i32, i32) {
    %c0_i32 = arith.constant 0 : i32
    %c0_i32_0 = arith.constant 0 : i32
    return %arg0, %c0_i32 : i32, i32
  }
  func.func @transform_1(%arg0: i32) -> (i32, i32) {
    %c0_i32 = arith.constant 0 : i32
    %c0_i32_0 = arith.constant 0 : i32
    %c0_i32_1 = arith.constant 0 : i32
    return %c0_i32, %c0_i32_0 : i32, i32
  }
  func.func @transform_2(%arg0: i32) -> (i32, i32) {
    %c0_i32 = arith.constant 0 : i32
    %c0_i32_0 = arith.constant 0 : i32
    %c0_i32_1 = arith.constant 0 : i32
    return %c0_i32, %c0_i32_0 : i32, i32
  }
  func.func @transform_3(%arg0: i32) -> (i32, i32) {
    %c0_i32 = arith.constant 0 : i32
    %c0_i32_0 = arith.constant 0 : i32
    return %arg0, %c0_i32 : i32, i32
  }
}

module attributes {stable_mosaic.version = 11 : i64} {
  func.func @_bn_act_kernel(%arg0: i32, %arg1: memref<2x128xf32, #tpu.memory_space<vmem>>, %arg2: memref<1x128xf32, #tpu.memory_space<vmem>>, %arg3: memref<1x128xf32, #tpu.memory_space<vmem>>, %arg4: memref<2x128xbf16, #tpu.memory_space<vmem>>) attributes {dimension_semantics = [#tpu.dimension_semantics<parallel>], iteration_bounds = array<i64: 1>, scalar_prefetch = 0 : i64, scratch_operands = 0 : i64, tpu.core_type = #tpu.core_type<tc>, window_params = [{transform_indices = @transform_0, window_bounds = array<i64: 2, 128>}, {pipeline_mode = #tpu.pipeline_mode<synchronous>, transform_indices = @transform_1, window_bounds = array<i64: 1, 128>}, {pipeline_mode = #tpu.pipeline_mode<synchronous>, transform_indices = @transform_2, window_bounds = array<i64: 1, 128>}, {transform_indices = @transform_3, window_bounds = array<i64: 2, 128>}]} {
    %c0 = arith.constant 0 : index
    %c0_0 = arith.constant 0 : index
    %0 = vector.load %arg1[%c0, %c0_0] : memref<2x128xf32, #tpu.memory_space<vmem>>, vector<2x128xf32>
    %c0_1 = arith.constant 0 : index
    %c0_2 = arith.constant 0 : index
    %1 = vector.load %arg2[%c0_1, %c0_2] : memref<1x128xf32, #tpu.memory_space<vmem>>, vector<1x128xf32>
    %2 = vector.broadcast %1 : vector<1x128xf32> to vector<2x128xf32>
    %3 = arith.mulf %0, %2 : vector<2x128xf32>
    %c0_3 = arith.constant 0 : index
    %c0_4 = arith.constant 0 : index
    %4 = vector.load %arg3[%c0_3, %c0_4] : memref<1x128xf32, #tpu.memory_space<vmem>>, vector<1x128xf32>
    %5 = vector.broadcast %4 : vector<1x128xf32> to vector<2x128xf32>
    %6 = arith.addf %3, %5 : vector<2x128xf32>
    %cst = arith.constant 0.000000e+00 : f32
    %7 = vector.broadcast %cst : f32 to vector<2x128xf32>
    %8 = arith.maximumf %6, %7 : vector<2x128xf32>
    %9 = arith.truncf %8 : vector<2x128xf32> to vector<2x128xbf16>
    %c0_5 = arith.constant 0 : index
    %c0_6 = arith.constant 0 : index
    %10 = vector.load %arg4[%c0_5, %c0_6] : memref<2x128xbf16, #tpu.memory_space<vmem>>, vector<2x128xbf16>
    tpu.vector_store %arg4[%c0_5, %c0_6], %9 {strides = array<i32>} : memref<2x128xbf16, #tpu.memory_space<vmem>>, vector<2x128xbf16>,
    return
  }
  func.func @transform_0(%arg0: i32) -> (i32, i32) {
    %c0_i32 = arith.constant 0 : i32
    %c0_i32_0 = arith.constant 0 : i32
    return %arg0, %c0_i32 : i32, i32
  }
  func.func @transform_1(%arg0: i32) -> (i32, i32) {
    %c0_i32 = arith.constant 0 : i32
    %c0_i32_0 = arith.constant 0 : i32
    %c0_i32_1 = arith.constant 0 : i32
    return %c0_i32, %c0_i32_0 : i32, i32
  }
  func.func @transform_2(%arg0: i32) -> (i32, i32) {
    %c0_i32 = arith.constant 0 : i32
    %c0_i32_0 = arith.constant 0 : i32
    %c0_i32_1 = arith.constant 0 : i32
    return %c0_i32, %c0_i32_0 : i32, i32
  }
  func.func @transform_3(%arg0: i32) -> (i32, i32) {
    %c0_i32 = arith.constant 0 : i32
    %c0_i32_0 = arith.constant 0 : i32
    return %arg0, %c0_i32 : i32, i32
  }
}

module attributes {stable_mosaic.version = 11 : i64} {
  func.func @_matmul_stats_kernel(%arg0: i32, %arg1: i32, %arg2: i32, %arg3: memref<2x128xbf16, #tpu.memory_space<vmem>>, %arg4: memref<128x32xbf16, #tpu.memory_space<vmem>>, %arg5: memref<2x32xf32, #tpu.memory_space<vmem>>, %arg6: memref<1x1x32xf32, #tpu.memory_space<vmem>>, %arg7: memref<1x1x32xf32, #tpu.memory_space<vmem>>) attributes {dimension_semantics = [#tpu.dimension_semantics<parallel>, #tpu.dimension_semantics<parallel>, #tpu.dimension_semantics<arbitrary>], iteration_bounds = array<i64: 1, 1, 1>, scalar_prefetch = 0 : i64, scratch_operands = 0 : i64, tpu.core_type = #tpu.core_type<tc>, window_params = [{transform_indices = @transform_0, window_bounds = array<i64: 2, 128>}, {transform_indices = @transform_1, window_bounds = array<i64: 128, 32>}, {transform_indices = @transform_2, window_bounds = array<i64: 2, 32>}, {transform_indices = @transform_3, window_bounds = array<i64: 1, 1, 32>}, {transform_indices = @transform_4, window_bounds = array<i64: 1, 1, 32>}]} {
    %c0 = arith.constant 0 : index
    %c0_0 = arith.constant 0 : index
    %0 = vector.load %arg3[%c0, %c0_0] : memref<2x128xbf16, #tpu.memory_space<vmem>>, vector<2x128xbf16>
    %c0_1 = arith.constant 0 : index
    %c0_2 = arith.constant 0 : index
    %1 = vector.load %arg4[%c0_1, %c0_2] : memref<128x32xbf16, #tpu.memory_space<vmem>>, vector<128x32xbf16>
    %cst = arith.constant dense<0.000000e+00> : vector<2x32xf32>
    %2 = tpu.matmul %0, %1, %cst {dimension_numbers = #tpu.dot_dimension_numbers<[1], [0], [0], [1], [0, 0, 1, 1], [], []>} : vector<2x128xbf16>, vector<128x32xbf16>, vector<2x32xf32> -> vector<2x32xf32>
    %c0_3 = arith.constant 0 : index
    %c0_4 = arith.constant 0 : index
    %3 = vector.load %arg5[%c0_3, %c0_4] : memref<2x32xf32, #tpu.memory_space<vmem>>, vector<2x32xf32>
    tpu.vector_store %arg5[%c0_3, %c0_4], %2 {strides = array<i32>} : memref<2x32xf32, #tpu.memory_space<vmem>>, vector<2x32xf32>,
    %c0_5 = arith.constant 0 : index
    %c0_6 = arith.constant 0 : index
    %4 = vector.load %arg5[%c0_5, %c0_6] : memref<2x32xf32, #tpu.memory_space<vmem>>, vector<2x32xf32>
    %cst_7 = arith.constant dense<0.000000e+00> : vector<32xf32>
    %5 = vector.multi_reduction <add>, %4, %cst_7 [0] : vector<2x32xf32> to vector<32xf32>
    %6 = vector.shape_cast %5 : vector<32xf32> to vector<1x32xf32>
    %7 = vector.shape_cast %6 : vector<1x32xf32> to vector<1x1x32xf32>
    %c0_8 = arith.constant 0 : index
    %c0_9 = arith.constant 0 : index
    %c0_10 = arith.constant 0 : index
    %8 = vector.load %arg6[%c0_8, %c0_9, %c0_10] : memref<1x1x32xf32, #tpu.memory_space<vmem>>, vector<1x1x32xf32>
    tpu.vector_store %arg6[%c0_8, %c0_9, %c0_10], %7 {strides = array<i32>} : memref<1x1x32xf32, #tpu.memory_space<vmem>>, vector<1x1x32xf32>,
    %9 = arith.mulf %4, %4 : vector<2x32xf32>
    %cst_11 = arith.constant dense<0.000000e+00> : vector<32xf32>
    %10 = vector.multi_reduction <add>, %9, %cst_11 [0] : vector<2x32xf32> to vector<32xf32>
    %11 = vector.shape_cast %10 : vector<32xf32> to vector<1x32xf32>
    %12 = vector.shape_cast %11 : vector<1x32xf32> to vector<1x1x32xf32>
    %c0_12 = arith.constant 0 : index
    %c0_13 = arith.constant 0 : index
    %c0_14 = arith.constant 0 : index
    %13 = vector.load %arg7[%c0_12, %c0_13, %c0_14] : memref<1x1x32xf32, #tpu.memory_space<vmem>>, vector<1x1x32xf32>
    tpu.vector_store %arg7[%c0_12, %c0_13, %c0_14], %12 {strides = array<i32>} : memref<1x1x32xf32, #tpu.memory_space<vmem>>, vector<1x1x32xf32>,
    return
  }
  func.func @transform_0(%arg0: i32, %arg1: i32, %arg2: i32) -> (i32, i32) {
    %c0_i32 = arith.constant 0 : i32
    return %arg0, %arg2 : i32, i32
  }
  func.func @transform_1(%arg0: i32, %arg1: i32, %arg2: i32) -> (i32, i32) {
    %c0_i32 = arith.constant 0 : i32
    return %arg2, %arg1 : i32, i32
  }
  func.func @transform_2(%arg0: i32, %arg1: i32, %arg2: i32) -> (i32, i32) {
    %c0_i32 = arith.constant 0 : i32
    return %arg0, %arg1 : i32, i32
  }
  func.func @transform_3(%arg0: i32, %arg1: i32, %arg2: i32) -> (i32, i32, i32) {
    %c0_i32 = arith.constant 0 : i32
    %c0_i32_0 = arith.constant 0 : i32
    return %arg0, %c0_i32, %arg1 : i32, i32, i32
  }
  func.func @transform_4(%arg0: i32, %arg1: i32, %arg2: i32) -> (i32, i32, i32) {
    %c0_i32 = arith.constant 0 : i32
    %c0_i32_0 = arith.constant 0 : i32
    return %arg0, %c0_i32, %arg1 : i32, i32, i32
  }
}

module attributes {stable_mosaic.version = 11 : i64} {
  func.func @_matmul_stats_kernel(%arg0: i32, %arg1: i32, %arg2: i32, %arg3: memref<2x128xbf16, #tpu.memory_space<vmem>>, %arg4: memref<128x64xbf16, #tpu.memory_space<vmem>>, %arg5: memref<2x64xf32, #tpu.memory_space<vmem>>, %arg6: memref<1x1x64xf32, #tpu.memory_space<vmem>>, %arg7: memref<1x1x64xf32, #tpu.memory_space<vmem>>) attributes {dimension_semantics = [#tpu.dimension_semantics<parallel>, #tpu.dimension_semantics<parallel>, #tpu.dimension_semantics<arbitrary>], iteration_bounds = array<i64: 1, 1, 1>, scalar_prefetch = 0 : i64, scratch_operands = 0 : i64, tpu.core_type = #tpu.core_type<tc>, window_params = [{transform_indices = @transform_0, window_bounds = array<i64: 2, 128>}, {transform_indices = @transform_1, window_bounds = array<i64: 128, 64>}, {transform_indices = @transform_2, window_bounds = array<i64: 2, 64>}, {transform_indices = @transform_3, window_bounds = array<i64: 1, 1, 64>}, {transform_indices = @transform_4, window_bounds = array<i64: 1, 1, 64>}]} {
    %c0 = arith.constant 0 : index
    %c0_0 = arith.constant 0 : index
    %0 = vector.load %arg3[%c0, %c0_0] : memref<2x128xbf16, #tpu.memory_space<vmem>>, vector<2x128xbf16>
    %c0_1 = arith.constant 0 : index
    %c0_2 = arith.constant 0 : index
    %1 = vector.load %arg4[%c0_1, %c0_2] : memref<128x64xbf16, #tpu.memory_space<vmem>>, vector<128x64xbf16>
    %cst = arith.constant dense<0.000000e+00> : vector<2x64xf32>
    %2 = tpu.matmul %0, %1, %cst {dimension_numbers = #tpu.dot_dimension_numbers<[1], [0], [0], [1], [0, 0, 1, 1], [], []>} : vector<2x128xbf16>, vector<128x64xbf16>, vector<2x64xf32> -> vector<2x64xf32>
    %c0_3 = arith.constant 0 : index
    %c0_4 = arith.constant 0 : index
    %3 = vector.load %arg5[%c0_3, %c0_4] : memref<2x64xf32, #tpu.memory_space<vmem>>, vector<2x64xf32>
    tpu.vector_store %arg5[%c0_3, %c0_4], %2 {strides = array<i32>} : memref<2x64xf32, #tpu.memory_space<vmem>>, vector<2x64xf32>,
    %c0_5 = arith.constant 0 : index
    %c0_6 = arith.constant 0 : index
    %4 = vector.load %arg5[%c0_5, %c0_6] : memref<2x64xf32, #tpu.memory_space<vmem>>, vector<2x64xf32>
    %cst_7 = arith.constant dense<0.000000e+00> : vector<64xf32>
    %5 = vector.multi_reduction <add>, %4, %cst_7 [0] : vector<2x64xf32> to vector<64xf32>
    %6 = vector.shape_cast %5 : vector<64xf32> to vector<1x64xf32>
    %7 = vector.shape_cast %6 : vector<1x64xf32> to vector<1x1x64xf32>
    %c0_8 = arith.constant 0 : index
    %c0_9 = arith.constant 0 : index
    %c0_10 = arith.constant 0 : index
    %8 = vector.load %arg6[%c0_8, %c0_9, %c0_10] : memref<1x1x64xf32, #tpu.memory_space<vmem>>, vector<1x1x64xf32>
    tpu.vector_store %arg6[%c0_8, %c0_9, %c0_10], %7 {strides = array<i32>} : memref<1x1x64xf32, #tpu.memory_space<vmem>>, vector<1x1x64xf32>,
    %9 = arith.mulf %4, %4 : vector<2x64xf32>
    %cst_11 = arith.constant dense<0.000000e+00> : vector<64xf32>
    %10 = vector.multi_reduction <add>, %9, %cst_11 [0] : vector<2x64xf32> to vector<64xf32>
    %11 = vector.shape_cast %10 : vector<64xf32> to vector<1x64xf32>
    %12 = vector.shape_cast %11 : vector<1x64xf32> to vector<1x1x64xf32>
    %c0_12 = arith.constant 0 : index
    %c0_13 = arith.constant 0 : index
    %c0_14 = arith.constant 0 : index
    %13 = vector.load %arg7[%c0_12, %c0_13, %c0_14] : memref<1x1x64xf32, #tpu.memory_space<vmem>>, vector<1x1x64xf32>
    tpu.vector_store %arg7[%c0_12, %c0_13, %c0_14], %12 {strides = array<i32>} : memref<1x1x64xf32, #tpu.memory_space<vmem>>, vector<1x1x64xf32>,
    return
  }
  func.func @transform_0(%arg0: i32, %arg1: i32, %arg2: i32) -> (i32, i32) {
    %c0_i32 = arith.constant 0 : i32
    return %arg0, %arg2 : i32, i32
  }
  func.func @transform_1(%arg0: i32, %arg1: i32, %arg2: i32) -> (i32, i32) {
    %c0_i32 = arith.constant 0 : i32
    return %arg2, %arg1 : i32, i32
  }
  func.func @transform_2(%arg0: i32, %arg1: i32, %arg2: i32) -> (i32, i32) {
    %c0_i32 = arith.constant 0 : i32
    return %arg0, %arg1 : i32, i32
  }
  func.func @transform_3(%arg0: i32, %arg1: i32, %arg2: i32) -> (i32, i32, i32) {
    %c0_i32 = arith.constant 0 : i32
    %c0_i32_0 = arith.constant 0 : i32
    return %arg0, %c0_i32, %arg1 : i32, i32, i32
  }
  func.func @transform_4(%arg0: i32, %arg1: i32, %arg2: i32) -> (i32, i32, i32) {
    %c0_i32 = arith.constant 0 : i32
    %c0_i32_0 = arith.constant 0 : i32
    return %arg0, %c0_i32, %arg1 : i32, i32, i32
  }
}

module attributes {stable_mosaic.version = 11 : i64} {
  func.func @_bn_act_kernel(%arg0: i32, %arg1: memref<2x64xf32, #tpu.memory_space<vmem>>, %arg2: memref<1x64xf32, #tpu.memory_space<vmem>>, %arg3: memref<1x64xf32, #tpu.memory_space<vmem>>, %arg4: memref<2x64xbf16, #tpu.memory_space<vmem>>) attributes {dimension_semantics = [#tpu.dimension_semantics<parallel>], iteration_bounds = array<i64: 1>, scalar_prefetch = 0 : i64, scratch_operands = 0 : i64, tpu.core_type = #tpu.core_type<tc>, window_params = [{transform_indices = @transform_0, window_bounds = array<i64: 2, 64>}, {pipeline_mode = #tpu.pipeline_mode<synchronous>, transform_indices = @transform_1, window_bounds = array<i64: 1, 64>}, {pipeline_mode = #tpu.pipeline_mode<synchronous>, transform_indices = @transform_2, window_bounds = array<i64: 1, 64>}, {transform_indices = @transform_3, window_bounds = array<i64: 2, 64>}]} {
    %c0 = arith.constant 0 : index
    %c0_0 = arith.constant 0 : index
    %0 = vector.load %arg1[%c0, %c0_0] : memref<2x64xf32, #tpu.memory_space<vmem>>, vector<2x64xf32>
    %c0_1 = arith.constant 0 : index
    %c0_2 = arith.constant 0 : index
    %1 = vector.load %arg2[%c0_1, %c0_2] : memref<1x64xf32, #tpu.memory_space<vmem>>, vector<1x64xf32>
    %2 = vector.broadcast %1 : vector<1x64xf32> to vector<2x64xf32>
    %3 = arith.mulf %0, %2 : vector<2x64xf32>
    %c0_3 = arith.constant 0 : index
    %c0_4 = arith.constant 0 : index
    %4 = vector.load %arg3[%c0_3, %c0_4] : memref<1x64xf32, #tpu.memory_space<vmem>>, vector<1x64xf32>
    %5 = vector.broadcast %4 : vector<1x64xf32> to vector<2x64xf32>
    %6 = arith.addf %3, %5 : vector<2x64xf32>
    %cst = arith.constant 0.000000e+00 : f32
    %7 = vector.broadcast %cst : f32 to vector<2x64xf32>
    %8 = arith.maximumf %6, %7 : vector<2x64xf32>
    %9 = arith.truncf %8 : vector<2x64xf32> to vector<2x64xbf16>
    %c0_5 = arith.constant 0 : index
    %c0_6 = arith.constant 0 : index
    %10 = vector.load %arg4[%c0_5, %c0_6] : memref<2x64xbf16, #tpu.memory_space<vmem>>, vector<2x64xbf16>
    tpu.vector_store %arg4[%c0_5, %c0_6], %9 {strides = array<i32>} : memref<2x64xbf16, #tpu.memory_space<vmem>>, vector<2x64xbf16>,
    return
  }
  func.func @transform_0(%arg0: i32) -> (i32, i32) {
    %c0_i32 = arith.constant 0 : i32
    %c0_i32_0 = arith.constant 0 : i32
    return %arg0, %c0_i32 : i32, i32
  }
  func.func @transform_1(%arg0: i32) -> (i32, i32) {
    %c0_i32 = arith.constant 0 : i32
    %c0_i32_0 = arith.constant 0 : i32
    %c0_i32_1 = arith.constant 0 : i32
    return %c0_i32, %c0_i32_0 : i32, i32
  }
  func.func @transform_2(%arg0: i32) -> (i32, i32) {
    %c0_i32 = arith.constant 0 : i32
    %c0_i32_0 = arith.constant 0 : i32
    %c0_i32_1 = arith.constant 0 : i32
    return %c0_i32, %c0_i32_0 : i32, i32
  }
  func.func @transform_3(%arg0: i32) -> (i32, i32) {
    %c0_i32 = arith.constant 0 : i32
    %c0_i32_0 = arith.constant 0 : i32
    return %arg0, %c0_i32 : i32, i32
  }
}

module attributes {stable_mosaic.version = 11 : i64} {
  func.func @_matmul_stats_kernel(%arg0: i32, %arg1: i32, %arg2: i32, %arg3: memref<2x576xbf16, #tpu.memory_space<vmem>>, %arg4: memref<576x64xbf16, #tpu.memory_space<vmem>>, %arg5: memref<2x64xf32, #tpu.memory_space<vmem>>, %arg6: memref<1x1x64xf32, #tpu.memory_space<vmem>>, %arg7: memref<1x1x64xf32, #tpu.memory_space<vmem>>) attributes {dimension_semantics = [#tpu.dimension_semantics<parallel>, #tpu.dimension_semantics<parallel>, #tpu.dimension_semantics<arbitrary>], iteration_bounds = array<i64: 1, 1, 1>, scalar_prefetch = 0 : i64, scratch_operands = 0 : i64, tpu.core_type = #tpu.core_type<tc>, window_params = [{transform_indices = @transform_0, window_bounds = array<i64: 2, 576>}, {transform_indices = @transform_1, window_bounds = array<i64: 576, 64>}, {transform_indices = @transform_2, window_bounds = array<i64: 2, 64>}, {transform_indices = @transform_3, window_bounds = array<i64: 1, 1, 64>}, {transform_indices = @transform_4, window_bounds = array<i64: 1, 1, 64>}]} {
    %c0 = arith.constant 0 : index
    %c0_0 = arith.constant 0 : index
    %0 = vector.load %arg3[%c0, %c0_0] : memref<2x576xbf16, #tpu.memory_space<vmem>>, vector<2x576xbf16>
    %c0_1 = arith.constant 0 : index
    %c0_2 = arith.constant 0 : index
    %1 = vector.load %arg4[%c0_1, %c0_2] : memref<576x64xbf16, #tpu.memory_space<vmem>>, vector<576x64xbf16>
    %cst = arith.constant dense<0.000000e+00> : vector<2x64xf32>
    %2 = tpu.matmul %0, %1, %cst {dimension_numbers = #tpu.dot_dimension_numbers<[1], [0], [0], [1], [0, 0, 1, 1], [], []>} : vector<2x576xbf16>, vector<576x64xbf16>, vector<2x64xf32> -> vector<2x64xf32>
    %c0_3 = arith.constant 0 : index
    %c0_4 = arith.constant 0 : index
    %3 = vector.load %arg5[%c0_3, %c0_4] : memref<2x64xf32, #tpu.memory_space<vmem>>, vector<2x64xf32>
    tpu.vector_store %arg5[%c0_3, %c0_4], %2 {strides = array<i32>} : memref<2x64xf32, #tpu.memory_space<vmem>>, vector<2x64xf32>,
    %c0_5 = arith.constant 0 : index
    %c0_6 = arith.constant 0 : index
    %4 = vector.load %arg5[%c0_5, %c0_6] : memref<2x64xf32, #tpu.memory_space<vmem>>, vector<2x64xf32>
    %cst_7 = arith.constant dense<0.000000e+00> : vector<64xf32>
    %5 = vector.multi_reduction <add>, %4, %cst_7 [0] : vector<2x64xf32> to vector<64xf32>
    %6 = vector.shape_cast %5 : vector<64xf32> to vector<1x64xf32>
    %7 = vector.shape_cast %6 : vector<1x64xf32> to vector<1x1x64xf32>
    %c0_8 = arith.constant 0 : index
    %c0_9 = arith.constant 0 : index
    %c0_10 = arith.constant 0 : index
    %8 = vector.load %arg6[%c0_8, %c0_9, %c0_10] : memref<1x1x64xf32, #tpu.memory_space<vmem>>, vector<1x1x64xf32>
    tpu.vector_store %arg6[%c0_8, %c0_9, %c0_10], %7 {strides = array<i32>} : memref<1x1x64xf32, #tpu.memory_space<vmem>>, vector<1x1x64xf32>,
    %9 = arith.mulf %4, %4 : vector<2x64xf32>
    %cst_11 = arith.constant dense<0.000000e+00> : vector<64xf32>
    %10 = vector.multi_reduction <add>, %9, %cst_11 [0] : vector<2x64xf32> to vector<64xf32>
    %11 = vector.shape_cast %10 : vector<64xf32> to vector<1x64xf32>
    %12 = vector.shape_cast %11 : vector<1x64xf32> to vector<1x1x64xf32>
    %c0_12 = arith.constant 0 : index
    %c0_13 = arith.constant 0 : index
    %c0_14 = arith.constant 0 : index
    %13 = vector.load %arg7[%c0_12, %c0_13, %c0_14] : memref<1x1x64xf32, #tpu.memory_space<vmem>>, vector<1x1x64xf32>
    tpu.vector_store %arg7[%c0_12, %c0_13, %c0_14], %12 {strides = array<i32>} : memref<1x1x64xf32, #tpu.memory_space<vmem>>, vector<1x1x64xf32>,
    return
  }
  func.func @transform_0(%arg0: i32, %arg1: i32, %arg2: i32) -> (i32, i32) {
    %c0_i32 = arith.constant 0 : i32
    return %arg0, %arg2 : i32, i32
  }
  func.func @transform_1(%arg0: i32, %arg1: i32, %arg2: i32) -> (i32, i32) {
    %c0_i32 = arith.constant 0 : i32
    return %arg2, %arg1 : i32, i32
  }
  func.func @transform_2(%arg0: i32, %arg1: i32, %arg2: i32) -> (i32, i32) {
    %c0_i32 = arith.constant 0 : i32
    return %arg0, %arg1 : i32, i32
  }
  func.func @transform_3(%arg0: i32, %arg1: i32, %arg2: i32) -> (i32, i32, i32) {
    %c0_i32 = arith.constant 0 : i32
    %c0_i32_0 = arith.constant 0 : i32
    return %arg0, %c0_i32, %arg1 : i32, i32, i32
  }
  func.func @transform_4(%arg0: i32, %arg1: i32, %arg2: i32) -> (i32, i32, i32) {
    %c0_i32 = arith.constant 0 : i32
    %c0_i32_0 = arith.constant 0 : i32
    return %arg0, %c0_i32, %arg1 : i32, i32, i32
  }
}

module attributes {stable_mosaic.version = 11 : i64} {
  func.func @_matmul_stats_kernel(%arg0: i32, %arg1: i32, %arg2: i32, %arg3: memref<2x64xbf16, #tpu.memory_space<vmem>>, %arg4: memref<64x256xbf16, #tpu.memory_space<vmem>>, %arg5: memref<2x256xf32, #tpu.memory_space<vmem>>, %arg6: memref<1x1x256xf32, #tpu.memory_space<vmem>>, %arg7: memref<1x1x256xf32, #tpu.memory_space<vmem>>) attributes {dimension_semantics = [#tpu.dimension_semantics<parallel>, #tpu.dimension_semantics<parallel>, #tpu.dimension_semantics<arbitrary>], iteration_bounds = array<i64: 1, 1, 1>, scalar_prefetch = 0 : i64, scratch_operands = 0 : i64, tpu.core_type = #tpu.core_type<tc>, window_params = [{transform_indices = @transform_0, window_bounds = array<i64: 2, 64>}, {transform_indices = @transform_1, window_bounds = array<i64: 64, 256>}, {transform_indices = @transform_2, window_bounds = array<i64: 2, 256>}, {transform_indices = @transform_3, window_bounds = array<i64: 1, 1, 256>}, {transform_indices = @transform_4, window_bounds = array<i64: 1, 1, 256>}]} {
    %c0 = arith.constant 0 : index
    %c0_0 = arith.constant 0 : index
    %0 = vector.load %arg3[%c0, %c0_0] : memref<2x64xbf16, #tpu.memory_space<vmem>>, vector<2x64xbf16>
    %c0_1 = arith.constant 0 : index
    %c0_2 = arith.constant 0 : index
    %1 = vector.load %arg4[%c0_1, %c0_2] : memref<64x256xbf16, #tpu.memory_space<vmem>>, vector<64x256xbf16>
    %cst = arith.constant dense<0.000000e+00> : vector<2x256xf32>
    %2 = tpu.matmul %0, %1, %cst {dimension_numbers = #tpu.dot_dimension_numbers<[1], [0], [0], [1], [0, 0, 1, 1], [], []>} : vector<2x64xbf16>, vector<64x256xbf16>, vector<2x256xf32> -> vector<2x256xf32>
    %c0_3 = arith.constant 0 : index
    %c0_4 = arith.constant 0 : index
    %3 = vector.load %arg5[%c0_3, %c0_4] : memref<2x256xf32, #tpu.memory_space<vmem>>, vector<2x256xf32>
    tpu.vector_store %arg5[%c0_3, %c0_4], %2 {strides = array<i32>} : memref<2x256xf32, #tpu.memory_space<vmem>>, vector<2x256xf32>,
    %c0_5 = arith.constant 0 : index
    %c0_6 = arith.constant 0 : index
    %4 = vector.load %arg5[%c0_5, %c0_6] : memref<2x256xf32, #tpu.memory_space<vmem>>, vector<2x256xf32>
    %cst_7 = arith.constant dense<0.000000e+00> : vector<256xf32>
    %5 = vector.multi_reduction <add>, %4, %cst_7 [0] : vector<2x256xf32> to vector<256xf32>
    %6 = vector.shape_cast %5 : vector<256xf32> to vector<1x256xf32>
    %7 = vector.shape_cast %6 : vector<1x256xf32> to vector<1x1x256xf32>
    %c0_8 = arith.constant 0 : index
    %c0_9 = arith.constant 0 : index
    %c0_10 = arith.constant 0 : index
    %8 = vector.load %arg6[%c0_8, %c0_9, %c0_10] : memref<1x1x256xf32, #tpu.memory_space<vmem>>, vector<1x1x256xf32>
    tpu.vector_store %arg6[%c0_8, %c0_9, %c0_10], %7 {strides = array<i32>} : memref<1x1x256xf32, #tpu.memory_space<vmem>>, vector<1x1x256xf32>,
    %9 = arith.mulf %4, %4 : vector<2x256xf32>
    %cst_11 = arith.constant dense<0.000000e+00> : vector<256xf32>
    %10 = vector.multi_reduction <add>, %9, %cst_11 [0] : vector<2x256xf32> to vector<256xf32>
    %11 = vector.shape_cast %10 : vector<256xf32> to vector<1x256xf32>
    %12 = vector.shape_cast %11 : vector<1x256xf32> to vector<1x1x256xf32>
    %c0_12 = arith.constant 0 : index
    %c0_13 = arith.constant 0 : index
    %c0_14 = arith.constant 0 : index
    %13 = vector.load %arg7[%c0_12, %c0_13, %c0_14] : memref<1x1x256xf32, #tpu.memory_space<vmem>>, vector<1x1x256xf32>
    tpu.vector_store %arg7[%c0_12, %c0_13, %c0_14], %12 {strides = array<i32>} : memref<1x1x256xf32, #tpu.memory_space<vmem>>, vector<1x1x256xf32>,
    return
  }
  func.func @transform_0(%arg0: i32, %arg1: i32, %arg2: i32) -> (i32, i32) {
    %c0_i32 = arith.constant 0 : i32
    return %arg0, %arg2 : i32, i32
  }
  func.func @transform_1(%arg0: i32, %arg1: i32, %arg2: i32) -> (i32, i32) {
    %c0_i32 = arith.constant 0 : i32
    return %arg2, %arg1 : i32, i32
  }
  func.func @transform_2(%arg0: i32, %arg1: i32, %arg2: i32) -> (i32, i32) {
    %c0_i32 = arith.constant 0 : i32
    return %arg0, %arg1 : i32, i32
  }
  func.func @transform_3(%arg0: i32, %arg1: i32, %arg2: i32) -> (i32, i32, i32) {
    %c0_i32 = arith.constant 0 : i32
    %c0_i32_0 = arith.constant 0 : i32
    return %arg0, %c0_i32, %arg1 : i32, i32, i32
  }
  func.func @transform_4(%arg0: i32, %arg1: i32, %arg2: i32) -> (i32, i32, i32) {
    %c0_i32 = arith.constant 0 : i32
    %c0_i32_0 = arith.constant 0 : i32
    return %arg0, %c0_i32, %arg1 : i32, i32, i32
  }
}

module attributes {stable_mosaic.version = 11 : i64} {
  func.func @_bn_act_kernel(%arg0: i32, %arg1: memref<2x256xf32, #tpu.memory_space<vmem>>, %arg2: memref<1x256xf32, #tpu.memory_space<vmem>>, %arg3: memref<1x256xf32, #tpu.memory_space<vmem>>, %arg4: memref<2x256xbf16, #tpu.memory_space<vmem>>) attributes {dimension_semantics = [#tpu.dimension_semantics<parallel>], iteration_bounds = array<i64: 1>, scalar_prefetch = 0 : i64, scratch_operands = 0 : i64, tpu.core_type = #tpu.core_type<tc>, window_params = [{transform_indices = @transform_0, window_bounds = array<i64: 2, 256>}, {pipeline_mode = #tpu.pipeline_mode<synchronous>, transform_indices = @transform_1, window_bounds = array<i64: 1, 256>}, {pipeline_mode = #tpu.pipeline_mode<synchronous>, transform_indices = @transform_2, window_bounds = array<i64: 1, 256>}, {transform_indices = @transform_3, window_bounds = array<i64: 2, 256>}]} {
    %c0 = arith.constant 0 : index
    %c0_0 = arith.constant 0 : index
    %0 = vector.load %arg1[%c0, %c0_0] : memref<2x256xf32, #tpu.memory_space<vmem>>, vector<2x256xf32>
    %c0_1 = arith.constant 0 : index
    %c0_2 = arith.constant 0 : index
    %1 = vector.load %arg2[%c0_1, %c0_2] : memref<1x256xf32, #tpu.memory_space<vmem>>, vector<1x256xf32>
    %2 = vector.broadcast %1 : vector<1x256xf32> to vector<2x256xf32>
    %3 = arith.mulf %0, %2 : vector<2x256xf32>
    %c0_3 = arith.constant 0 : index
    %c0_4 = arith.constant 0 : index
    %4 = vector.load %arg3[%c0_3, %c0_4] : memref<1x256xf32, #tpu.memory_space<vmem>>, vector<1x256xf32>
    %5 = vector.broadcast %4 : vector<1x256xf32> to vector<2x256xf32>
    %6 = arith.addf %3, %5 : vector<2x256xf32>
    %cst = arith.constant 0.000000e+00 : f32
    %7 = vector.broadcast %cst : f32 to vector<2x256xf32>
    %8 = arith.maximumf %6, %7 : vector<2x256xf32>
    %9 = arith.truncf %8 : vector<2x256xf32> to vector<2x256xbf16>
    %c0_5 = arith.constant 0 : index
    %c0_6 = arith.constant 0 : index
    %10 = vector.load %arg4[%c0_5, %c0_6] : memref<2x256xbf16, #tpu.memory_space<vmem>>, vector<2x256xbf16>
    tpu.vector_store %arg4[%c0_5, %c0_6], %9 {strides = array<i32>} : memref<2x256xbf16, #tpu.memory_space<vmem>>, vector<2x256xbf16>,
    return
  }
  func.func @transform_0(%arg0: i32) -> (i32, i32) {
    %c0_i32 = arith.constant 0 : i32
    %c0_i32_0 = arith.constant 0 : i32
    return %arg0, %c0_i32 : i32, i32
  }
  func.func @transform_1(%arg0: i32) -> (i32, i32) {
    %c0_i32 = arith.constant 0 : i32
    %c0_i32_0 = arith.constant 0 : i32
    %c0_i32_1 = arith.constant 0 : i32
    return %c0_i32, %c0_i32_0 : i32, i32
  }
  func.func @transform_2(%arg0: i32) -> (i32, i32) {
    %c0_i32 = arith.constant 0 : i32
    %c0_i32_0 = arith.constant 0 : i32
    %c0_i32_1 = arith.constant 0 : i32
    return %c0_i32, %c0_i32_0 : i32, i32
  }
  func.func @transform_3(%arg0: i32) -> (i32, i32) {
    %c0_i32 = arith.constant 0 : i32
    %c0_i32_0 = arith.constant 0 : i32
    return %arg0, %c0_i32 : i32, i32
  }
}

module attributes {stable_mosaic.version = 11 : i64} {
  func.func @_matmul_stats_kernel(%arg0: i32, %arg1: i32, %arg2: i32, %arg3: memref<2x256xbf16, #tpu.memory_space<vmem>>, %arg4: memref<256x64xbf16, #tpu.memory_space<vmem>>, %arg5: memref<2x64xf32, #tpu.memory_space<vmem>>, %arg6: memref<1x1x64xf32, #tpu.memory_space<vmem>>, %arg7: memref<1x1x64xf32, #tpu.memory_space<vmem>>) attributes {dimension_semantics = [#tpu.dimension_semantics<parallel>, #tpu.dimension_semantics<parallel>, #tpu.dimension_semantics<arbitrary>], iteration_bounds = array<i64: 1, 1, 1>, scalar_prefetch = 0 : i64, scratch_operands = 0 : i64, tpu.core_type = #tpu.core_type<tc>, window_params = [{transform_indices = @transform_0, window_bounds = array<i64: 2, 256>}, {transform_indices = @transform_1, window_bounds = array<i64: 256, 64>}, {transform_indices = @transform_2, window_bounds = array<i64: 2, 64>}, {transform_indices = @transform_3, window_bounds = array<i64: 1, 1, 64>}, {transform_indices = @transform_4, window_bounds = array<i64: 1, 1, 64>}]} {
    %c0 = arith.constant 0 : index
    %c0_0 = arith.constant 0 : index
    %0 = vector.load %arg3[%c0, %c0_0] : memref<2x256xbf16, #tpu.memory_space<vmem>>, vector<2x256xbf16>
    %c0_1 = arith.constant 0 : index
    %c0_2 = arith.constant 0 : index
    %1 = vector.load %arg4[%c0_1, %c0_2] : memref<256x64xbf16, #tpu.memory_space<vmem>>, vector<256x64xbf16>
    %cst = arith.constant dense<0.000000e+00> : vector<2x64xf32>
    %2 = tpu.matmul %0, %1, %cst {dimension_numbers = #tpu.dot_dimension_numbers<[1], [0], [0], [1], [0, 0, 1, 1], [], []>} : vector<2x256xbf16>, vector<256x64xbf16>, vector<2x64xf32> -> vector<2x64xf32>
    %c0_3 = arith.constant 0 : index
    %c0_4 = arith.constant 0 : index
    %3 = vector.load %arg5[%c0_3, %c0_4] : memref<2x64xf32, #tpu.memory_space<vmem>>, vector<2x64xf32>
    tpu.vector_store %arg5[%c0_3, %c0_4], %2 {strides = array<i32>} : memref<2x64xf32, #tpu.memory_space<vmem>>, vector<2x64xf32>,
    %c0_5 = arith.constant 0 : index
    %c0_6 = arith.constant 0 : index
    %4 = vector.load %arg5[%c0_5, %c0_6] : memref<2x64xf32, #tpu.memory_space<vmem>>, vector<2x64xf32>
    %cst_7 = arith.constant dense<0.000000e+00> : vector<64xf32>
    %5 = vector.multi_reduction <add>, %4, %cst_7 [0] : vector<2x64xf32> to vector<64xf32>
    %6 = vector.shape_cast %5 : vector<64xf32> to vector<1x64xf32>
    %7 = vector.shape_cast %6 : vector<1x64xf32> to vector<1x1x64xf32>
    %c0_8 = arith.constant 0 : index
    %c0_9 = arith.constant 0 : index
    %c0_10 = arith.constant 0 : index
    %8 = vector.load %arg6[%c0_8, %c0_9, %c0_10] : memref<1x1x64xf32, #tpu.memory_space<vmem>>, vector<1x1x64xf32>
    tpu.vector_store %arg6[%c0_8, %c0_9, %c0_10], %7 {strides = array<i32>} : memref<1x1x64xf32, #tpu.memory_space<vmem>>, vector<1x1x64xf32>,
    %9 = arith.mulf %4, %4 : vector<2x64xf32>
    %cst_11 = arith.constant dense<0.000000e+00> : vector<64xf32>
    %10 = vector.multi_reduction <add>, %9, %cst_11 [0] : vector<2x64xf32> to vector<64xf32>
    %11 = vector.shape_cast %10 : vector<64xf32> to vector<1x64xf32>
    %12 = vector.shape_cast %11 : vector<1x64xf32> to vector<1x1x64xf32>
    %c0_12 = arith.constant 0 : index
    %c0_13 = arith.constant 0 : index
    %c0_14 = arith.constant 0 : index
    %13 = vector.load %arg7[%c0_12, %c0_13, %c0_14] : memref<1x1x64xf32, #tpu.memory_space<vmem>>, vector<1x1x64xf32>
    tpu.vector_store %arg7[%c0_12, %c0_13, %c0_14], %12 {strides = array<i32>} : memref<1x1x64xf32, #tpu.memory_space<vmem>>, vector<1x1x64xf32>,
    return
  }
  func.func @transform_0(%arg0: i32, %arg1: i32, %arg2: i32) -> (i32, i32) {
    %c0_i32 = arith.constant 0 : i32
    return %arg0, %arg2 : i32, i32
  }
  func.func @transform_1(%arg0: i32, %arg1: i32, %arg2: i32) -> (i32, i32) {
    %c0_i32 = arith.constant 0 : i32
    return %arg2, %arg1 : i32, i32
  }
  func.func @transform_2(%arg0: i32, %arg1: i32, %arg2: i32) -> (i32, i32) {
    %c0_i32 = arith.constant 0 : i32
    return %arg0, %arg1 : i32, i32
  }
  func.func @transform_3(%arg0: i32, %arg1: i32, %arg2: i32) -> (i32, i32, i32) {
    %c0_i32 = arith.constant 0 : i32
    %c0_i32_0 = arith.constant 0 : i32
    return %arg0, %c0_i32, %arg1 : i32, i32, i32
  }
  func.func @transform_4(%arg0: i32, %arg1: i32, %arg2: i32) -> (i32, i32, i32) {
    %c0_i32 = arith.constant 0 : i32
    %c0_i32_0 = arith.constant 0 : i32
    return %arg0, %c0_i32, %arg1 : i32, i32, i32
  }
}

</mosaic_0001>

<llo_original>
// kernel: _lambda_.99
$region0: #{_lambda_.99}
  #allocation0 [shape = 'u32[]', space=smem, size = 0x4, offset = 0x4, fixed_abs, tag = 'smem constant byte address 0x4 - core index']
  #allocation1 [shape = 'u32[72,128]{1,0:T(1,128)}', space=vmem, size = 0x9000, scoped, tag = 'internal scratch']
  %s0 = inlined_call_operand.vmem [shape: f32[128,8], index: 0, kind: input, shape index: {}]
  %s1 = inlined_call_operand.vmem [shape: f32[1,8], index: 1, kind: input, shape index: {}]
  %s2 = inlined_call_operand.vmem [shape: f32[1,8], index: 2, kind: input, shape index: {}]
  %s3 = inlined_call_operand.vmem [shape: bf16[128,8], index: 3, kind: output, shape index: {}]
  %s4 = sld [smem:[#allocation0]]
  $region22: #{_lambda_.99} parent=0
    _
  %s6 = ssub.s32 1, %s4
  %s7 = scalar_select 0, %s6, %s4
  // Predicated region
  $region2: #{_lambda_.99} parent=0 // pred_check
    _
  $region3: #{_lambda_.99} parent=0 // pred_check_branch
    %9 = sbr.rel (0) target = $region5
  $region4: #{_lambda_.99} parent=0 // pred_region
    _
  $region5: #{_lambda_.99} parent=0 // pred_fallthru
    _
  // Predicated region
  $region6: #{_lambda_.99} parent=0 // pred_check
    _
  $region7: #{_lambda_.99} parent=0 // pred_check_branch
    %11 = sbr.rel (0) target = $region9
  $region8: #{_lambda_.99} parent=0 // pred_region
    _
  $region9: #{_lambda_.99} parent=0 // pred_fallthru
    _
  // Predicated region
  $region10: #{_lambda_.99} parent=0 // pred_check
    _
  $region11: #{_lambda_.99} parent=0 // pred_check_branch
    %13 = sbr.rel (0) target = $region13
  $region12: #{_lambda_.99} parent=0 // pred_region
    _
  $region13: #{_lambda_.99} parent=0 // pred_fallthru
    _
  %v14 = vld [vmem:[%s0] sm:$0xff]
  %v15 = vld [vmem:[%s0 + $0x8] sm:$0xff]
  %v16 = vld [vmem:[%s0 + $0x10] sm:$0xff]
  %v17 = vld [vmem:[%s0 + $0x18] sm:$0xff]
  %v18 = vld [vmem:[%s0 + $0x20] sm:$0xff]
  %v19 = vld [vmem:[%s0 + $0x28] sm:$0xff]
  %v20 = vld [vmem:[%s0 + $0x30] sm:$0xff]
  %v21 = vld [vmem:[%s0 + $0x38] sm:$0xff]
  %v22 = vld [vmem:[%s0 + $0x40] sm:$0xff]
  %v23 = vld [vmem:[%s0 + $0x48] sm:$0xff]
  %v24 = vld [vmem:[%s0 + $0x50] sm:$0xff]
  %v25 = vld [vmem:[%s0 + $0x58] sm:$0xff]
  %v26 = vld [vmem:[%s0 + $0x60] sm:$0xff]
  %v27 = vld [vmem:[%s0 + $0x68] sm:$0xff]
  %v28 = vld [vmem:[%s0 + $0x70] sm:$0xff]
  %v29 = vld [vmem:[%s0 + $0x78] sm:$0xff]
  %v30 = vld [vmem:[%s1] sm:$0x1]
  %v32 = vperm.slane %v30, 0
  %v34 = vmul.f32 %v14, %v32
  %v35 = vmul.f32 %v15, %v32
  %v36 = vmul.f32 %v16, %v32
  %v37 = vmul.f32 %v17, %v32
  %v38 = vmul.f32 %v18, %v32
  %v39 = vmul.f32 %v19, %v32
  %v40 = vmul.f32 %v20, %v32
  %v41 = vmul.f32 %v21, %v32
  %v42 = vmul.f32 %v22, %v32
  %v43 = vmul.f32 %v23, %v32
  %v44 = vmul.f32 %v24, %v32
  %v45 = vmul.f32 %v25, %v32
  %v46 = vmul.f32 %v26, %v32
  %v47 = vmul.f32 %v27, %v32
  %v48 = vmul.f32 %v28, %v32
  %v49 = vmul.f32 %v29, %v32
  %v50 = vld [vmem:[%s2] sm:$0x1]
  %v52 = vperm.slane %v50, 0
  %v54 = vadd.f32 %v34, %v52
  %v55 = vadd.f32 %v35, %v52
  %v56 = vadd.f32 %v36, %v52
  %v57 = vadd.f32 %v37, %v52
  %v58 = vadd.f32 %v38, %v52
  %v59 = vadd.f32 %v39, %v52
  %v60 = vadd.f32 %v40, %v52
  %v61 = vadd.f32 %v41, %v52
  %v62 = vadd.f32 %v42, %v52
  %v63 = vadd.f32 %v43, %v52
  %v64 = vadd.f32 %v44, %v52
  %v65 = vadd.f32 %v45, %v52
  %v66 = vadd.f32 %v46, %v52
  %v67 = vadd.f32 %v47, %v52
  %v68 = vadd.f32 %v48, %v52
  %v69 = vadd.f32 %v49, %v52
  %v70 = vmax.f32 %v54, 0.0
  %v71 = vmax.f32 %v55, 0.0
  %v72 = vmax.f32 %v56, 0.0
  %v73 = vmax.f32 %v57, 0.0
  %v74 = vmax.f32 %v58, 0.0
  %v75 = vmax.f32 %v59, 0.0
  %v76 = vmax.f32 %v60, 0.0
  %v77 = vmax.f32 %v61, 0.0
  %v78 = vmax.f32 %v62, 0.0
  %v79 = vmax.f32 %v63, 0.0
  %v80 = vmax.f32 %v64, 0.0
  %v81 = vmax.f32 %v65, 0.0
  %v82 = vmax.f32 %v66, 0.0
  %v83 = vmax.f32 %v67, 0.0
  %v84 = vmax.f32 %v68, 0.0
  %v85 = vmax.f32 %v69, 0.0
  %v86 = vpack.c.bf16 %v70, %v70
  %v87 = vpack.c.bf16 %v71, %v71
  %v88 = vpack.c.bf16 %v72, %v72
  %v89 = vpack.c.bf16 %v73, %v73
  %v90 = vpack.c.bf16 %v74, %v74
  %v91 = vpack.c.bf16 %v75, %v75
  %v92 = vpack.c.bf16 %v76, %v76
  %v93 = vpack.c.bf16 %v77, %v77
  %v94 = vpack.c.bf16 %v78, %v78
  %v95 = vpack.c.bf16 %v79, %v79
  %v96 = vpack.c.bf16 %v80, %v80
  %v97 = vpack.c.bf16 %v81, %v81
  %v98 = vpack.c.bf16 %v82, %v82
  %v99 = vpack.c.bf16 %v83, %v83
  %v100 = vpack.c.bf16 %v84, %v84
  %v101 = vpack.c.bf16 %v85, %v85
  %vm102 = vcmask 60416
  %103 = vst.msk [vmem:[%s3] sm:$0xf] %vm102, %v86
  %104 = vst.msk [vmem:[%s3 + $0x4] sm:$0xf] %vm102, %v87
  %105 = vst.msk [vmem:[%s3 + $0x8] sm:$0xf] %vm102, %v88
  %106 = vst.msk [vmem:[%s3 + $0xc] sm:$0xf] %vm102, %v89
  %107 = vst.msk [vmem:[%s3 + $0x10] sm:$0xf] %vm102, %v90
  %108 = vst.msk [vmem:[%s3 + $0x14] sm:$0xf] %vm102, %v91
  %109 = vst.msk [vmem:[%s3 + $0x18] sm:$0xf] %vm102, %v92
  %110 = vst.msk [vmem:[%s3 + $0x1c] sm:$0xf] %vm102, %v93
  %111 = vst.msk [vmem:[%s3 + $0x20] sm:$0xf] %vm102, %v94
  %112 = vst.msk [vmem:[%s3 + $0x24] sm:$0xf] %vm102, %v95
  %113 = vst.msk [vmem:[%s3 + $0x28] sm:$0xf] %vm102, %v96
  %114 = vst.msk [vmem:[%s3 + $0x2c] sm:$0xf] %vm102, %v97
  %115 = vst.msk [vmem:[%s3 + $0x30] sm:$0xf] %vm102, %v98
  %116 = vst.msk [vmem:[%s3 + $0x34] sm:$0xf] %vm102, %v99
  %117 = vst.msk [vmem:[%s3 + $0x38] sm:$0xf] %vm102, %v100
  %118 = vst.msk [vmem:[%s3 + $0x3c] sm:$0xf] %vm102, %v101
  // Predicated region
  $region14: #{_lambda_.99} parent=0 // pred_check
    _
  $region15: #{_lambda_.99} parent=0 // pred_check_branch
    %120 = sbr.rel (0) target = $region17
  $region16: #{_lambda_.99} parent=0 // pred_region
    _
  $region17: #{_lambda_.99} parent=0 // pred_fallthru
    _
  // Predicated region
  $region18: #{_lambda_.99} parent=0 // pred_check
    _
  $region19: #{_lambda_.99} parent=0 // pred_check_branch
    %122 = sbr.rel (0) target = $region21
  $region20: #{_lambda_.99} parent=0 // pred_region
    _
  $region21: #{_lambda_.99} parent=0 // pred_fallthru
    _

// kernel: _lambda_.98
$region0: #{_lambda_.98}
  #allocation0 [shape = 'u32[]', space=smem, size = 0x4, offset = 0x4, fixed_abs, tag = 'smem constant byte address 0x4 - core index']
  #allocation1 [shape = 'u32[72,128]{1,0:T(1,128)}', space=vmem, size = 0x9000, scoped, tag = 'internal scratch']
  %s0 = inlined_call_operand.vmem [shape: bf16[128,196], index: 0, kind: input, shape index: {}]
  %s1 = inlined_call_operand.vmem [shape: bf16[196,8], index: 1, kind: input, shape index: {}]
  %s2 = inlined_call_operand.vmem [shape: f32[128,8], index: 2, kind: output, shape index: {0}]
  %s3 = inlined_call_operand.vmem [shape: f32[1,1,8], index: 3, kind: output, shape index: {1}]
  %s4 = inlined_call_operand.vmem [shape: f32[1,1,8], index: 4, kind: output, shape index: {2}]
  %5 = xla_tuple %s2, %s3, %s4
  %s6 = sld [smem:[#allocation0]]
  $region34: #{_lambda_.98} parent=0
    _
  %s8 = ssub.s32 1, %s6
  %s9 = scalar_select 0, %s8, %s6
  // Predicated region
  $region2: #{_lambda_.98} parent=0 // pred_check
    _
  $region3: #{_lambda_.98} parent=0 // pred_check_branch
    %11 = sbr.rel (0) target = $region5
  $region4: #{_lambda_.98} parent=0 // pred_region
    _
  $region5: #{_lambda_.98} parent=0 // pred_fallthru
    _
  // Predicated region
  $region6: #{_lambda_.98} parent=0 // pred_check
    _
  $region7: #{_lambda_.98} parent=0 // pred_check_branch
    %13 = sbr.rel (0) target = $region9
  $region8: #{_lambda_.98} parent=0 // pred_region
    _
  $region9: #{_lambda_.98} parent=0 // pred_fallthru
    _
  %v15 = vld [vmem:[%s0] sm:$0xff]
  %v16 = vld [vmem:[%s0 + $0x8] sm:$0xff]
  %v17 = vld [vmem:[%s0 + $0x10] sm:$0xff]
  %v18 = vld [vmem:[%s0 + $0x18] sm:$0xff]
  %v19 = vld [vmem:[%s0 + $0x20] sm:$0xff]
  %v20 = vld [vmem:[%s0 + $0x28] sm:$0xff]
  %v21 = vld [vmem:[%s0 + $0x30] sm:$0xff]
  %v22 = vld [vmem:[%s0 + $0x38] sm:$0xff]
  %v23 = vld [vmem:[%s0 + $0x40] sm:$0xff]
  %v24 = vld [vmem:[%s0 + $0x48] sm:$0xff]
  %v25 = vld [vmem:[%s0 + $0x50] sm:$0xff]
  %v26 = vld [vmem:[%s0 + $0x58] sm:$0xff]
  %v27 = vld [vmem:[%s0 + $0x60] sm:$0xff]
  %v28 = vld [vmem:[%s0 + $0x68] sm:$0xff]
  %v29 = vld [vmem:[%s0 + $0x70] sm:$0xff]
  %v30 = vld [vmem:[%s0 + $0x78] sm:$0xff]
  %v31 = vld [vmem:[%s1] sm:$0xf]
  %v32 = vld [vmem:[%s1 + $0x4] sm:$0xf]
  %v33 = vld [vmem:[%s1 + $0x8] sm:$0xf]
  %v34 = vld [vmem:[%s1 + $0xc] sm:$0xf]
  %v35 = vld [vmem:[%s1 + $0x10] sm:$0xf]
  %v36 = vld [vmem:[%s1 + $0x14] sm:$0xf]
  %v37 = vld [vmem:[%s1 + $0x18] sm:$0xf]
  %v38 = vld [vmem:[%s1 + $0x1c] sm:$0xf]
  %v39 = vld [vmem:[%s1 + $0x20] sm:$0xf]
  %v40 = vld [vmem:[%s1 + $0x24] sm:$0xf]
  %v41 = vld [vmem:[%s1 + $0x28] sm:$0xf]
  %v42 = vld [vmem:[%s1 + $0x2c] sm:$0xf]
  %v43 = vld [vmem:[%s1 + $0x30] sm:$0xf]
  %v44 = vld [vmem:[%s1 + $0x34] sm:$0xf]
  %v45 = vld [vmem:[%s1 + $0x38] sm:$0xf]
  %v46 = vld [vmem:[%s1 + $0x3c] sm:$0xf]
  %v47 = vld [vmem:[%s1 + $0x40] sm:$0xf]
  %v48 = vld [vmem:[%s1 + $0x44] sm:$0xf]
  %v49 = vld [vmem:[%s1 + $0x48] sm:$0xf]
  %v50 = vld [vmem:[%s1 + $0x4c] sm:$0xf]
  %v51 = vld [vmem:[%s1 + $0x50] sm:$0xf]
  %v52 = vld [vmem:[%s1 + $0x54] sm:$0xf]
  %v53 = vld [vmem:[%s1 + $0x58] sm:$0xf]
  %v54 = vld [vmem:[%s1 + $0x5c] sm:$0xf]
  %v55 = vld [vmem:[%s1 + $0x60] sm:$0x3]
  %v72 = vunpack.c.l.b16 %v15
  %v73 = vunpack.c.h.b16 %v15
  %v74 = vunpack.c.l.b16 %v16
  %v75 = vunpack.c.h.b16 %v16
  %v76 = vunpack.c.l.b16 %v17
  %v77 = vunpack.c.h.b16 %v17
  %v78 = vunpack.c.l.b16 %v18
  %v79 = vunpack.c.h.b16 %v18
  %v80 = vunpack.c.l.b16 %v19
  %v81 = vunpack.c.h.b16 %v19
  %v82 = vunpack.c.l.b16 %v20
  %v83 = vunpack.c.h.b16 %v20
  %v84 = vunpack.c.l.b16 %v21
  %v85 = vunpack.c.h.b16 %v21
  %v86 = vunpack.c.l.b16 %v22
  %v87 = vunpack.c.h.b16 %v22
  %v88 = vunpack.c.l.b16 %v23
  %v89 = vunpack.c.h.b16 %v23
  %v90 = vunpack.c.l.b16 %v24
  %v91 = vunpack.c.h.b16 %v24
  %v92 = vunpack.c.l.b16 %v25
  %v93 = vunpack.c.h.b16 %v25
  %v94 = vunpack.c.l.b16 %v26
  %v95 = vunpack.c.h.b16 %v26
  %v96 = vunpack.c.l.b16 %v27
  %v97 = vunpack.c.h.b16 %v27
  %v98 = vunpack.c.l.b16 %v28
  %v99 = vunpack.c.h.b16 %v28
  %v100 = vunpack.c.l.b16 %v29
  %v101 = vunpack.c.h.b16 %v29
  %v102 = vunpack.c.l.b16 %v30
  %v103 = vunpack.c.h.b16 %v30
  %v104 = vpack.c.b16 %v74, %v72
  %v105 = vpack.c.b16 %v75, %v73
  %v106 = vpack.c.b16 %v78, %v76
  %v107 = vpack.c.b16 %v79, %v77
  %v108 = vpack.c.b16 %v82, %v80
  %v109 = vpack.c.b16 %v83, %v81
  %v110 = vpack.c.b16 %v86, %v84
  %v111 = vpack.c.b16 %v87, %v85
  %v112 = vpack.c.b16 %v90, %v88
  %v113 = vpack.c.b16 %v91, %v89
  %v114 = vpack.c.b16 %v94, %v92
  %v115 = vpack.c.b16 %v95, %v93
  %v116 = vpack.c.b16 %v98, %v96
  %v117 = vpack.c.b16 %v99, %v97
  %v118 = vpack.c.b16 %v102, %v100
  %v119 = vpack.c.b16 %v103, %v101
  %v153 = vunpack.c.l.b16 %v31
  %v154 = vunpack.c.l.b16 %v32
  %v155 = vunpack.c.l.b16 %v33
  %v156 = vunpack.c.l.b16 %v34
  %v157 = vunpack.c.l.b16 %v35
  %v158 = vunpack.c.l.b16 %v36
  %v159 = vunpack.c.l.b16 %v37
  %v160 = vunpack.c.l.b16 %v38
  %v161 = vunpack.c.l.b16 %v39
  %v162 = vunpack.c.l.b16 %v40
  %v163 = vunpack.c.l.b16 %v41
  %v164 = vunpack.c.l.b16 %v42
  %v165 = vunpack.c.l.b16 %v43
  %v166 = vunpack.c.l.b16 %v44
  %v167 = vunpack.c.l.b16 %v45
  %v168 = vunpack.c.l.b16 %v46
  %v169 = vunpack.c.l.b16 %v47
  %v170 = vunpack.c.l.b16 %v48
  %v171 = vunpack.c.l.b16 %v49
  %v172 = vunpack.c.l.b16 %v50
  %v173 = vunpack.c.l.b16 %v51
  %v174 = vunpack.c.l.b16 %v52
  %v175 = vunpack.c.l.b16 %v53
  %v176 = vunpack.c.l.b16 %v54
  %v177 = vunpack.c.l.b16 %v55
  %v178 = vpack.c.b16 %v154, %v153
  %v179 = vpack.c.b16 %v156, %v155
  %v180 = vpack.c.b16 %v158, %v157
  %v181 = vpack.c.b16 %v160, %v159
  %v182 = vpack.c.b16 %v162, %v161
  %v183 = vpack.c.b16 %v164, %v163
  %v184 = vpack.c.b16 %v166, %v165
  %v185 = vpack.c.b16 %v168, %v167
  %v186 = vpack.c.b16 %v170, %v169
  %v187 = vpack.c.b16 %v172, %v171
  %v188 = vpack.c.b16 %v174, %v173
  %v189 = vpack.c.b16 %v176, %v175
  %v190 = vpack.c.b16 %v177, %v177
  %vm203 = vcmask 556032
  %v205 = vsel %vm203, %v105, 0
  %v208 = vsel %vm203, %v107, 0
  %v211 = vsel %vm203, %v109, 0
  %v214 = vsel %vm203, %v111, 0
  %v217 = vsel %vm203, %v113, 0
  %v220 = vsel %vm203, %v115, 0
  %v223 = vsel %vm203, %v117, 0
  %v226 = vsel %vm203, %v119, 0
  %vm228 = vcmask 1041408
  %v230 = vsel %vm228, %v190, 0
  %232 = vmatpush.bf16.msra.mxu0 %v185
  %233 = vmatpush.bf16.msra.mxu0 %v184
  %234 = vmatpush.bf16.msra.mxu0 %v183
  %235 = vmatpush.bf16.msra.mxu0 %v182
  %236 = vmatpush.bf16.msra.mxu0 %v181
  %237 = vmatpush.bf16.msra.mxu0 %v180
  %238 = vmatpush.bf16.msra.mxu0 %v179
  %239 = vmatpush.bf16.msra.mxu0 %v178
  %240 = vmatmul.bf16.gmra.mxu0 %v104
  %v241 = vpop.f32.mrf.mxu0
  %v242 = vadd.f32 0.0, %v241
  %v243 = vpop.f32.mrf.mxu0
  %v244 = vadd.f32 0.0, %v243
  %245 = vmatmul.bf16.gmra.mxu0 %v106
  %v246 = vpop.f32.mrf.mxu0
  %v247 = vadd.f32 0.0, %v246
  %v248 = vpop.f32.mrf.mxu0
  %v249 = vadd.f32 0.0, %v248
  %250 = vmatmul.bf16.gmra.mxu0 %v108
  %v251 = vpop.f32.mrf.mxu0
  %v252 = vadd.f32 0.0, %v251
  %v253 = vpop.f32.mrf.mxu0
  %v254 = vadd.f32 0.0, %v253
  %255 = vmatmul.bf16.gmra.mxu0 %v110
  %v256 = vpop.f32.mrf.mxu0
  %v257 = vadd.f32 0.0, %v256
  %v258 = vpop.f32.mrf.mxu0
  %v259 = vadd.f32 0.0, %v258
  %260 = vmatmul.bf16.gmra.mxu0 %v112
  %v261 = vpop.f32.mrf.mxu0
  %v262 = vadd.f32 0.0, %v261
  %v263 = vpop.f32.mrf.mxu0
  %v264 = vadd.f32 0.0, %v263
  %265 = vmatmul.bf16.gmra.mxu0 %v114
  %v266 = vpop.f32.mrf.mxu0
  %v267 = vadd.f32 0.0, %v266
  %v268 = vpop.f32.mrf.mxu0
  %v269 = vadd.f32 0.0, %v268
  %270 = vmatmul.bf16.gmra.mxu0 %v116
  %v271 = vpop.f32.mrf.mxu0
  %v272 = vadd.f32 0.0, %v271
  %v273 = vpop.f32.mrf.mxu0
  %v274 = vadd.f32 0.0, %v273
  %275 = vmatmul.bf16.gmra.mxu0 %v118
  %v276 = vpop.f32.mrf.mxu0
  %v277 = vadd.f32 0.0, %v276
  %v278 = vpop.f32.mrf.mxu0
  %v279 = vadd.f32 0.0, %v278
  %280 = vdwg.mxu0
  %281 = vmatpush.bf16.msra.mxu0 0
  %282 = vmatpush.bf16.msra.mxu0 0
  %283 = vmatpush.bf16.msra.mxu0 0
  %284 = vmatpush.bf16.msra.mxu0 %v230
  %285 = vmatpush.bf16.msra.mxu0 %v189
  %286 = vmatpush.bf16.msra.mxu0 %v188
  %287 = vmatpush.bf16.msra.mxu0 %v187
  %288 = vmatpush.bf16.msra.mxu0 %v186
  %289 = vmatmul.bf16.gmra.mxu0 %v205
  %v290 = vpop.f32.mrf.mxu0
  %v291 = vadd.f32 %v242, %v290
  %v292 = vpop.f32.mrf.mxu0
  %v293 = vadd.f32 %v244, %v292
  %294 = vmatmul.bf16.gmra.mxu0 %v208
  %v295 = vpop.f32.mrf.mxu0
  %v296 = vadd.f32 %v247, %v295
  %v297 = vpop.f32.mrf.mxu0
  %v298 = vadd.f32 %v249, %v297
  %299 = vmatmul.bf16.gmra.mxu0 %v211
  %v300 = vpop.f32.mrf.mxu0
  %v301 = vadd.f32 %v252, %v300
  %v302 = vpop.f32.mrf.mxu0
  %v303 = vadd.f32 %v254, %v302
  %304 = vmatmul.bf16.gmra.mxu0 %v214
  %v305 = vpop.f32.mrf.mxu0
  %v306 = vadd.f32 %v257, %v305
  %v307 = vpop.f32.mrf.mxu0
  %v308 = vadd.f32 %v259, %v307
  %309 = vmatmul.bf16.gmra.mxu0 %v217
  %v310 = vpop.f32.mrf.mxu0
  %v311 = vadd.f32 %v262, %v310
  %v312 = vpop.f32.mrf.mxu0
  %v313 = vadd.f32 %v264, %v312
  %314 = vmatmul.bf16.gmra.mxu0 %v220
  %v315 = vpop.f32.mrf.mxu0
  %v316 = vadd.f32 %v267, %v315
  %v317 = vpop.f32.mrf.mxu0
  %v318 = vadd.f32 %v269, %v317
  %319 = vmatmul.bf16.gmra.mxu0 %v223
  %v320 = vpop.f32.mrf.mxu0
  %v321 = vadd.f32 %v272, %v320
  %v322 = vpop.f32.mrf.mxu0
  %v323 = vadd.f32 %v274, %v322
  %324 = vmatmul.bf16.gmra.mxu0 %v226
  %v325 = vpop.f32.mrf.mxu0
  %v326 = vadd.f32 %v277, %v325
  %v327 = vpop.f32.mrf.mxu0
  %v328 = vadd.f32 %v279, %v327
  %329 = vdwg.mxu0
  %vm330 = vcmask 64512
  %331 = vst.msk [vmem:[%s2] sm:$0xff] %vm330, %v291
  %332 = vst.msk [vmem:[%s2 + $0x8] sm:$0xff] %vm330, %v293
  %333 = vst.msk [vmem:[%s2 + $0x10] sm:$0xff] %vm330, %v296
  %334 = vst.msk [vmem:[%s2 + $0x18] sm:$0xff] %vm330, %v298
  %335 = vst.msk [vmem:[%s2 + $0x20] sm:$0xff] %vm330, %v301
  %336 = vst.msk [vmem:[%s2 + $0x28] sm:$0xff] %vm330, %v303
  %337 = vst.msk [vmem:[%s2 + $0x30] sm:$0xff] %vm330, %v306
  %338 = vst.msk [vmem:[%s2 + $0x38] sm:$0xff] %vm330, %v308
  %339 = vst.msk [vmem:[%s2 + $0x40] sm:$0xff] %vm330, %v311
  %340 = vst.msk [vmem:[%s2 + $0x48] sm:$0xff] %vm330, %v313
  %341 = vst.msk [vmem:[%s2 + $0x50] sm:$0xff] %vm330, %v316
  %342 = vst.msk [vmem:[%s2 + $0x58] sm:$0xff] %vm330, %v318
  %343 = vst.msk [vmem:[%s2 + $0x60] sm:$0xff] %vm330, %v321
  %344 = vst.msk [vmem:[%s2 + $0x68] sm:$0xff] %vm330, %v323
  %345 = vst.msk [vmem:[%s2 + $0x70] sm:$0xff] %vm330, %v326
  %346 = vst.msk [vmem:[%s2 + $0x78] sm:$0xff] %vm330, %v328
  %v347 = vld [vmem:[%s2] sm:$0xff]
  %v348 = vld [vmem:[%s2 + $0x8] sm:$0xff]
  %v349 = vld [vmem:[%s2 + $0x10] sm:$0xff]
  %v350 = vld [vmem:[%s2 + $0x18] sm:$0xff]
  %v351 = vld [vmem:[%s2 + $0x20] sm:$0xff]
  %v352 = vld [vmem:[%s2 + $0x28] sm:$0xff]
  %v353 = vld [vmem:[%s2 + $0x30] sm:$0xff]
  %v354 = vld [vmem:[%s2 + $0x38] sm:$0xff]
  %v355 = vld [vmem:[%s2 + $0x40] sm:$0xff]
  %v356 = vld [vmem:[%s2 + $0x48] sm:$0xff]
  %v357 = vld [vmem:[%s2 + $0x50] sm:$0xff]
  %v358 = vld [vmem:[%s2 + $0x58] sm:$0xff]
  %v359 = vld [vmem:[%s2 + $0x60] sm:$0xff]
  %v360 = vld [vmem:[%s2 + $0x68] sm:$0xff]
  %v361 = vld [vmem:[%s2 + $0x70] sm:$0xff]
  %v362 = vld [vmem:[%s2 + $0x78] sm:$0xff]
  %v363 = vsel %vm330, %v347, 0.0
  %v364 = vsel %vm330, %v348, 0.0
  %v365 = vadd.f32 %v363, %v364
  %v366 = vsel %vm330, %v349, 0.0
  %v367 = vadd.f32 %v365, %v366
  %v368 = vsel %vm330, %v350, 0.0
  %v369 = vadd.f32 %v367, %v368
  %v370 = vsel %vm330, %v351, 0.0
  %v371 = vadd.f32 %v369, %v370
  %v372 = vsel %vm330, %v352, 0.0
  %v373 = vadd.f32 %v371, %v372
  %v374 = vsel %vm330, %v353, 0.0
  %v375 = vadd.f32 %v373, %v374
  %v376 = vsel %vm330, %v354, 0.0
  %v377 = vadd.f32 %v375, %v376
  %v378 = vsel %vm330, %v355, 0.0
  %v379 = vadd.f32 %v377, %v378
  %v380 = vsel %vm330, %v356, 0.0
  %v381 = vadd.f32 %v379, %v380
  %v382 = vsel %vm330, %v357, 0.0
  %v383 = vadd.f32 %v381, %v382
  %v384 = vsel %vm330, %v358, 0.0
  %v385 = vadd.f32 %v383, %v384
  %v386 = vsel %vm330, %v359, 0.0
  %v387 = vadd.f32 %v385, %v386
  %v388 = vsel %vm330, %v360, 0.0
  %v389 = vadd.f32 %v387, %v388
  %v390 = vsel %vm330, %v361, 0.0
  %v391 = vadd.f32 %v389, %v390
  %v392 = vsel %vm330, %v362, 0.0
  %v393 = vadd.f32 %v391, %v392
  %v394 = vrot.slane %v393, 4
  %v395 = vadd.f32 %v393, %v394
  %v396 = vrot.slane %v395, 2
  %v397 = vadd.f32 %v395, %v396
  %v398 = vrot.slane %v397, 1
  %v399 = vadd.f32 %v397, %v398
  %vm400 = vcmask 57344
  %401 = vst.msk [vmem:[%s3] sm:$0x1] %vm400, %v399
  %v402 = vmul.f32 %v347, %v347
  %v403 = vmul.f32 %v348, %v348
  %v404 = vmul.f32 %v349, %v349
  %v405 = vmul.f32 %v350, %v350
  %v406 = vmul.f32 %v351, %v351
  %v407 = vmul.f32 %v352, %v352
  %v408 = vmul.f32 %v353, %v353
  %v409 = vmul.f32 %v354, %v354
  %v410 = vmul.f32 %v355, %v355
  %v411 = vmul.f32 %v356, %v356
  %v412 = vmul.f32 %v357, %v357
  %v413 = vmul.f32 %v358, %v358
  %v414 = vmul.f32 %v359, %v359
  %v415 = vmul.f32 %v360, %v360
  %v416 = vmul.f32 %v361, %v361
  %v417 = vmul.f32 %v362, %v362
  %v418 = vsel %vm330, %v402, 0.0
  %v419 = vsel %vm330, %v403, 0.0
  %v420 = vadd.f32 %v418, %v419
  %v421 = vsel %vm330, %v404, 0.0
  %v422 = vadd.f32 %v420, %v421
  %v423 = vsel %vm330, %v405, 0.0
  %v424 = vadd.f32 %v422, %v423
  %v425 = vsel %vm330, %v406, 0.0
  %v426 = vadd.f32 %v424, %v425
  %v427 = vsel %vm330, %v407, 0.0
  %v428 = vadd.f32 %v426, %v427
  %v429 = vsel %vm330, %v408, 0.0
  %v430 = vadd.f32 %v428, %v429
  %v431 = vsel %vm330, %v409, 0.0
  %v432 = vadd.f32 %v430, %v431
  %v433 = vsel %vm330, %v410, 0.0
  %v434 = vadd.f32 %v432, %v433
  %v435 = vsel %vm330, %v411, 0.0
  %v436 = vadd.f32 %v434, %v435
  %v437 = vsel %vm330, %v412, 0.0
  %v438 = vadd.f32 %v436, %v437
  %v439 = vsel %vm330, %v413, 0.0
  %v440 = vadd.f32 %v438, %v439
  %v441 = vsel %vm330, %v414, 0.0
  %v442 = vadd.f32 %v440, %v441
  %v443 = vsel %vm330, %v415, 0.0
  %v444 = vadd.f32 %v442, %v443
  %v445 = vsel %vm330, %v416, 0.0
  %v446 = vadd.f32 %v444, %v445
  %v447 = vsel %vm330, %v417, 0.0
  %v448 = vadd.f32 %v446, %v447
  %v449 = vrot.slane %v448, 4
  %v450 = vadd.f32 %v448, %v449
  %v451 = vrot.slane %v450, 2
  %v452 = vadd.f32 %v450, %v451
  %v453 = vrot.slane %v452, 1
  %v454 = vadd.f32 %v452, %v453
  %455 = vst.msk [vmem:[%s4] sm:$0x1] %vm400, %v454
  // Predicated region
  $region10: #{_lambda_.98} parent=0 // pred_check
    _
  $region11: #{_lambda_.98} parent=0 // pred_check_branch
    %457 = sbr.rel (0) target = $region13
  $region12: #{_lambda_.98} parent=0 // pred_region
    _
  $region13: #{_lambda_.98} parent=0 // pred_fallthru
    _
  // Predicated region
  $region14: #{_lambda_.98} parent=0 // pred_check
    _
  $region15: #{_lambda_.98} parent=0 // pred_check_branch
    %459 = sbr.rel (0) target = $region17
  $region16: #{_lambda_.98} parent=0 // pred_region
    _
  $region17: #{_lambda_.98} parent=0 // pred_fallthru
    _
  // Predicated region
  $region18: #{_lambda_.98} parent=0 // pred_check
    _
  $region19: #{_lambda_.98} parent=0 // pred_check_branch
    %461 = sbr.rel (0) target = $region21
  $region20: #{_lambda_.98} parent=0 // pred_region
    _
  $region21: #{_lambda_.98} parent=0 // pred_fallthru
    _
  // Predicated region
  $region22: #{_lambda_.98} parent=0 // pred_check
    _
  $region23: #{_lambda_.98} parent=0 // pred_check_branch
    %463 = sbr.rel (0) target = $region25
  $region24: #{_lambda_.98} parent=0 // pred_region
    _
  $region25: #{_lambda_.98} parent=0 // pred_fallthru
    _
  // Predicated region
  $region26: #{_lambda_.98} parent=0 // pred_check
    _
  $region27: #{_lambda_.98} parent=0 // pred_check_branch
    %465 = sbr.rel (0) target = $region29
  $region28: #{_lambda_.98} parent=0 // pred_region
    _
  $region29: #{_lambda_.98} parent=0 // pred_fallthru
    _
  // Predicated region
  $region30: #{_lambda_.98} parent=0 // pred_check
    _
  $region31: #{_lambda_.98} parent=0 // pred_check_branch
    %467 = sbr.rel (0) target = $region33
  $region32: #{_lambda_.98} parent=0 // pred_region
    _
  $region33: #{_lambda_.98} parent=0 // pred_fallthru
    _

// kernel: _lambda_.100
$region0: #{_lambda_.100}
  #allocation0 [shape = 'u32[]', space=smem, size = 0x4, offset = 0x4, fixed_abs, tag = 'smem constant byte address 0x4 - core index']
  #allocation1 [shape = 'u32[72,128]{1,0:T(1,128)}', space=vmem, size = 0x9000, scoped, tag = 'internal scratch']
  %s0 = inlined_call_operand.vmem [shape: bf16[32,8], index: 0, kind: input, shape index: {}]
  %s1 = inlined_call_operand.vmem [shape: bf16[8,8], index: 1, kind: input, shape index: {}]
  %s2 = inlined_call_operand.vmem [shape: f32[32,8], index: 2, kind: output, shape index: {0}]
  %s3 = inlined_call_operand.vmem [shape: f32[1,1,8], index: 3, kind: output, shape index: {1}]
  %s4 = inlined_call_operand.vmem [shape: f32[1,1,8], index: 4, kind: output, shape index: {2}]
  %5 = xla_tuple %s2, %s3, %s4
  %s6 = sld [smem:[#allocation0]]
  $region34: #{_lambda_.100} parent=0
    _
  %s8 = ssub.s32 1, %s6
  %s9 = scalar_select 0, %s8, %s6
  // Predicated region
  $region2: #{_lambda_.100} parent=0 // pred_check
    _
  $region3: #{_lambda_.100} parent=0 // pred_check_branch
    %11 = sbr.rel (0) target = $region5
  $region4: #{_lambda_.100} parent=0 // pred_region
    _
  $region5: #{_lambda_.100} parent=0 // pred_fallthru
    _
  // Predicated region
  $region6: #{_lambda_.100} parent=0 // pred_check
    _
  $region7: #{_lambda_.100} parent=0 // pred_check_branch
    %13 = sbr.rel (0) target = $region9
  $region8: #{_lambda_.100} parent=0 // pred_region
    _
  $region9: #{_lambda_.100} parent=0 // pred_fallthru
    _
  %v15 = vld [vmem:[%s0] sm:$0xf]
  %v16 = vld [vmem:[%s0 + $0x4] sm:$0xf]
  %v17 = vld [vmem:[%s0 + $0x8] sm:$0xf]
  %v18 = vld [vmem:[%s0 + $0xc] sm:$0xf]
  %v19 = vld [vmem:[%s1] sm:$0xf]
  %v24 = vunpack.c.l.b16 %v15
  %v25 = vunpack.c.l.b16 %v16
  %v26 = vunpack.c.l.b16 %v17
  %v27 = vunpack.c.l.b16 %v18
  %v28 = vpack.c.b16 %v25, %v24
  %v29 = vpack.c.b16 %v27, %v26
  %vm30 = vcmask 64512
  %v32 = vsel %vm30, %v28, 0
  %v35 = vsel %vm30, %v29, 0
  %vm37 = vcmask 1043456
  %v39 = vsel %vm37, %v19, 0
  %41 = vmatpush.bf16.msra.mxu0 0
  %42 = vmatpush.bf16.msra.mxu0 0
  %43 = vmatpush.bf16.msra.mxu0 0
  %44 = vmatpush.bf16.msra.mxu0 0
  %45 = vmatpush.bf16.msra.mxu0 0
  %46 = vmatpush.bf16.msra.mxu0 0
  %47 = vmatpush.bf16.msra.mxu0 0
  %48 = vmatpush.bf16.msra.mxu0 %v39
  %49 = vmatmul.bf16.gmra.mxu0 %v32
  %v50 = vpop.f32.mrf.mxu0
  %v51 = vadd.f32 0.0, %v50
  %v52 = vpop.f32.mrf.mxu0
  %v53 = vadd.f32 0.0, %v52
  %54 = vmatmul.bf16.gmra.mxu0 %v35
  %v55 = vpop.f32.mrf.mxu0
  %v56 = vadd.f32 0.0, %v55
  %v57 = vpop.f32.mrf.mxu0
  %v58 = vadd.f32 0.0, %v57
  %59 = vdwg.mxu0
  %60 = vst.msk [vmem:[%s2] sm:$0xff] %vm30, %v51
  %61 = vst.msk [vmem:[%s2 + $0x8] sm:$0xff] %vm30, %v53
  %62 = vst.msk [vmem:[%s2 + $0x10] sm:$0xff] %vm30, %v56
  %63 = vst.msk [vmem:[%s2 + $0x18] sm:$0xff] %vm30, %v58
  %v64 = vld [vmem:[%s2] sm:$0xff]
  %v65 = vld [vmem:[%s2 + $0x8] sm:$0xff]
  %v66 = vld [vmem:[%s2 + $0x10] sm:$0xff]
  %v67 = vld [vmem:[%s2 + $0x18] sm:$0xff]
  %v68 = vsel %vm30, %v64, 0.0
  %v69 = vsel %vm30, %v65, 0.0
  %v70 = vadd.f32 %v68, %v69
  %v71 = vsel %vm30, %v66, 0.0
  %v72 = vadd.f32 %v70, %v71
  %v73 = vsel %vm30, %v67, 0.0
  %v74 = vadd.f32 %v72, %v73
  %v75 = vrot.slane %v74, 4
  %v76 = vadd.f32 %v74, %v75
  %v77 = vrot.slane %v76, 2
  %v78 = vadd.f32 %v76, %v77
  %v79 = vrot.slane %v78, 1
  %v80 = vadd.f32 %v78, %v79
  %vm81 = vcmask 57344
  %82 = vst.msk [vmem:[%s3] sm:$0x1] %vm81, %v80
  %v83 = vmul.f32 %v64, %v64
  %v84 = vmul.f32 %v65, %v65
  %v85 = vmul.f32 %v66, %v66
  %v86 = vmul.f32 %v67, %v67
  %v87 = vsel %vm30, %v83, 0.0
  %v88 = vsel %vm30, %v84, 0.0
  %v89 = vadd.f32 %v87, %v88
  %v90 = vsel %vm30, %v85, 0.0
  %v91 = vadd.f32 %v89, %v90
  %v92 = vsel %vm30, %v86, 0.0
  %v93 = vadd.f32 %v91, %v92
  %v94 = vrot.slane %v93, 4
  %v95 = vadd.f32 %v93, %v94
  %v96 = vrot.slane %v95, 2
  %v97 = vadd.f32 %v95, %v96
  %v98 = vrot.slane %v97, 1
  %v99 = vadd.f32 %v97, %v98
  %100 = vst.msk [vmem:[%s4] sm:$0x1] %vm81, %v99
  // Predicated region
  $region10: #{_lambda_.100} parent=0 // pred_check
    _
  $region11: #{_lambda_.100} parent=0 // pred_check_branch
    %102 = sbr.rel (0) target = $region13
  $region12: #{_lambda_.100} parent=0 // pred_region
    _
  $region13: #{_lambda_.100} parent=0 // pred_fallthru
    _
  // Predicated region
  $region14: #{_lambda_.100} parent=0 // pred_check
    _
  $region15: #{_lambda_.100} parent=0 // pred_check_branch
    %104 = sbr.rel (0) target = $region17
  $region16: #{_lambda_.100} parent=0 // pred_region
    _
  $region17: #{_lambda_.100} parent=0 // pred_fallthru
    _
  // Predicated region
  $region18: #{_lambda_.100} parent=0 // pred_check
    _
  $region19: #{_lambda_.100} parent=0 // pred_check_branch
    %106 = sbr.rel (0) target = $region21
  $region20: #{_lambda_.100} parent=0 // pred_region
    _
  $region21: #{_lambda_.100} parent=0 // pred_fallthru
    _
  // Predicated region
  $region22: #{_lambda_.100} parent=0 // pred_check
    _
  $region23: #{_lambda_.100} parent=0 // pred_check_branch
    %108 = sbr.rel (0) target = $region25
  $region24: #{_lambda_.100} parent=0 // pred_region
    _
  $region25: #{_lambda_.100} parent=0 // pred_fallthru
    _
  // Predicated region
  $region26: #{_lambda_.100} parent=0 // pred_check
    _
  $region27: #{_lambda_.100} parent=0 // pred_check_branch
    %110 = sbr.rel (0) target = $region29
  $region28: #{_lambda_.100} parent=0 // pred_region
    _
  $region29: #{_lambda_.100} parent=0 // pred_fallthru
    _
  // Predicated region
  $region30: #{_lambda_.100} parent=0 // pred_check
    _
  $region31: #{_lambda_.100} parent=0 // pred_check_branch
    %112 = sbr.rel (0) target = $region33
  $region32: #{_lambda_.100} parent=0 // pred_region
    _
  $region33: #{_lambda_.100} parent=0 // pred_fallthru
    _

// kernel: _lambda_.101
$region0: #{_lambda_.101}
  #allocation0 [shape = 'u32[]', space=smem, size = 0x4, offset = 0x4, fixed_abs, tag = 'smem constant byte address 0x4 - core index']
  #allocation1 [shape = 'u32[72,128]{1,0:T(1,128)}', space=vmem, size = 0x9000, scoped, tag = 'internal scratch']
  %s0 = inlined_call_operand.vmem [shape: f32[32,8], index: 0, kind: input, shape index: {}]
  %s1 = inlined_call_operand.vmem [shape: f32[1,8], index: 1, kind: input, shape index: {}]
  %s2 = inlined_call_operand.vmem [shape: f32[1,8], index: 2, kind: input, shape index: {}]
  %s3 = inlined_call_operand.vmem [shape: bf16[32,8], index: 3, kind: output, shape index: {}]
  %s4 = sld [smem:[#allocation0]]
  $region22: #{_lambda_.101} parent=0
    _
  %s6 = ssub.s32 1, %s4
  %s7 = scalar_select 0, %s6, %s4
  // Predicated region
  $region2: #{_lambda_.101} parent=0 // pred_check
    _
  $region3: #{_lambda_.101} parent=0 // pred_check_branch
    %9 = sbr.rel (0) target = $region5
  $region4: #{_lambda_.101} parent=0 // pred_region
    _
  $region5: #{_lambda_.101} parent=0 // pred_fallthru
    _
  // Predicated region
  $region6: #{_lambda_.101} parent=0 // pred_check
    _
  $region7: #{_lambda_.101} parent=0 // pred_check_branch
    %11 = sbr.rel (0) target = $region9
  $region8: #{_lambda_.101} parent=0 // pred_region
    _
  $region9: #{_lambda_.101} parent=0 // pred_fallthru
    _
  // Predicated region
  $region10: #{_lambda_.101} parent=0 // pred_check
    _
  $region11: #{_lambda_.101} parent=0 // pred_check_branch
    %13 = sbr.rel (0) target = $region13
  $region12: #{_lambda_.101} parent=0 // pred_region
    _
  $region13: #{_lambda_.101} parent=0 // pred_fallthru
    _
  %v14 = vld [vmem:[%s0] sm:$0xff]
  %v15 = vld [vmem:[%s0 + $0x8] sm:$0xff]
  %v16 = vld [vmem:[%s0 + $0x10] sm:$0xff]
  %v17 = vld [vmem:[%s0 + $0x18] sm:$0xff]
  %v18 = vld [vmem:[%s1] sm:$0x1]
  %v20 = vperm.slane %v18, 0
  %v22 = vmul.f32 %v14, %v20
  %v23 = vmul.f32 %v15, %v20
  %v24 = vmul.f32 %v16, %v20
  %v25 = vmul.f32 %v17, %v20
  %v26 = vld [vmem:[%s2] sm:$0x1]
  %v28 = vperm.slane %v26, 0
  %v30 = vadd.f32 %v22, %v28
  %v31 = vadd.f32 %v23, %v28
  %v32 = vadd.f32 %v24, %v28
  %v33 = vadd.f32 %v25, %v28
  %v34 = vmax.f32 %v30, 0.0
  %v35 = vmax.f32 %v31, 0.0
  %v36 = vmax.f32 %v32, 0.0
  %v37 = vmax.f32 %v33, 0.0
  %v38 = vpack.c.bf16 %v34, %v34
  %v39 = vpack.c.bf16 %v35, %v35
  %v40 = vpack.c.bf16 %v36, %v36
  %v41 = vpack.c.bf16 %v37, %v37
  %vm42 = vcmask 60416
  %43 = vst.msk [vmem:[%s3] sm:$0xf] %vm42, %v38
  %44 = vst.msk [vmem:[%s3 + $0x4] sm:$0xf] %vm42, %v39
  %45 = vst.msk [vmem:[%s3 + $0x8] sm:$0xf] %vm42, %v40
  %46 = vst.msk [vmem:[%s3 + $0xc] sm:$0xf] %vm42, %v41
  // Predicated region
  $region14: #{_lambda_.101} parent=0 // pred_check
    _
  $region15: #{_lambda_.101} parent=0 // pred_check_branch
    %48 = sbr.rel (0) target = $region17
  $region16: #{_lambda_.101} parent=0 // pred_region
    _
  $region17: #{_lambda_.101} parent=0 // pred_fallthru
    _
  // Predicated region
  $region18: #{_lambda_.101} parent=0 // pred_check
    _
  $region19: #{_lambda_.101} parent=0 // pred_check_branch
    %50 = sbr.rel (0) target = $region21
  $region20: #{_lambda_.101} parent=0 // pred_region
    _
  $region21: #{_lambda_.101} parent=0 // pred_fallthru
    _

// kernel: _lambda_.102
$region0: #{_lambda_.102}
  #allocation0 [shape = 'u32[]', space=smem, size = 0x4, offset = 0x4, fixed_abs, tag = 'smem constant byte address 0x4 - core index']
  #allocation1 [shape = 'u32[72,128]{1,0:T(1,128)}', space=vmem, size = 0x9000, scoped, tag = 'internal scratch']
  %s0 = inlined_call_operand.vmem [shape: bf16[32,72], index: 0, kind: input, shape index: {}]
  %s1 = inlined_call_operand.vmem [shape: bf16[72,8], index: 1, kind: input, shape index: {}]
  %s2 = inlined_call_operand.vmem [shape: f32[32,8], index: 2, kind: output, shape index: {0}]
  %s3 = inlined_call_operand.vmem [shape: f32[1,1,8], index: 3, kind: output, shape index: {1}]
  %s4 = inlined_call_operand.vmem [shape: f32[1,1,8], index: 4, kind: output, shape index: {2}]
  %5 = xla_tuple %s2, %s3, %s4
  %s6 = sld [smem:[#allocation0]]
  $region34: #{_lambda_.102} parent=0
    _
  %s8 = ssub.s32 1, %s6
  %s9 = scalar_select 0, %s8, %s6
  // Predicated region
  $region2: #{_lambda_.102} parent=0 // pred_check
    _
  $region3: #{_lambda_.102} parent=0 // pred_check_branch
    %11 = sbr.rel (0) target = $region5
  $region4: #{_lambda_.102} parent=0 // pred_region
    _
  $region5: #{_lambda_.102} parent=0 // pred_fallthru
    _
  // Predicated region
  $region6: #{_lambda_.102} parent=0 // pred_check
    _
  $region7: #{_lambda_.102} parent=0 // pred_check_branch
    %13 = sbr.rel (0) target = $region9
  $region8: #{_lambda_.102} parent=0 // pred_region
    _
  $region9: #{_lambda_.102} parent=0 // pred_fallthru
    _
  %v15 = vld [vmem:[%s0] sm:$0xf]
  %v16 = vld [vmem:[%s0 + $0x4] sm:$0xf]
  %v17 = vld [vmem:[%s0 + $0x8] sm:$0xf]
  %v18 = vld [vmem:[%s0 + $0xc] sm:$0xf]
  %v19 = vld [vmem:[%s1] sm:$0xf]
  %v20 = vld [vmem:[%s1 + $0x4] sm:$0xf]
  %v21 = vld [vmem:[%s1 + $0x8] sm:$0xf]
  %v22 = vld [vmem:[%s1 + $0xc] sm:$0xf]
  %v23 = vld [vmem:[%s1 + $0x10] sm:$0xf]
  %v24 = vld [vmem:[%s1 + $0x14] sm:$0xf]
  %v25 = vld [vmem:[%s1 + $0x18] sm:$0xf]
  %v26 = vld [vmem:[%s1 + $0x1c] sm:$0xf]
  %v27 = vld [vmem:[%s1 + $0x20] sm:$0xf]
  %v32 = vunpack.c.l.b16 %v15
  %v33 = vunpack.c.l.b16 %v16
  %v34 = vunpack.c.l.b16 %v17
  %v35 = vunpack.c.l.b16 %v18
  %v36 = vpack.c.b16 %v33, %v32
  %v37 = vpack.c.b16 %v35, %v34
  %v47 = vunpack.c.l.b16 %v19
  %v48 = vunpack.c.l.b16 %v20
  %v49 = vunpack.c.l.b16 %v21
  %v50 = vunpack.c.l.b16 %v22
  %v51 = vunpack.c.l.b16 %v23
  %v52 = vunpack.c.l.b16 %v24
  %v53 = vunpack.c.l.b16 %v25
  %v54 = vunpack.c.l.b16 %v26
  %v55 = vunpack.c.l.b16 %v27
  %v56 = vpack.c.b16 %v48, %v47
  %v57 = vpack.c.b16 %v50, %v49
  %v58 = vpack.c.b16 %v52, %v51
  %v59 = vpack.c.b16 %v54, %v53
  %v60 = vpack.c.b16 %v55, %v55
  %vm65 = vcmask 588800
  %v67 = vsel %vm65, %v36, 0
  %v70 = vsel %vm65, %v37, 0
  %vm72 = vcmask 1043456
  %v74 = vsel %vm72, %v60, 0
  %76 = vmatpush.bf16.msra.mxu0 0
  %77 = vmatpush.bf16.msra.mxu0 0
  %78 = vmatpush.bf16.msra.mxu0 0
  %79 = vmatpush.bf16.msra.mxu0 %v74
  %80 = vmatpush.bf16.msra.mxu0 %v59
  %81 = vmatpush.bf16.msra.mxu0 %v58
  %82 = vmatpush.bf16.msra.mxu0 %v57
  %83 = vmatpush.bf16.msra.mxu0 %v56
  %84 = vmatmul.bf16.gmra.mxu0 %v67
  %v85 = vpop.f32.mrf.mxu0
  %v86 = vadd.f32 0.0, %v85
  %v87 = vpop.f32.mrf.mxu0
  %v88 = vadd.f32 0.0, %v87
  %89 = vmatmul.bf16.gmra.mxu0 %v70
  %v90 = vpop.f32.mrf.mxu0
  %v91 = vadd.f32 0.0, %v90
  %v92 = vpop.f32.mrf.mxu0
  %v93 = vadd.f32 0.0, %v92
  %94 = vdwg.mxu0
  %vm95 = vcmask 64512
  %96 = vst.msk [vmem:[%s2] sm:$0xff] %vm95, %v86
  %97 = vst.msk [vmem:[%s2 + $0x8] sm:$0xff] %vm95, %v88
  %98 = vst.msk [vmem:[%s2 + $0x10] sm:$0xff] %vm95, %v91
  %99 = vst.msk [vmem:[%s2 + $0x18] sm:$0xff] %vm95, %v93
  %v100 = vld [vmem:[%s2] sm:$0xff]
  %v101 = vld [vmem:[%s2 + $0x8] sm:$0xff]
  %v102 = vld [vmem:[%s2 + $0x10] sm:$0xff]
  %v103 = vld [vmem:[%s2 + $0x18] sm:$0xff]
  %v104 = vsel %vm95, %v100, 0.0
  %v105 = vsel %vm95, %v101, 0.0
  %v106 = vadd.f32 %v104, %v105
  %v107 = vsel %vm95, %v102, 0.0
  %v108 = vadd.f32 %v106, %v107
  %v109 = vsel %vm95, %v103, 0.0
  %v110 = vadd.f32 %v108, %v109
  %v111 = vrot.slane %v110, 4
  %v112 = vadd.f32 %v110, %v111
  %v113 = vrot.slane %v112, 2
  %v114 = vadd.f32 %v112, %v113
  %v115 = vrot.slane %v114, 1
  %v116 = vadd.f32 %v114, %v115
  %vm117 = vcmask 57344
  %118 = vst.msk [vmem:[%s3] sm:$0x1] %vm117, %v116
  %v119 = vmul.f32 %v100, %v100
  %v120 = vmul.f32 %v101, %v101
  %v121 = vmul.f32 %v102, %v102
  %v122 = vmul.f32 %v103, %v103
  %v123 = vsel %vm95, %v119, 0.0
  %v124 = vsel %vm95, %v120, 0.0
  %v125 = vadd.f32 %v123, %v124
  %v126 = vsel %vm95, %v121, 0.0
  %v127 = vadd.f32 %v125, %v126
  %v128 = vsel %vm95, %v122, 0.0
  %v129 = vadd.f32 %v127, %v128
  %v130 = vrot.slane %v129, 4
  %v131 = vadd.f32 %v129, %v130
  %v132 = vrot.slane %v131, 2
  %v133 = vadd.f32 %v131, %v132
  %v134 = vrot.slane %v133, 1
  %v135 = vadd.f32 %v133, %v134
  %136 = vst.msk [vmem:[%s4] sm:$0x1] %vm117, %v135
  // Predicated region
  $region10: #{_lambda_.102} parent=0 // pred_check
    _
  $region11: #{_lambda_.102} parent=0 // pred_check_branch
    %138 = sbr.rel (0) target = $region13
  $region12: #{_lambda_.102} parent=0 // pred_region
    _
  $region13: #{_lambda_.102} parent=0 // pred_fallthru
    _
  // Predicated region
  $region14: #{_lambda_.102} parent=0 // pred_check
    _
  $region15: #{_lambda_.102} parent=0 // pred_check_branch
    %140 = sbr.rel (0) target = $region17
  $region16: #{_lambda_.102} parent=0 // pred_region
    _
  $region17: #{_lambda_.102} parent=0 // pred_fallthru
    _
  // Predicated region
  $region18: #{_lambda_.102} parent=0 // pred_check
    _
  $region19: #{_lambda_.102} parent=0 // pred_check_branch
    %142 = sbr.rel (0) target = $region21
  $region20: #{_lambda_.102} parent=0 // pred_region
    _
  $region21: #{_lambda_.102} parent=0 // pred_fallthru
    _
  // Predicated region
  $region22: #{_lambda_.102} parent=0 // pred_check
    _
  $region23: #{_lambda_.102} parent=0 // pred_check_branch
    %144 = sbr.rel (0) target = $region25
  $region24: #{_lambda_.102} parent=0 // pred_region
    _
  $region25: #{_lambda_.102} parent=0 // pred_fallthru
    _
  // Predicated region
  $region26: #{_lambda_.102} parent=0 // pred_check
    _
  $region27: #{_lambda_.102} parent=0 // pred_check_branch
    %146 = sbr.rel (0) target = $region29
  $region28: #{_lambda_.102} parent=0 // pred_region
    _
  $region29: #{_lambda_.102} parent=0 // pred_fallthru
    _
  // Predicated region
  $region30: #{_lambda_.102} parent=0 // pred_check
    _
  $region31: #{_lambda_.102} parent=0 // pred_check_branch
    %148 = sbr.rel (0) target = $region33
  $region32: #{_lambda_.102} parent=0 // pred_region
    _
  $region33: #{_lambda_.102} parent=0 // pred_fallthru
    _

// kernel: _lambda_.104
$region0: #{_lambda_.104}
  #allocation0 [shape = 'u32[]', space=smem, size = 0x4, offset = 0x4, fixed_abs, tag = 'smem constant byte address 0x4 - core index']
  #allocation1 [shape = 'u32[72,128]{1,0:T(1,128)}', space=vmem, size = 0x9000, scoped, tag = 'internal scratch']
  %s0 = inlined_call_operand.vmem [shape: bf16[32,8], index: 0, kind: input, shape index: {}]
  %s1 = inlined_call_operand.vmem [shape: bf16[8,32], index: 1, kind: input, shape index: {}]
  %s2 = inlined_call_operand.vmem [shape: f32[32,32], index: 2, kind: output, shape index: {0}]
  %s3 = inlined_call_operand.vmem [shape: f32[1,1,32], index: 3, kind: output, shape index: {1}]
  %s4 = inlined_call_operand.vmem [shape: f32[1,1,32], index: 4, kind: output, shape index: {2}]
  %5 = xla_tuple %s2, %s3, %s4
  %s6 = sld [smem:[#allocation0]]
  $region34: #{_lambda_.104} parent=0
    _
  %s8 = ssub.s32 1, %s6
  %s9 = scalar_select 0, %s8, %s6
  // Predicated region
  $region2: #{_lambda_.104} parent=0 // pred_check
    _
  $region3: #{_lambda_.104} parent=0 // pred_check_branch
    %11 = sbr.rel (0) target = $region5
  $region4: #{_lambda_.104} parent=0 // pred_region
    _
  $region5: #{_lambda_.104} parent=0 // pred_fallthru
    _
  // Predicated region
  $region6: #{_lambda_.104} parent=0 // pred_check
    _
  $region7: #{_lambda_.104} parent=0 // pred_check_branch
    %13 = sbr.rel (0) target = $region9
  $region8: #{_lambda_.104} parent=0 // pred_region
    _
  $region9: #{_lambda_.104} parent=0 // pred_fallthru
    _
  %v15 = vld [vmem:[%s0] sm:$0xf]
  %v16 = vld [vmem:[%s0 + $0x4] sm:$0xf]
  %v17 = vld [vmem:[%s0 + $0x8] sm:$0xf]
  %v18 = vld [vmem:[%s0 + $0xc] sm:$0xf]
  %v19 = vld [vmem:[%s1] sm:$0xf]
  %v24 = vunpack.c.l.b16 %v15
  %v25 = vunpack.c.l.b16 %v16
  %v26 = vunpack.c.l.b16 %v17
  %v27 = vunpack.c.l.b16 %v18
  %v28 = vpack.c.b16 %v25, %v24
  %v29 = vpack.c.b16 %v27, %v26
  %vm30 = vcmask 64512
  %v32 = vsel %vm30, %v28, 0
  %v35 = vsel %vm30, %v29, 0
  %vm37 = vcmask 1043456
  %v39 = vsel %vm37, %v19, 0
  %41 = vmatpush.bf16.msra.mxu0 0
  %42 = vmatpush.bf16.msra.mxu0 0
  %43 = vmatpush.bf16.msra.mxu0 0
  %44 = vmatpush.bf16.msra.mxu0 0
  %45 = vmatpush.bf16.msra.mxu0 0
  %46 = vmatpush.bf16.msra.mxu0 0
  %47 = vmatpush.bf16.msra.mxu0 0
  %48 = vmatpush.bf16.msra.mxu0 %v39
  %49 = vmatmul.bf16.gmra.mxu0 %v32
  %v50 = vpop.f32.mrf.mxu0
  %v51 = vadd.f32 0.0, %v50
  %v52 = vpop.f32.mrf.mxu0
  %v53 = vadd.f32 0.0, %v52
  %54 = vmatmul.bf16.gmra.mxu0 %v35
  %v55 = vpop.f32.mrf.mxu0
  %v56 = vadd.f32 0.0, %v55
  %v57 = vpop.f32.mrf.mxu0
  %v58 = vadd.f32 0.0, %v57
  %59 = vdwg.mxu0
  %vm60 = vcmask 261120
  %61 = vst.msk [vmem:[%s2] sm:$0xff] %vm60, %v51
  %62 = vst.msk [vmem:[%s2 + $0x8] sm:$0xff] %vm60, %v53
  %63 = vst.msk [vmem:[%s2 + $0x10] sm:$0xff] %vm60, %v56
  %64 = vst.msk [vmem:[%s2 + $0x18] sm:$0xff] %vm60, %v58
  %v65 = vld [vmem:[%s2] sm:$0xff]
  %v66 = vld [vmem:[%s2 + $0x8] sm:$0xff]
  %v67 = vld [vmem:[%s2 + $0x10] sm:$0xff]
  %v68 = vld [vmem:[%s2 + $0x18] sm:$0xff]
  %v69 = vsel %vm60, %v65, 0.0
  %v70 = vsel %vm60, %v66, 0.0
  %v71 = vadd.f32 %v69, %v70
  %v72 = vsel %vm60, %v67, 0.0
  %v73 = vadd.f32 %v71, %v72
  %v74 = vsel %vm60, %v68, 0.0
  %v75 = vadd.f32 %v73, %v74
  %v76 = vrot.slane %v75, 4
  %v77 = vadd.f32 %v75, %v76
  %v78 = vrot.slane %v77, 2
  %v79 = vadd.f32 %v77, %v78
  %v80 = vrot.slane %v79, 1
  %v81 = vadd.f32 %v79, %v80
  %vm82 = vcmask 253952
  %83 = vst.msk [vmem:[%s3] sm:$0x1] %vm82, %v81
  %v84 = vmul.f32 %v65, %v65
  %v85 = vmul.f32 %v66, %v66
  %v86 = vmul.f32 %v67, %v67
  %v87 = vmul.f32 %v68, %v68
  %v88 = vsel %vm60, %v84, 0.0
  %v89 = vsel %vm60, %v85, 0.0
  %v90 = vadd.f32 %v88, %v89
  %v91 = vsel %vm60, %v86, 0.0
  %v92 = vadd.f32 %v90, %v91
  %v93 = vsel %vm60, %v87, 0.0
  %v94 = vadd.f32 %v92, %v93
  %v95 = vrot.slane %v94, 4
  %v96 = vadd.f32 %v94, %v95
  %v97 = vrot.slane %v96, 2
  %v98 = vadd.f32 %v96, %v97
  %v99 = vrot.slane %v98, 1
  %v100 = vadd.f32 %v98, %v99
  %101 = vst.msk [vmem:[%s4] sm:$0x1] %vm82, %v100
  // Predicated region
  $region10: #{_lambda_.104} parent=0 // pred_check
    _
  $region11: #{_lambda_.104} parent=0 // pred_check_branch
    %103 = sbr.rel (0) target = $region13
  $region12: #{_lambda_.104} parent=0 // pred_region
    _
  $region13: #{_lambda_.104} parent=0 // pred_fallthru
    _
  // Predicated region
  $region14: #{_lambda_.104} parent=0 // pred_check
    _
  $region15: #{_lambda_.104} parent=0 // pred_check_branch
    %105 = sbr.rel (0) target = $region17
  $region16: #{_lambda_.104} parent=0 // pred_region
    _
  $region17: #{_lambda_.104} parent=0 // pred_fallthru
    _
  // Predicated region
  $region18: #{_lambda_.104} parent=0 // pred_check
    _
  $region19: #{_lambda_.104} parent=0 // pred_check_branch
    %107 = sbr.rel (0) target = $region21
  $region20: #{_lambda_.104} parent=0 // pred_region
    _
  $region21: #{_lambda_.104} parent=0 // pred_fallthru
    _
  // Predicated region
  $region22: #{_lambda_.104} parent=0 // pred_check
    _
  $region23: #{_lambda_.104} parent=0 // pred_check_branch
    %109 = sbr.rel (0) target = $region25
  $region24: #{_lambda_.104} parent=0 // pred_region
    _
  $region25: #{_lambda_.104} parent=0 // pred_fallthru
    _
  // Predicated region
  $region26: #{_lambda_.104} parent=0 // pred_check
    _
  $region27: #{_lambda_.104} parent=0 // pred_check_branch
    %111 = sbr.rel (0) target = $region29
  $region28: #{_lambda_.104} parent=0 // pred_region
    _
  $region29: #{_lambda_.104} parent=0 // pred_fallthru
    _
  // Predicated region
  $region30: #{_lambda_.104} parent=0 // pred_check
    _
  $region31: #{_lambda_.104} parent=0 // pred_check_branch
    %113 = sbr.rel (0) target = $region33
  $region32: #{_lambda_.104} parent=0 // pred_region
    _
  $region33: #{_lambda_.104} parent=0 // pred_fallthru
    _

// kernel: _lambda_.105
$region0: #{_lambda_.105}
  #allocation0 [shape = 'u32[]', space=smem, size = 0x4, offset = 0x4, fixed_abs, tag = 'smem constant byte address 0x4 - core index']
  #allocation1 [shape = 'u32[72,128]{1,0:T(1,128)}', space=vmem, size = 0x9000, scoped, tag = 'internal scratch']
  %s0 = inlined_call_operand.vmem [shape: f32[32,32], index: 0, kind: input, shape index: {}]
  %s1 = inlined_call_operand.vmem [shape: f32[1,32], index: 1, kind: input, shape index: {}]
  %s2 = inlined_call_operand.vmem [shape: f32[1,32], index: 2, kind: input, shape index: {}]
  %s3 = inlined_call_operand.vmem [shape: bf16[32,32], index: 3, kind: output, shape index: {}]
  %s4 = sld [smem:[#allocation0]]
  $region22: #{_lambda_.105} parent=0
    _
  %s6 = ssub.s32 1, %s4
  %s7 = scalar_select 0, %s6, %s4
  // Predicated region
  $region2: #{_lambda_.105} parent=0 // pred_check
    _
  $region3: #{_lambda_.105} parent=0 // pred_check_branch
    %9 = sbr.rel (0) target = $region5
  $region4: #{_lambda_.105} parent=0 // pred_region
    _
  $region5: #{_lambda_.105} parent=0 // pred_fallthru
    _
  // Predicated region
  $region6: #{_lambda_.105} parent=0 // pred_check
    _
  $region7: #{_lambda_.105} parent=0 // pred_check_branch
    %11 = sbr.rel (0) target = $region9
  $region8: #{_lambda_.105} parent=0 // pred_region
    _
  $region9: #{_lambda_.105} parent=0 // pred_fallthru
    _
  // Predicated region
  $region10: #{_lambda_.105} parent=0 // pred_check
    _
  $region11: #{_lambda_.105} parent=0 // pred_check_branch
    %13 = sbr.rel (0) target = $region13
  $region12: #{_lambda_.105} parent=0 // pred_region
    _
  $region13: #{_lambda_.105} parent=0 // pred_fallthru
    _
  %v14 = vld [vmem:[%s0] sm:$0xff]
  %v15 = vld [vmem:[%s0 + $0x8] sm:$0xff]
  %v16 = vld [vmem:[%s0 + $0x10] sm:$0xff]
  %v17 = vld [vmem:[%s0 + $0x18] sm:$0xff]
  %v18 = vld [vmem:[%s1] sm:$0x1]
  %v20 = vperm.slane %v18, 0
  %v22 = vmul.f32 %v14, %v20
  %v23 = vmul.f32 %v15, %v20
  %v24 = vmul.f32 %v16, %v20
  %v25 = vmul.f32 %v17, %v20
  %v26 = vld [vmem:[%s2] sm:$0x1]
  %v28 = vperm.slane %v26, 0
  %v30 = vadd.f32 %v22, %v28
  %v31 = vadd.f32 %v23, %v28
  %v32 = vadd.f32 %v24, %v28
  %v33 = vadd.f32 %v25, %v28
  %v34 = vmax.f32 %v30, 0.0
  %v35 = vmax.f32 %v31, 0.0
  %v36 = vmax.f32 %v32, 0.0
  %v37 = vmax.f32 %v33, 0.0
  %v38 = vpack.c.bf16 %v34, %v34
  %v39 = vpack.c.bf16 %v35, %v35
  %v40 = vpack.c.bf16 %v36, %v36
  %v41 = vpack.c.bf16 %v37, %v37
  %vm42 = vcmask 257024
  %43 = vst.msk [vmem:[%s3] sm:$0xf] %vm42, %v38
  %44 = vst.msk [vmem:[%s3 + $0x4] sm:$0xf] %vm42, %v39
  %45 = vst.msk [vmem:[%s3 + $0x8] sm:$0xf] %vm42, %v40
  %46 = vst.msk [vmem:[%s3 + $0xc] sm:$0xf] %vm42, %v41
  // Predicated region
  $region14: #{_lambda_.105} parent=0 // pred_check
    _
  $region15: #{_lambda_.105} parent=0 // pred_check_branch
    %48 = sbr.rel (0) target = $region17
  $region16: #{_lambda_.105} parent=0 // pred_region
    _
  $region17: #{_lambda_.105} parent=0 // pred_fallthru
    _
  // Predicated region
  $region18: #{_lambda_.105} parent=0 // pred_check
    _
  $region19: #{_lambda_.105} parent=0 // pred_check_branch
    %50 = sbr.rel (0) target = $region21
  $region20: #{_lambda_.105} parent=0 // pred_region
    _
  $region21: #{_lambda_.105} parent=0 // pred_fallthru
    _

// kernel: _lambda_.106
$region0: #{_lambda_.106}
  #allocation0 [shape = 'u32[]', space=smem, size = 0x4, offset = 0x4, fixed_abs, tag = 'smem constant byte address 0x4 - core index']
  #allocation1 [shape = 'u32[72,128]{1,0:T(1,128)}', space=vmem, size = 0x9000, scoped, tag = 'internal scratch']
  %s0 = inlined_call_operand.vmem [shape: bf16[32,32], index: 0, kind: input, shape index: {}]
  %s1 = inlined_call_operand.vmem [shape: bf16[32,8], index: 1, kind: input, shape index: {}]
  %s2 = inlined_call_operand.vmem [shape: f32[32,8], index: 2, kind: output, shape index: {0}]
  %s3 = inlined_call_operand.vmem [shape: f32[1,1,8], index: 3, kind: output, shape index: {1}]
  %s4 = inlined_call_operand.vmem [shape: f32[1,1,8], index: 4, kind: output, shape index: {2}]
  %5 = xla_tuple %s2, %s3, %s4
  %s6 = sld [smem:[#allocation0]]
  $region34: #{_lambda_.106} parent=0
    _
  %s8 = ssub.s32 1, %s6
  %s9 = scalar_select 0, %s8, %s6
  // Predicated region
  $region2: #{_lambda_.106} parent=0 // pred_check
    _
  $region3: #{_lambda_.106} parent=0 // pred_check_branch
    %11 = sbr.rel (0) target = $region5
  $region4: #{_lambda_.106} parent=0 // pred_region
    _
  $region5: #{_lambda_.106} parent=0 // pred_fallthru
    _
  // Predicated region
  $region6: #{_lambda_.106} parent=0 // pred_check
    _
  $region7: #{_lambda_.106} parent=0 // pred_check_branch
    %13 = sbr.rel (0) target = $region9
  $region8: #{_lambda_.106} parent=0 // pred_region
    _
  $region9: #{_lambda_.106} parent=0 // pred_fallthru
    _
  %v15 = vld [vmem:[%s0] sm:$0xf]
  %v16 = vld [vmem:[%s0 + $0x4] sm:$0xf]
  %v17 = vld [vmem:[%s0 + $0x8] sm:$0xf]
  %v18 = vld [vmem:[%s0 + $0xc] sm:$0xf]
  %v19 = vld [vmem:[%s1] sm:$0xf]
  %v20 = vld [vmem:[%s1 + $0x4] sm:$0xf]
  %v21 = vld [vmem:[%s1 + $0x8] sm:$0xf]
  %v22 = vld [vmem:[%s1 + $0xc] sm:$0xf]
  %v27 = vunpack.c.l.b16 %v15
  %v28 = vunpack.c.l.b16 %v16
  %v29 = vunpack.c.l.b16 %v17
  %v30 = vunpack.c.l.b16 %v18
  %v31 = vpack.c.b16 %v28, %v27
  %v32 = vpack.c.b16 %v30, %v29
  %v37 = vunpack.c.l.b16 %v19
  %v38 = vunpack.c.l.b16 %v20
  %v39 = vunpack.c.l.b16 %v21
  %v40 = vunpack.c.l.b16 %v22
  %v41 = vpack.c.b16 %v38, %v37
  %v42 = vpack.c.b16 %v40, %v39
  %vm45 = vcmask 261120
  %v47 = vsel %vm45, %v31, 0
  %v50 = vsel %vm45, %v32, 0
  %52 = vmatpush.bf16.msra.mxu0 0
  %53 = vmatpush.bf16.msra.mxu0 0
  %54 = vmatpush.bf16.msra.mxu0 0
  %55 = vmatpush.bf16.msra.mxu0 0
  %56 = vmatpush.bf16.msra.mxu0 0
  %57 = vmatpush.bf16.msra.mxu0 0
  %58 = vmatpush.bf16.msra.mxu0 %v42
  %59 = vmatpush.bf16.msra.mxu0 %v41
  %60 = vmatmul.bf16.gmra.mxu0 %v47
  %v61 = vpop.f32.mrf.mxu0
  %v62 = vadd.f32 0.0, %v61
  %v63 = vpop.f32.mrf.mxu0
  %v64 = vadd.f32 0.0, %v63
  %65 = vmatmul.bf16.gmra.mxu0 %v50
  %v66 = vpop.f32.mrf.mxu0
  %v67 = vadd.f32 0.0, %v66
  %v68 = vpop.f32.mrf.mxu0
  %v69 = vadd.f32 0.0, %v68
  %70 = vdwg.mxu0
  %vm71 = vcmask 64512
  %72 = vst.msk [vmem:[%s2] sm:$0xff] %vm71, %v62
  %73 = vst.msk [vmem:[%s2 + $0x8] sm:$0xff] %vm71, %v64
  %74 = vst.msk [vmem:[%s2 + $0x10] sm:$0xff] %vm71, %v67
  %75 = vst.msk [vmem:[%s2 + $0x18] sm:$0xff] %vm71, %v69
  %v76 = vld [vmem:[%s2] sm:$0xff]
  %v77 = vld [vmem:[%s2 + $0x8] sm:$0xff]
  %v78 = vld [vmem:[%s2 + $0x10] sm:$0xff]
  %v79 = vld [vmem:[%s2 + $0x18] sm:$0xff]
  %v80 = vsel %vm71, %v76, 0.0
  %v81 = vsel %vm71, %v77, 0.0
  %v82 = vadd.f32 %v80, %v81
  %v83 = vsel %vm71, %v78, 0.0
  %v84 = vadd.f32 %v82, %v83
  %v85 = vsel %vm71, %v79, 0.0
  %v86 = vadd.f32 %v84, %v85
  %v87 = vrot.slane %v86, 4
  %v88 = vadd.f32 %v86, %v87
  %v89 = vrot.slane %v88, 2
  %v90 = vadd.f32 %v88, %v89
  %v91 = vrot.slane %v90, 1
  %v92 = vadd.f32 %v90, %v91
  %vm93 = vcmask 57344
  %94 = vst.msk [vmem:[%s3] sm:$0x1] %vm93, %v92
  %v95 = vmul.f32 %v76, %v76
  %v96 = vmul.f32 %v77, %v77
  %v97 = vmul.f32 %v78, %v78
  %v98 = vmul.f32 %v79, %v79
  %v99 = vsel %vm71, %v95, 0.0
  %v100 = vsel %vm71, %v96, 0.0
  %v101 = vadd.f32 %v99, %v100
  %v102 = vsel %vm71, %v97, 0.0
  %v103 = vadd.f32 %v101, %v102
  %v104 = vsel %vm71, %v98, 0.0
  %v105 = vadd.f32 %v103, %v104
  %v106 = vrot.slane %v105, 4
  %v107 = vadd.f32 %v105, %v106
  %v108 = vrot.slane %v107, 2
  %v109 = vadd.f32 %v107, %v108
  %v110 = vrot.slane %v109, 1
  %v111 = vadd.f32 %v109, %v110
  %112 = vst.msk [vmem:[%s4] sm:$0x1] %vm93, %v111
  // Predicated region
  $region10: #{_lambda_.106} parent=0 // pred_check
    _
  $region11: #{_lambda_.106} parent=0 // pred_check_branch
    %114 = sbr.rel (0) target = $region13
  $region12: #{_lambda_.106} parent=0 // pred_region
    _
  $region13: #{_lambda_.106} parent=0 // pred_fallthru
    _
  // Predicated region
  $region14: #{_lambda_.106} parent=0 // pred_check
    _
  $region15: #{_lambda_.106} parent=0 // pred_check_branch
    %116 = sbr.rel (0) target = $region17
  $region16: #{_lambda_.106} parent=0 // pred_region
    _
  $region17: #{_lambda_.106} parent=0 // pred_fallthru
    _
  // Predicated region
  $region18: #{_lambda_.106} parent=0 // pred_check
    _
  $region19: #{_lambda_.106} parent=0 // pred_check_branch
    %118 = sbr.rel (0) target = $region21
  $region20: #{_lambda_.106} parent=0 // pred_region
    _
  $region21: #{_lambda_.106} parent=0 // pred_fallthru
    _
  // Predicated region
  $region22: #{_lambda_.106} parent=0 // pred_check
    _
  $region23: #{_lambda_.106} parent=0 // pred_check_branch
    %120 = sbr.rel (0) target = $region25
  $region24: #{_lambda_.106} parent=0 // pred_region
    _
  $region25: #{_lambda_.106} parent=0 // pred_fallthru
    _
  // Predicated region
  $region26: #{_lambda_.106} parent=0 // pred_check
    _
  $region27: #{_lambda_.106} parent=0 // pred_check_branch
    %122 = sbr.rel (0) target = $region29
  $region28: #{_lambda_.106} parent=0 // pred_region
    _
  $region29: #{_lambda_.106} parent=0 // pred_fallthru
    _
  // Predicated region
  $region30: #{_lambda_.106} parent=0 // pred_check
    _
  $region31: #{_lambda_.106} parent=0 // pred_check_branch
    %124 = sbr.rel (0) target = $region33
  $region32: #{_lambda_.106} parent=0 // pred_region
    _
  $region33: #{_lambda_.106} parent=0 // pred_fallthru
    _

// kernel: _lambda_.119
$region0: #{_lambda_.119}
  #allocation0 [shape = 'u32[]', space=smem, size = 0x4, offset = 0x4, fixed_abs, tag = 'smem constant byte address 0x4 - core index']
  #allocation1 [shape = 'u32[72,128]{1,0:T(1,128)}', space=vmem, size = 0x9000, scoped, tag = 'internal scratch']
  %s0 = inlined_call_operand.vmem [shape: f32[32,16], index: 0, kind: input, shape index: {}]
  %s1 = inlined_call_operand.vmem [shape: f32[1,16], index: 1, kind: input, shape index: {}]
  %s2 = inlined_call_operand.vmem [shape: f32[1,16], index: 2, kind: input, shape index: {}]
  %s3 = inlined_call_operand.vmem [shape: bf16[32,16], index: 3, kind: output, shape index: {}]
  %s4 = sld [smem:[#allocation0]]
  $region22: #{_lambda_.119} parent=0
    _
  %s6 = ssub.s32 1, %s4
  %s7 = scalar_select 0, %s6, %s4
  // Predicated region
  $region2: #{_lambda_.119} parent=0 // pred_check
    _
  $region3: #{_lambda_.119} parent=0 // pred_check_branch
    %9 = sbr.rel (0) target = $region5
  $region4: #{_lambda_.119} parent=0 // pred_region
    _
  $region5: #{_lambda_.119} parent=0 // pred_fallthru
    _
  // Predicated region
  $region6: #{_lambda_.119} parent=0 // pred_check
    _
  $region7: #{_lambda_.119} parent=0 // pred_check_branch
    %11 = sbr.rel (0) target = $region9
  $region8: #{_lambda_.119} parent=0 // pred_region
    _
  $region9: #{_lambda_.119} parent=0 // pred_fallthru
    _
  // Predicated region
  $region10: #{_lambda_.119} parent=0 // pred_check
    _
  $region11: #{_lambda_.119} parent=0 // pred_check_branch
    %13 = sbr.rel (0) target = $region13
  $region12: #{_lambda_.119} parent=0 // pred_region
    _
  $region13: #{_lambda_.119} parent=0 // pred_fallthru
    _
  %v14 = vld [vmem:[%s0] sm:$0xff]
  %v15 = vld [vmem:[%s0 + $0x8] sm:$0xff]
  %v16 = vld [vmem:[%s0 + $0x10] sm:$0xff]
  %v17 = vld [vmem:[%s0 + $0x18] sm:$0xff]
  %v18 = vld [vmem:[%s1] sm:$0x1]
  %v20 = vperm.slane %v18, 0
  %v22 = vmul.f32 %v14, %v20
  %v23 = vmul.f32 %v15, %v20
  %v24 = vmul.f32 %v16, %v20
  %v25 = vmul.f32 %v17, %v20
  %v26 = vld [vmem:[%s2] sm:$0x1]
  %v28 = vperm.slane %v26, 0
  %v30 = vadd.f32 %v22, %v28
  %v31 = vadd.f32 %v23, %v28
  %v32 = vadd.f32 %v24, %v28
  %v33 = vadd.f32 %v25, %v28
  %v34 = vmax.f32 %v30, 0.0
  %v35 = vmax.f32 %v31, 0.0
  %v36 = vmax.f32 %v32, 0.0
  %v37 = vmax.f32 %v33, 0.0
  %v38 = vpack.c.bf16 %v34, %v34
  %v39 = vpack.c.bf16 %v35, %v35
  %v40 = vpack.c.bf16 %v36, %v36
  %v41 = vpack.c.bf16 %v37, %v37
  %vm42 = vcmask 125952
  %43 = vst.msk [vmem:[%s3] sm:$0xf] %vm42, %v38
  %44 = vst.msk [vmem:[%s3 + $0x4] sm:$0xf] %vm42, %v39
  %45 = vst.msk [vmem:[%s3 + $0x8] sm:$0xf] %vm42, %v40
  %46 = vst.msk [vmem:[%s3 + $0xc] sm:$0xf] %vm42, %v41
  // Predicated region
  $region14: #{_lambda_.119} parent=0 // pred_check
    _
  $region15: #{_lambda_.119} parent=0 // pred_check_branch
    %48 = sbr.rel (0) target = $region17
  $region16: #{_lambda_.119} parent=0 // pred_region
    _
  $region17: #{_lambda_.119} parent=0 // pred_fallthru
    _
  // Predicated region
  $region18: #{_lambda_.119} parent=0 // pred_check
    _
  $region19: #{_lambda_.119} parent=0 // pred_check_branch
    %50 = sbr.rel (0) target = $region21
  $region20: #{_lambda_.119} parent=0 // pred_region
    _
  $region21: #{_lambda_.119} parent=0 // pred_fallthru
    _

// kernel: _lambda_.118
$region0: #{_lambda_.118}
  #allocation0 [shape = 'u32[]', space=smem, size = 0x4, offset = 0x4, fixed_abs, tag = 'smem constant byte address 0x4 - core index']
  #allocation1 [shape = 'u32[72,128]{1,0:T(1,128)}', space=vmem, size = 0x9000, scoped, tag = 'internal scratch']
  %s0 = inlined_call_operand.vmem [shape: bf16[32,32], index: 0, kind: input, shape index: {}]
  %s1 = inlined_call_operand.vmem [shape: bf16[32,16], index: 1, kind: input, shape index: {}]
  %s2 = inlined_call_operand.vmem [shape: f32[32,16], index: 2, kind: output, shape index: {0}]
  %s3 = inlined_call_operand.vmem [shape: f32[1,1,16], index: 3, kind: output, shape index: {1}]
  %s4 = inlined_call_operand.vmem [shape: f32[1,1,16], index: 4, kind: output, shape index: {2}]
  %5 = xla_tuple %s2, %s3, %s4
  %s6 = sld [smem:[#allocation0]]
  $region34: #{_lambda_.118} parent=0
    _
  %s8 = ssub.s32 1, %s6
  %s9 = scalar_select 0, %s8, %s6
  // Predicated region
  $region2: #{_lambda_.118} parent=0 // pred_check
    _
  $region3: #{_lambda_.118} parent=0 // pred_check_branch
    %11 = sbr.rel (0) target = $region5
  $region4: #{_lambda_.118} parent=0 // pred_region
    _
  $region5: #{_lambda_.118} parent=0 // pred_fallthru
    _
  // Predicated region
  $region6: #{_lambda_.118} parent=0 // pred_check
    _
  $region7: #{_lambda_.118} parent=0 // pred_check_branch
    %13 = sbr.rel (0) target = $region9
  $region8: #{_lambda_.118} parent=0 // pred_region
    _
  $region9: #{_lambda_.118} parent=0 // pred_fallthru
    _
  %v15 = vld [vmem:[%s0] sm:$0xf]
  %v16 = vld [vmem:[%s0 + $0x4] sm:$0xf]
  %v17 = vld [vmem:[%s0 + $0x8] sm:$0xf]
  %v18 = vld [vmem:[%s0 + $0xc] sm:$0xf]
  %v19 = vld [vmem:[%s1] sm:$0xf]
  %v20 = vld [vmem:[%s1 + $0x4] sm:$0xf]
  %v21 = vld [vmem:[%s1 + $0x8] sm:$0xf]
  %v22 = vld [vmem:[%s1 + $0xc] sm:$0xf]
  %v27 = vunpack.c.l.b16 %v15
  %v28 = vunpack.c.l.b16 %v16
  %v29 = vunpack.c.l.b16 %v17
  %v30 = vunpack.c.l.b16 %v18
  %v31 = vpack.c.b16 %v28, %v27
  %v32 = vpack.c.b16 %v30, %v29
  %v37 = vunpack.c.l.b16 %v19
  %v38 = vunpack.c.l.b16 %v20
  %v39 = vunpack.c.l.b16 %v21
  %v40 = vunpack.c.l.b16 %v22
  %v41 = vpack.c.b16 %v38, %v37
  %v42 = vpack.c.b16 %v40, %v39
  %vm45 = vcmask 261120
  %v47 = vsel %vm45, %v31, 0
  %v50 = vsel %vm45, %v32, 0
  %52 = vmatpush.bf16.msra.mxu0 0
  %53 = vmatpush.bf16.msra.mxu0 0
  %54 = vmatpush.bf16.msra.mxu0 0
  %55 = vmatpush.bf16.msra.mxu0 0
  %56 = vmatpush.bf16.msra.mxu0 0
  %57 = vmatpush.bf16.msra.mxu0 0
  %58 = vmatpush.bf16.msra.mxu0 %v42
  %59 = vmatpush.bf16.msra.mxu0 %v41
  %60 = vmatmul.bf16.gmra.mxu0 %v47
  %v61 = vpop.f32.mrf.mxu0
  %v62 = vadd.f32 0.0, %v61
  %v63 = vpop.f32.mrf.mxu0
  %v64 = vadd.f32 0.0, %v63
  %65 = vmatmul.bf16.gmra.mxu0 %v50
  %v66 = vpop.f32.mrf.mxu0
  %v67 = vadd.f32 0.0, %v66
  %v68 = vpop.f32.mrf.mxu0
  %v69 = vadd.f32 0.0, %v68
  %70 = vdwg.mxu0
  %vm71 = vcmask 130048
  %72 = vst.msk [vmem:[%s2] sm:$0xff] %vm71, %v62
  %73 = vst.msk [vmem:[%s2 + $0x8] sm:$0xff] %vm71, %v64
  %74 = vst.msk [vmem:[%s2 + $0x10] sm:$0xff] %vm71, %v67
  %75 = vst.msk [vmem:[%s2 + $0x18] sm:$0xff] %vm71, %v69
  %v76 = vld [vmem:[%s2] sm:$0xff]
  %v77 = vld [vmem:[%s2 + $0x8] sm:$0xff]
  %v78 = vld [vmem:[%s2 + $0x10] sm:$0xff]
  %v79 = vld [vmem:[%s2 + $0x18] sm:$0xff]
  %v80 = vsel %vm71, %v76, 0.0
  %v81 = vsel %vm71, %v77, 0.0
  %v82 = vadd.f32 %v80, %v81
  %v83 = vsel %vm71, %v78, 0.0
  %v84 = vadd.f32 %v82, %v83
  %v85 = vsel %vm71, %v79, 0.0
  %v86 = vadd.f32 %v84, %v85
  %v87 = vrot.slane %v86, 4
  %v88 = vadd.f32 %v86, %v87
  %v89 = vrot.slane %v88, 2
  %v90 = vadd.f32 %v88, %v89
  %v91 = vrot.slane %v90, 1
  %v92 = vadd.f32 %v90, %v91
  %vm93 = vcmask 122880
  %94 = vst.msk [vmem:[%s3] sm:$0x1] %vm93, %v92
  %v95 = vmul.f32 %v76, %v76
  %v96 = vmul.f32 %v77, %v77
  %v97 = vmul.f32 %v78, %v78
  %v98 = vmul.f32 %v79, %v79
  %v99 = vsel %vm71, %v95, 0.0
  %v100 = vsel %vm71, %v96, 0.0
  %v101 = vadd.f32 %v99, %v100
  %v102 = vsel %vm71, %v97, 0.0
  %v103 = vadd.f32 %v101, %v102
  %v104 = vsel %vm71, %v98, 0.0
  %v105 = vadd.f32 %v103, %v104
  %v106 = vrot.slane %v105, 4
  %v107 = vadd.f32 %v105, %v106
  %v108 = vrot.slane %v107, 2
  %v109 = vadd.f32 %v107, %v108
  %v110 = vrot.slane %v109, 1
  %v111 = vadd.f32 %v109, %v110
  %112 = vst.msk [vmem:[%s4] sm:$0x1] %vm93, %v111
  // Predicated region
  $region10: #{_lambda_.118} parent=0 // pred_check
    _
  $region11: #{_lambda_.118} parent=0 // pred_check_branch
    %114 = sbr.rel (0) target = $region13
  $region12: #{_lambda_.118} parent=0 // pred_region
    _
  $region13: #{_lambda_.118} parent=0 // pred_fallthru
    _
  // Predicated region
  $region14: #{_lambda_.118} parent=0 // pred_check
    _
  $region15: #{_lambda_.118} parent=0 // pred_check_branch
    %116 = sbr.rel (0) target = $region17
  $region16: #{_lambda_.118} parent=0 // pred_region
    _
  $region17: #{_lambda_.118} parent=0 // pred_fallthru
    _
  // Predicated region
  $region18: #{_lambda_.118} parent=0 // pred_check
    _
  $region19: #{_lambda_.118} parent=0 // pred_check_branch
    %118 = sbr.rel (0) target = $region21
  $region20: #{_lambda_.118} parent=0 // pred_region
    _
  $region21: #{_lambda_.118} parent=0 // pred_fallthru
    _
  // Predicated region
  $region22: #{_lambda_.118} parent=0 // pred_check
    _
  $region23: #{_lambda_.118} parent=0 // pred_check_branch
    %120 = sbr.rel (0) target = $region25
  $region24: #{_lambda_.118} parent=0 // pred_region
    _
  $region25: #{_lambda_.118} parent=0 // pred_fallthru
    _
  // Predicated region
  $region26: #{_lambda_.118} parent=0 // pred_check
    _
  $region27: #{_lambda_.118} parent=0 // pred_check_branch
    %122 = sbr.rel (0) target = $region29
  $region28: #{_lambda_.118} parent=0 // pred_region
    _
  $region29: #{_lambda_.118} parent=0 // pred_fallthru
    _
  // Predicated region
  $region30: #{_lambda_.118} parent=0 // pred_check
    _
  $region31: #{_lambda_.118} parent=0 // pred_check_branch
    %124 = sbr.rel (0) target = $region33
  $region32: #{_lambda_.118} parent=0 // pred_region
    _
  $region33: #{_lambda_.118} parent=0 // pred_fallthru
    _

// kernel: _lambda_.121
$region0: #{_lambda_.121}
  #allocation0 [shape = 'u32[]', space=smem, size = 0x4, offset = 0x4, fixed_abs, tag = 'smem constant byte address 0x4 - core index']
  #allocation1 [shape = 'u32[72,128]{1,0:T(1,128)}', space=vmem, size = 0x9000, scoped, tag = 'internal scratch']
  %s0 = inlined_call_operand.vmem [shape: f32[8,16], index: 0, kind: input, shape index: {}]
  %s1 = inlined_call_operand.vmem [shape: f32[1,16], index: 1, kind: input, shape index: {}]
  %s2 = inlined_call_operand.vmem [shape: f32[1,16], index: 2, kind: input, shape index: {}]
  %s3 = inlined_call_operand.vmem [shape: bf16[8,16], index: 3, kind: output, shape index: {}]
  %s4 = sld [smem:[#allocation0]]
  $region22: #{_lambda_.121} parent=0
    _
  %s6 = ssub.s32 1, %s4
  %s7 = scalar_select 0, %s6, %s4
  // Predicated region
  $region2: #{_lambda_.121} parent=0 // pred_check
    _
  $region3: #{_lambda_.121} parent=0 // pred_check_branch
    %9 = sbr.rel (0) target = $region5
  $region4: #{_lambda_.121} parent=0 // pred_region
    _
  $region5: #{_lambda_.121} parent=0 // pred_fallthru
    _
  // Predicated region
  $region6: #{_lambda_.121} parent=0 // pred_check
    _
  $region7: #{_lambda_.121} parent=0 // pred_check_branch
    %11 = sbr.rel (0) target = $region9
  $region8: #{_lambda_.121} parent=0 // pred_region
    _
  $region9: #{_lambda_.121} parent=0 // pred_fallthru
    _
  // Predicated region
  $region10: #{_lambda_.121} parent=0 // pred_check
    _
  $region11: #{_lambda_.121} parent=0 // pred_check_branch
    %13 = sbr.rel (0) target = $region13
  $region12: #{_lambda_.121} parent=0 // pred_region
    _
  $region13: #{_lambda_.121} parent=0 // pred_fallthru
    _
  %v14 = vld [vmem:[%s0] sm:$0xff]
  %v15 = vld [vmem:[%s1] sm:$0x1]
  %v17 = vperm.slane %v15, 0
  %v19 = vmul.f32 %v14, %v17
  %v20 = vld [vmem:[%s2] sm:$0x1]
  %v22 = vperm.slane %v20, 0
  %v24 = vadd.f32 %v19, %v22
  %v25 = vmax.f32 %v24, 0.0
  %v26 = vpack.c.bf16 %v25, %v25
  %vm27 = vcmask 125952
  %28 = vst.msk [vmem:[%s3] sm:$0xf] %vm27, %v26
  // Predicated region
  $region14: #{_lambda_.121} parent=0 // pred_check
    _
  $region15: #{_lambda_.121} parent=0 // pred_check_branch
    %30 = sbr.rel (0) target = $region17
  $region16: #{_lambda_.121} parent=0 // pred_region
    _
  $region17: #{_lambda_.121} parent=0 // pred_fallthru
    _
  // Predicated region
  $region18: #{_lambda_.121} parent=0 // pred_check
    _
  $region19: #{_lambda_.121} parent=0 // pred_check_branch
    %32 = sbr.rel (0) target = $region21
  $region20: #{_lambda_.121} parent=0 // pred_region
    _
  $region21: #{_lambda_.121} parent=0 // pred_fallthru
    _

// kernel: _lambda_.120
$region0: #{_lambda_.120}
  #allocation0 [shape = 'u32[]', space=smem, size = 0x4, offset = 0x4, fixed_abs, tag = 'smem constant byte address 0x4 - core index']
  #allocation1 [shape = 'u32[72,128]{1,0:T(1,128)}', space=vmem, size = 0x9000, scoped, tag = 'internal scratch']
  %s0 = inlined_call_operand.vmem [shape: bf16[8,144], index: 0, kind: input, shape index: {}]
  %s1 = inlined_call_operand.vmem [shape: bf16[144,16], index: 1, kind: input, shape index: {}]
  %s2 = inlined_call_operand.vmem [shape: f32[8,16], index: 2, kind: output, shape index: {0}]
  %s3 = inlined_call_operand.vmem [shape: f32[1,1,16], index: 3, kind: output, shape index: {1}]
  %s4 = inlined_call_operand.vmem [shape: f32[1,1,16], index: 4, kind: output, shape index: {2}]
  %5 = xla_tuple %s2, %s3, %s4
  %s6 = sld [smem:[#allocation0]]
  $region34: #{_lambda_.120} parent=0
    _
  %s8 = ssub.s32 1, %s6
  %s9 = scalar_select 0, %s8, %s6
  // Predicated region
  $region2: #{_lambda_.120} parent=0 // pred_check
    _
  $region3: #{_lambda_.120} parent=0 // pred_check_branch
    %11 = sbr.rel (0) target = $region5
  $region4: #{_lambda_.120} parent=0 // pred_region
    _
  $region5: #{_lambda_.120} parent=0 // pred_fallthru
    _
  // Predicated region
  $region6: #{_lambda_.120} parent=0 // pred_check
    _
  $region7: #{_lambda_.120} parent=0 // pred_check_branch
    %13 = sbr.rel (0) target = $region9
  $region8: #{_lambda_.120} parent=0 // pred_region
    _
  $region9: #{_lambda_.120} parent=0 // pred_fallthru
    _
  %v15 = vld [vmem:[%s0] sm:$0xff]
  %v16 = vld [vmem:[%s1] sm:$0xf]
  %v17 = vld [vmem:[%s1 + $0x4] sm:$0xf]
  %v18 = vld [vmem:[%s1 + $0x8] sm:$0xf]
  %v19 = vld [vmem:[%s1 + $0xc] sm:$0xf]
  %v20 = vld [vmem:[%s1 + $0x10] sm:$0xf]
  %v21 = vld [vmem:[%s1 + $0x14] sm:$0xf]
  %v22 = vld [vmem:[%s1 + $0x18] sm:$0xf]
  %v23 = vld [vmem:[%s1 + $0x1c] sm:$0xf]
  %v24 = vld [vmem:[%s1 + $0x20] sm:$0xf]
  %v25 = vld [vmem:[%s1 + $0x24] sm:$0xf]
  %v26 = vld [vmem:[%s1 + $0x28] sm:$0xf]
  %v27 = vld [vmem:[%s1 + $0x2c] sm:$0xf]
  %v28 = vld [vmem:[%s1 + $0x30] sm:$0xf]
  %v29 = vld [vmem:[%s1 + $0x34] sm:$0xf]
  %v30 = vld [vmem:[%s1 + $0x38] sm:$0xf]
  %v31 = vld [vmem:[%s1 + $0x3c] sm:$0xf]
  %v32 = vld [vmem:[%s1 + $0x40] sm:$0xf]
  %v33 = vld [vmem:[%s1 + $0x44] sm:$0xf]
  %v35 = vunpack.c.l.b16 %v15
  %v36 = vunpack.c.h.b16 %v15
  %v37 = vpack.c.b16 %v35, %v35
  %v38 = vpack.c.b16 %v36, %v36
  %v58 = vunpack.c.l.b16 %v16
  %v59 = vunpack.c.l.b16 %v17
  %v60 = vunpack.c.l.b16 %v18
  %v61 = vunpack.c.l.b16 %v19
  %v62 = vunpack.c.l.b16 %v20
  %v63 = vunpack.c.l.b16 %v21
  %v64 = vunpack.c.l.b16 %v22
  %v65 = vunpack.c.l.b16 %v23
  %v66 = vunpack.c.l.b16 %v24
  %v67 = vunpack.c.l.b16 %v25
  %v68 = vunpack.c.l.b16 %v26
  %v69 = vunpack.c.l.b16 %v27
  %v70 = vunpack.c.l.b16 %v28
  %v71 = vunpack.c.l.b16 %v29
  %v72 = vunpack.c.l.b16 %v30
  %v73 = vunpack.c.l.b16 %v31
  %v74 = vunpack.c.l.b16 %v32
  %v75 = vunpack.c.l.b16 %v33
  %v76 = vpack.c.b16 %v59, %v58
  %v77 = vpack.c.b16 %v61, %v60
  %v78 = vpack.c.b16 %v63, %v62
  %v79 = vpack.c.b16 %v65, %v64
  %v80 = vpack.c.b16 %v67, %v66
  %v81 = vpack.c.b16 %v69, %v68
  %v82 = vpack.c.b16 %v71, %v70
  %v83 = vpack.c.b16 %v73, %v72
  %v84 = vpack.c.b16 %v75, %v74
  %vm94 = vcmask 130048
  %v96 = vsel %vm94, %v38, 0
  %98 = vmatpush.bf16.msra.mxu0 %v83
  %99 = vmatpush.bf16.msra.mxu0 %v82
  %100 = vmatpush.bf16.msra.mxu0 %v81
  %101 = vmatpush.bf16.msra.mxu0 %v80
  %102 = vmatpush.bf16.msra.mxu0 %v79
  %103 = vmatpush.bf16.msra.mxu0 %v78
  %104 = vmatpush.bf16.msra.mxu0 %v77
  %105 = vmatpush.bf16.msra.mxu0 %v76
  %106 = vmatmul.bf16.gmra.mxu0 %v37
  %v107 = vpop.f32.mrf.mxu0
  %v108 = vadd.f32 0.0, %v107
  %v109 = vpop.f32.mrf.mxu0
  %110 = vdwg.mxu0
  %111 = vmatpush.bf16.msra.mxu0 0
  %112 = vmatpush.bf16.msra.mxu0 0
  %113 = vmatpush.bf16.msra.mxu0 0
  %114 = vmatpush.bf16.msra.mxu0 0
  %115 = vmatpush.bf16.msra.mxu0 0
  %116 = vmatpush.bf16.msra.mxu0 0
  %117 = vmatpush.bf16.msra.mxu0 0
  %118 = vmatpush.bf16.msra.mxu0 %v84
  %119 = vmatmul.bf16.gmra.mxu0 %v96
  %v120 = vpop.f32.mrf.mxu0
  %v121 = vadd.f32 %v108, %v120
  %v122 = vpop.f32.mrf.mxu0
  %123 = vdwg.mxu0
  %124 = vst.msk [vmem:[%s2] sm:$0xff] %vm94, %v121
  %v125 = vld [vmem:[%s2] sm:$0xff]
  %v126 = vsel %vm94, %v125, 0.0
  %v127 = vrot.slane %v126, 4
  %v128 = vadd.f32 %v126, %v127
  %v129 = vrot.slane %v128, 2
  %v130 = vadd.f32 %v128, %v129
  %v131 = vrot.slane %v130, 1
  %v132 = vadd.f32 %v130, %v131
  %vm133 = vcmask 122880
  %134 = vst.msk [vmem:[%s3] sm:$0x1] %vm133, %v132
  %v135 = vmul.f32 %v125, %v125
  %v136 = vsel %vm94, %v135, 0.0
  %v137 = vrot.slane %v136, 4
  %v138 = vadd.f32 %v136, %v137
  %v139 = vrot.slane %v138, 2
  %v140 = vadd.f32 %v138, %v139
  %v141 = vrot.slane %v140, 1
  %v142 = vadd.f32 %v140, %v141
  %143 = vst.msk [vmem:[%s4] sm:$0x1] %vm133, %v142
  // Predicated region
  $region10: #{_lambda_.120} parent=0 // pred_check
    _
  $region11: #{_lambda_.120} parent=0 // pred_check_branch
    %145 = sbr.rel (0) target = $region13
  $region12: #{_lambda_.120} parent=0 // pred_region
    _
  $region13: #{_lambda_.120} parent=0 // pred_fallthru
    _
  // Predicated region
  $region14: #{_lambda_.120} parent=0 // pred_check
    _
  $region15: #{_lambda_.120} parent=0 // pred_check_branch
    %147 = sbr.rel (0) target = $region17
  $region16: #{_lambda_.120} parent=0 // pred_region
    _
  $region17: #{_lambda_.120} parent=0 // pred_fallthru
    _
  // Predicated region
  $region18: #{_lambda_.120} parent=0 // pred_check
    _
  $region19: #{_lambda_.120} parent=0 // pred_check_branch
    %149 = sbr.rel (0) target = $region21
  $region20: #{_lambda_.120} parent=0 // pred_region
    _
  $region21: #{_lambda_.120} parent=0 // pred_fallthru
    _
  // Predicated region
  $region22: #{_lambda_.120} parent=0 // pred_check
    _
  $region23: #{_lambda_.120} parent=0 // pred_check_branch
    %151 = sbr.rel (0) target = $region25
  $region24: #{_lambda_.120} parent=0 // pred_region
    _
  $region25: #{_lambda_.120} parent=0 // pred_fallthru
    _
  // Predicated region
  $region26: #{_lambda_.120} parent=0 // pred_check
    _
  $region27: #{_lambda_.120} parent=0 // pred_check_branch
    %153 = sbr.rel (0) target = $region29
  $region28: #{_lambda_.120} parent=0 // pred_region
    _
  $region29: #{_lambda_.120} parent=0 // pred_fallthru
    _
  // Predicated region
  $region30: #{_lambda_.120} parent=0 // pred_check
    _
  $region31: #{_lambda_.120} parent=0 // pred_check_branch
    %155 = sbr.rel (0) target = $region33
  $region32: #{_lambda_.120} parent=0 // pred_region
    _
  $region33: #{_lambda_.120} parent=0 // pred_fallthru
    _

// kernel: _lambda_.122
$region0: #{_lambda_.122}
  #allocation0 [shape = 'u32[]', space=smem, size = 0x4, offset = 0x4, fixed_abs, tag = 'smem constant byte address 0x4 - core index']
  #allocation1 [shape = 'u32[72,128]{1,0:T(1,128)}', space=vmem, size = 0x9000, scoped, tag = 'internal scratch']
  %s0 = inlined_call_operand.vmem [shape: bf16[8,16], index: 0, kind: input, shape index: {}]
  %s1 = inlined_call_operand.vmem [shape: bf16[16,64], index: 1, kind: input, shape index: {}]
  %s2 = inlined_call_operand.vmem [shape: f32[8,64], index: 2, kind: output, shape index: {0}]
  %s3 = inlined_call_operand.vmem [shape: f32[1,1,64], index: 3, kind: output, shape index: {1}]
  %s4 = inlined_call_operand.vmem [shape: f32[1,1,64], index: 4, kind: output, shape index: {2}]
  %5 = xla_tuple %s2, %s3, %s4
  %s6 = sld [smem:[#allocation0]]
  $region34: #{_lambda_.122} parent=0
    _
  %s8 = ssub.s32 1, %s6
  %s9 = scalar_select 0, %s8, %s6
  // Predicated region
  $region2: #{_lambda_.122} parent=0 // pred_check
    _
  $region3: #{_lambda_.122} parent=0 // pred_check_branch
    %11 = sbr.rel (0) target = $region5
  $region4: #{_lambda_.122} parent=0 // pred_region
    _
  $region5: #{_lambda_.122} parent=0 // pred_fallthru
    _
  // Predicated region
  $region6: #{_lambda_.122} parent=0 // pred_check
    _
  $region7: #{_lambda_.122} parent=0 // pred_check_branch
    %13 = sbr.rel (0) target = $region9
  $region8: #{_lambda_.122} parent=0 // pred_region
    _
  $region9: #{_lambda_.122} parent=0 // pred_fallthru
    _
  %v15 = vld [vmem:[%s0] sm:$0xf]
  %v16 = vld [vmem:[%s1] sm:$0xf]
  %v17 = vld [vmem:[%s1 + $0x4] sm:$0xf]
  %v20 = vunpack.c.l.b16 %v16
  %v21 = vunpack.c.l.b16 %v17
  %v22 = vpack.c.b16 %v21, %v20
  %vm24 = vcmask 130048
  %v26 = vsel %vm24, %v15, 0
  %28 = vmatpush.bf16.msra.mxu0 0
  %29 = vmatpush.bf16.msra.mxu0 0
  %30 = vmatpush.bf16.msra.mxu0 0
  %31 = vmatpush.bf16.msra.mxu0 0
  %32 = vmatpush.bf16.msra.mxu0 0
  %33 = vmatpush.bf16.msra.mxu0 0
  %34 = vmatpush.bf16.msra.mxu0 0
  %35 = vmatpush.bf16.msra.mxu0 %v22
  %36 = vmatmul.bf16.gmra.mxu0 %v26
  %v37 = vpop.f32.mrf.mxu0
  %v38 = vadd.f32 0.0, %v37
  %v39 = vpop.f32.mrf.mxu0
  %40 = vdwg.mxu0
  %vm41 = vcmask 523264
  %42 = vst.msk [vmem:[%s2] sm:$0xff] %vm41, %v38
  %v43 = vld [vmem:[%s2] sm:$0xff]
  %v44 = vsel %vm41, %v43, 0.0
  %v45 = vrot.slane %v44, 4
  %v46 = vadd.f32 %v44, %v45
  %v47 = vrot.slane %v46, 2
  %v48 = vadd.f32 %v46, %v47
  %v49 = vrot.slane %v48, 1
  %v50 = vadd.f32 %v48, %v49
  %vm51 = vcmask 516096
  %52 = vst.msk [vmem:[%s3] sm:$0x1] %vm51, %v50
  %v53 = vmul.f32 %v43, %v43
  %v54 = vsel %vm41, %v53, 0.0
  %v55 = vrot.slane %v54, 4
  %v56 = vadd.f32 %v54, %v55
  %v57 = vrot.slane %v56, 2
  %v58 = vadd.f32 %v56, %v57
  %v59 = vrot.slane %v58, 1
  %v60 = vadd.f32 %v58, %v59
  %61 = vst.msk [vmem:[%s4] sm:$0x1] %vm51, %v60
  // Predicated region
  $region10: #{_lambda_.122} parent=0 // pred_check
    _
  $region11: #{_lambda_.122} parent=0 // pred_check_branch
    %63 = sbr.rel (0) target = $region13
  $region12: #{_lambda_.122} parent=0 // pred_region
    _
  $region13: #{_lambda_.122} parent=0 // pred_fallthru
    _
  // Predicated region
  $region14: #{_lambda_.122} parent=0 // pred_check
    _
  $region15: #{_lambda_.122} parent=0 // pred_check_branch
    %65 = sbr.rel (0) target = $region17
  $region16: #{_lambda_.122} parent=0 // pred_region
    _
  $region17: #{_lambda_.122} parent=0 // pred_fallthru
    _
  // Predicated region
  $region18: #{_lambda_.122} parent=0 // pred_check
    _
  $region19: #{_lambda_.122} parent=0 // pred_check_branch
    %67 = sbr.rel (0) target = $region21
  $region20: #{_lambda_.122} parent=0 // pred_region
    _
  $region21: #{_lambda_.122} parent=0 // pred_fallthru
    _
  // Predicated region
  $region22: #{_lambda_.122} parent=0 // pred_check
    _
  $region23: #{_lambda_.122} parent=0 // pred_check_branch
    %69 = sbr.rel (0) target = $region25
  $region24: #{_lambda_.122} parent=0 // pred_region
    _
  $region25: #{_lambda_.122} parent=0 // pred_fallthru
    _
  // Predicated region
  $region26: #{_lambda_.122} parent=0 // pred_check
    _
  $region27: #{_lambda_.122} parent=0 // pred_check_branch
    %71 = sbr.rel (0) target = $region29
  $region28: #{_lambda_.122} parent=0 // pred_region
    _
  $region29: #{_lambda_.122} parent=0 // pred_fallthru
    _
  // Predicated region
  $region30: #{_lambda_.122} parent=0 // pred_check
    _
  $region31: #{_lambda_.122} parent=0 // pred_check_branch
    %73 = sbr.rel (0) target = $region33
  $region32: #{_lambda_.122} parent=0 // pred_region
    _
  $region33: #{_lambda_.122} parent=0 // pred_fallthru
    _

// kernel: _lambda_.123
$region0: #{_lambda_.123}
  #allocation0 [shape = 'u32[]', space=smem, size = 0x4, offset = 0x4, fixed_abs, tag = 'smem constant byte address 0x4 - core index']
  #allocation1 [shape = 'u32[72,128]{1,0:T(1,128)}', space=vmem, size = 0x9000, scoped, tag = 'internal scratch']
  %s0 = inlined_call_operand.vmem [shape: f32[8,64], index: 0, kind: input, shape index: {}]
  %s1 = inlined_call_operand.vmem [shape: f32[1,64], index: 1, kind: input, shape index: {}]
  %s2 = inlined_call_operand.vmem [shape: f32[1,64], index: 2, kind: input, shape index: {}]
  %s3 = inlined_call_operand.vmem [shape: bf16[8,64], index: 3, kind: output, shape index: {}]
  %s4 = sld [smem:[#allocation0]]
  $region22: #{_lambda_.123} parent=0
    _
  %s6 = ssub.s32 1, %s4
  %s7 = scalar_select 0, %s6, %s4
  // Predicated region
  $region2: #{_lambda_.123} parent=0 // pred_check
    _
  $region3: #{_lambda_.123} parent=0 // pred_check_branch
    %9 = sbr.rel (0) target = $region5
  $region4: #{_lambda_.123} parent=0 // pred_region
    _
  $region5: #{_lambda_.123} parent=0 // pred_fallthru
    _
  // Predicated region
  $region6: #{_lambda_.123} parent=0 // pred_check
    _
  $region7: #{_lambda_.123} parent=0 // pred_check_branch
    %11 = sbr.rel (0) target = $region9
  $region8: #{_lambda_.123} parent=0 // pred_region
    _
  $region9: #{_lambda_.123} parent=0 // pred_fallthru
    _
  // Predicated region
  $region10: #{_lambda_.123} parent=0 // pred_check
    _
  $region11: #{_lambda_.123} parent=0 // pred_check_branch
    %13 = sbr.rel (0) target = $region13
  $region12: #{_lambda_.123} parent=0 // pred_region
    _
  $region13: #{_lambda_.123} parent=0 // pred_fallthru
    _
  %v14 = vld [vmem:[%s0] sm:$0xff]
  %v15 = vld [vmem:[%s1] sm:$0x1]
  %v17 = vperm.slane %v15, 0
  %v19 = vmul.f32 %v14, %v17
  %v20 = vld [vmem:[%s2] sm:$0x1]
  %v22 = vperm.slane %v20, 0
  %v24 = vadd.f32 %v19, %v22
  %v25 = vmax.f32 %v24, 0.0
  %v26 = vpack.c.bf16 %v25, %v25
  %vm27 = vcmask 519168
  %28 = vst.msk [vmem:[%s3] sm:$0xf] %vm27, %v26
  // Predicated region
  $region14: #{_lambda_.123} parent=0 // pred_check
    _
  $region15: #{_lambda_.123} parent=0 // pred_check_branch
    %30 = sbr.rel (0) target = $region17
  $region16: #{_lambda_.123} parent=0 // pred_region
    _
  $region17: #{_lambda_.123} parent=0 // pred_fallthru
    _
  // Predicated region
  $region18: #{_lambda_.123} parent=0 // pred_check
    _
  $region19: #{_lambda_.123} parent=0 // pred_check_branch
    %32 = sbr.rel (0) target = $region21
  $region20: #{_lambda_.123} parent=0 // pred_region
    _
  $region21: #{_lambda_.123} parent=0 // pred_fallthru
    _

// kernel: _lambda_.124
$region0: #{_lambda_.124}
  #allocation0 [shape = 'u32[]', space=smem, size = 0x4, offset = 0x4, fixed_abs, tag = 'smem constant byte address 0x4 - core index']
  #allocation1 [shape = 'u32[72,128]{1,0:T(1,128)}', space=vmem, size = 0x9000, scoped, tag = 'internal scratch']
  %s0 = inlined_call_operand.vmem [shape: bf16[8,64], index: 0, kind: input, shape index: {}]
  %s1 = inlined_call_operand.vmem [shape: bf16[64,16], index: 1, kind: input, shape index: {}]
  %s2 = inlined_call_operand.vmem [shape: f32[8,16], index: 2, kind: output, shape index: {0}]
  %s3 = inlined_call_operand.vmem [shape: f32[1,1,16], index: 3, kind: output, shape index: {1}]
  %s4 = inlined_call_operand.vmem [shape: f32[1,1,16], index: 4, kind: output, shape index: {2}]
  %5 = xla_tuple %s2, %s3, %s4
  %s6 = sld [smem:[#allocation0]]
  $region34: #{_lambda_.124} parent=0
    _
  %s8 = ssub.s32 1, %s6
  %s9 = scalar_select 0, %s8, %s6
  // Predicated region
  $region2: #{_lambda_.124} parent=0 // pred_check
    _
  $region3: #{_lambda_.124} parent=0 // pred_check_branch
    %11 = sbr.rel (0) target = $region5
  $region4: #{_lambda_.124} parent=0 // pred_region
    _
  $region5: #{_lambda_.124} parent=0 // pred_fallthru
    _
  // Predicated region
  $region6: #{_lambda_.124} parent=0 // pred_check
    _
  $region7: #{_lambda_.124} parent=0 // pred_check_branch
    %13 = sbr.rel (0) target = $region9
  $region8: #{_lambda_.124} parent=0 // pred_region
    _
  $region9: #{_lambda_.124} parent=0 // pred_fallthru
    _
  %v15 = vld [vmem:[%s0] sm:$0xf]
  %v16 = vld [vmem:[%s1] sm:$0xf]
  %v17 = vld [vmem:[%s1 + $0x4] sm:$0xf]
  %v18 = vld [vmem:[%s1 + $0x8] sm:$0xf]
  %v19 = vld [vmem:[%s1 + $0xc] sm:$0xf]
  %v20 = vld [vmem:[%s1 + $0x10] sm:$0xf]
  %v21 = vld [vmem:[%s1 + $0x14] sm:$0xf]
  %v22 = vld [vmem:[%s1 + $0x18] sm:$0xf]
  %v23 = vld [vmem:[%s1 + $0x1c] sm:$0xf]
  %v32 = vunpack.c.l.b16 %v16
  %v33 = vunpack.c.l.b16 %v17
  %v34 = vunpack.c.l.b16 %v18
  %v35 = vunpack.c.l.b16 %v19
  %v36 = vunpack.c.l.b16 %v20
  %v37 = vunpack.c.l.b16 %v21
  %v38 = vunpack.c.l.b16 %v22
  %v39 = vunpack.c.l.b16 %v23
  %v40 = vpack.c.b16 %v33, %v32
  %v41 = vpack.c.b16 %v35, %v34
  %v42 = vpack.c.b16 %v37, %v36
  %v43 = vpack.c.b16 %v39, %v38
  %vm48 = vcmask 523264
  %v50 = vsel %vm48, %v15, 0
  %52 = vmatpush.bf16.msra.mxu0 0
  %53 = vmatpush.bf16.msra.mxu0 0
  %54 = vmatpush.bf16.msra.mxu0 0
  %55 = vmatpush.bf16.msra.mxu0 0
  %56 = vmatpush.bf16.msra.mxu0 %v43
  %57 = vmatpush.bf16.msra.mxu0 %v42
  %58 = vmatpush.bf16.msra.mxu0 %v41
  %59 = vmatpush.bf16.msra.mxu0 %v40
  %60 = vmatmul.bf16.gmra.mxu0 %v50
  %v61 = vpop.f32.mrf.mxu0
  %v62 = vadd.f32 0.0, %v61
  %v63 = vpop.f32.mrf.mxu0
  %64 = vdwg.mxu0
  %vm65 = vcmask 130048
  %66 = vst.msk [vmem:[%s2] sm:$0xff] %vm65, %v62
  %v67 = vld [vmem:[%s2] sm:$0xff]
  %v68 = vsel %vm65, %v67, 0.0
  %v69 = vrot.slane %v68, 4
  %v70 = vadd.f32 %v68, %v69
  %v71 = vrot.slane %v70, 2
  %v72 = vadd.f32 %v70, %v71
  %v73 = vrot.slane %v72, 1
  %v74 = vadd.f32 %v72, %v73
  %vm75 = vcmask 122880
  %76 = vst.msk [vmem:[%s3] sm:$0x1] %vm75, %v74
  %v77 = vmul.f32 %v67, %v67
  %v78 = vsel %vm65, %v77, 0.0
  %v79 = vrot.slane %v78, 4
  %v80 = vadd.f32 %v78, %v79
  %v81 = vrot.slane %v80, 2
  %v82 = vadd.f32 %v80, %v81
  %v83 = vrot.slane %v82, 1
  %v84 = vadd.f32 %v82, %v83
  %85 = vst.msk [vmem:[%s4] sm:$0x1] %vm75, %v84
  // Predicated region
  $region10: #{_lambda_.124} parent=0 // pred_check
    _
  $region11: #{_lambda_.124} parent=0 // pred_check_branch
    %87 = sbr.rel (0) target = $region13
  $region12: #{_lambda_.124} parent=0 // pred_region
    _
  $region13: #{_lambda_.124} parent=0 // pred_fallthru
    _
  // Predicated region
  $region14: #{_lambda_.124} parent=0 // pred_check
    _
  $region15: #{_lambda_.124} parent=0 // pred_check_branch
    %89 = sbr.rel (0) target = $region17
  $region16: #{_lambda_.124} parent=0 // pred_region
    _
  $region17: #{_lambda_.124} parent=0 // pred_fallthru
    _
  // Predicated region
  $region18: #{_lambda_.124} parent=0 // pred_check
    _
  $region19: #{_lambda_.124} parent=0 // pred_check_branch
    %91 = sbr.rel (0) target = $region21
  $region20: #{_lambda_.124} parent=0 // pred_region
    _
  $region21: #{_lambda_.124} parent=0 // pred_fallthru
    _
  // Predicated region
  $region22: #{_lambda_.124} parent=0 // pred_check
    _
  $region23: #{_lambda_.124} parent=0 // pred_check_branch
    %93 = sbr.rel (0) target = $region25
  $region24: #{_lambda_.124} parent=0 // pred_region
    _
  $region25: #{_lambda_.124} parent=0 // pred_fallthru
    _
  // Predicated region
  $region26: #{_lambda_.124} parent=0 // pred_check
    _
  $region27: #{_lambda_.124} parent=0 // pred_check_branch
    %95 = sbr.rel (0) target = $region29
  $region28: #{_lambda_.124} parent=0 // pred_region
    _
  $region29: #{_lambda_.124} parent=0 // pred_fallthru
    _
  // Predicated region
  $region30: #{_lambda_.124} parent=0 // pred_check
    _
  $region31: #{_lambda_.124} parent=0 // pred_check_branch
    %97 = sbr.rel (0) target = $region33
  $region32: #{_lambda_.124} parent=0 // pred_region
    _
  $region33: #{_lambda_.124} parent=0 // pred_fallthru
    _

// kernel: _lambda_.143
$region0: #{_lambda_.143}
  #allocation0 [shape = 'u32[]', space=smem, size = 0x4, offset = 0x4, fixed_abs, tag = 'smem constant byte address 0x4 - core index']
  #allocation1 [shape = 'u32[72,128]{1,0:T(1,128)}', space=vmem, size = 0x9000, scoped, tag = 'internal scratch']
  %s0 = inlined_call_operand.vmem [shape: f32[8,32], index: 0, kind: input, shape index: {}]
  %s1 = inlined_call_operand.vmem [shape: f32[1,32], index: 1, kind: input, shape index: {}]
  %s2 = inlined_call_operand.vmem [shape: f32[1,32], index: 2, kind: input, shape index: {}]
  %s3 = inlined_call_operand.vmem [shape: bf16[8,32], index: 3, kind: output, shape index: {}]
  %s4 = sld [smem:[#allocation0]]
  $region22: #{_lambda_.143} parent=0
    _
  %s6 = ssub.s32 1, %s4
  %s7 = scalar_select 0, %s6, %s4
  // Predicated region
  $region2: #{_lambda_.143} parent=0 // pred_check
    _
  $region3: #{_lambda_.143} parent=0 // pred_check_branch
    %9 = sbr.rel (0) target = $region5
  $region4: #{_lambda_.143} parent=0 // pred_region
    _
  $region5: #{_lambda_.143} parent=0 // pred_fallthru
    _
  // Predicated region
  $region6: #{_lambda_.143} parent=0 // pred_check
    _
  $region7: #{_lambda_.143} parent=0 // pred_check_branch
    %11 = sbr.rel (0) target = $region9
  $region8: #{_lambda_.143} parent=0 // pred_region
    _
  $region9: #{_lambda_.143} parent=0 // pred_fallthru
    _
  // Predicated region
  $region10: #{_lambda_.143} parent=0 // pred_check
    _
  $region11: #{_lambda_.143} parent=0 // pred_check_branch
    %13 = sbr.rel (0) target = $region13
  $region12: #{_lambda_.143} parent=0 // pred_region
    _
  $region13: #{_lambda_.143} parent=0 // pred_fallthru
    _
  %v14 = vld [vmem:[%s0] sm:$0xff]
  %v15 = vld [vmem:[%s1] sm:$0x1]
  %v17 = vperm.slane %v15, 0
  %v19 = vmul.f32 %v14, %v17
  %v20 = vld [vmem:[%s2] sm:$0x1]
  %v22 = vperm.slane %v20, 0
  %v24 = vadd.f32 %v19, %v22
  %v25 = vmax.f32 %v24, 0.0
  %v26 = vpack.c.bf16 %v25, %v25
  %vm27 = vcmask 257024
  %28 = vst.msk [vmem:[%s3] sm:$0xf] %vm27, %v26
  // Predicated region
  $region14: #{_lambda_.143} parent=0 // pred_check
    _
  $region15: #{_lambda_.143} parent=0 // pred_check_branch
    %30 = sbr.rel (0) target = $region17
  $region16: #{_lambda_.143} parent=0 // pred_region
    _
  $region17: #{_lambda_.143} parent=0 // pred_fallthru
    _
  // Predicated region
  $region18: #{_lambda_.143} parent=0 // pred_check
    _
  $region19: #{_lambda_.143} parent=0 // pred_check_branch
    %32 = sbr.rel (0) target = $region21
  $region20: #{_lambda_.143} parent=0 // pred_region
    _
  $region21: #{_lambda_.143} parent=0 // pred_fallthru
    _

// kernel: _lambda_.142
$region0: #{_lambda_.142}
  #allocation0 [shape = 'u32[]', space=smem, size = 0x4, offset = 0x4, fixed_abs, tag = 'smem constant byte address 0x4 - core index']
  #allocation1 [shape = 'u32[72,128]{1,0:T(1,128)}', space=vmem, size = 0x9000, scoped, tag = 'internal scratch']
  %s0 = inlined_call_operand.vmem [shape: bf16[8,64], index: 0, kind: input, shape index: {}]
  %s1 = inlined_call_operand.vmem [shape: bf16[64,32], index: 1, kind: input, shape index: {}]
  %s2 = inlined_call_operand.vmem [shape: f32[8,32], index: 2, kind: output, shape index: {0}]
  %s3 = inlined_call_operand.vmem [shape: f32[1,1,32], index: 3, kind: output, shape index: {1}]
  %s4 = inlined_call_operand.vmem [shape: f32[1,1,32], index: 4, kind: output, shape index: {2}]
  %5 = xla_tuple %s2, %s3, %s4
  %s6 = sld [smem:[#allocation0]]
  $region34: #{_lambda_.142} parent=0
    _
  %s8 = ssub.s32 1, %s6
  %s9 = scalar_select 0, %s8, %s6
  // Predicated region
  $region2: #{_lambda_.142} parent=0 // pred_check
    _
  $region3: #{_lambda_.142} parent=0 // pred_check_branch
    %11 = sbr.rel (0) target = $region5
  $region4: #{_lambda_.142} parent=0 // pred_region
    _
  $region5: #{_lambda_.142} parent=0 // pred_fallthru
    _
  // Predicated region
  $region6: #{_lambda_.142} parent=0 // pred_check
    _
  $region7: #{_lambda_.142} parent=0 // pred_check_branch
    %13 = sbr.rel (0) target = $region9
  $region8: #{_lambda_.142} parent=0 // pred_region
    _
  $region9: #{_lambda_.142} parent=0 // pred_fallthru
    _
  %v15 = vld [vmem:[%s0] sm:$0xf]
  %v16 = vld [vmem:[%s1] sm:$0xf]
  %v17 = vld [vmem:[%s1 + $0x4] sm:$0xf]
  %v18 = vld [vmem:[%s1 + $0x8] sm:$0xf]
  %v19 = vld [vmem:[%s1 + $0xc] sm:$0xf]
  %v20 = vld [vmem:[%s1 + $0x10] sm:$0xf]
  %v21 = vld [vmem:[%s1 + $0x14] sm:$0xf]
  %v22 = vld [vmem:[%s1 + $0x18] sm:$0xf]
  %v23 = vld [vmem:[%s1 + $0x1c] sm:$0xf]
  %v32 = vunpack.c.l.b16 %v16
  %v33 = vunpack.c.l.b16 %v17
  %v34 = vunpack.c.l.b16 %v18
  %v35 = vunpack.c.l.b16 %v19
  %v36 = vunpack.c.l.b16 %v20
  %v37 = vunpack.c.l.b16 %v21
  %v38 = vunpack.c.l.b16 %v22
  %v39 = vunpack.c.l.b16 %v23
  %v40 = vpack.c.b16 %v33, %v32
  %v41 = vpack.c.b16 %v35, %v34
  %v42 = vpack.c.b16 %v37, %v36
  %v43 = vpack.c.b16 %v39, %v38
  %vm48 = vcmask 523264
  %v50 = vsel %vm48, %v15, 0
  %52 = vmatpush.bf16.msra.mxu0 0
  %53 = vmatpush.bf16.msra.mxu0 0
  %54 = vmatpush.bf16.msra.mxu0 0
  %55 = vmatpush.bf16.msra.mxu0 0
  %56 = vmatpush.bf16.msra.mxu0 %v43
  %57 = vmatpush.bf16.msra.mxu0 %v42
  %58 = vmatpush.bf16.msra.mxu0 %v41
  %59 = vmatpush.bf16.msra.mxu0 %v40
  %60 = vmatmul.bf16.gmra.mxu0 %v50
  %v61 = vpop.f32.mrf.mxu0
  %v62 = vadd.f32 0.0, %v61
  %v63 = vpop.f32.mrf.mxu0
  %64 = vdwg.mxu0
  %vm65 = vcmask 261120
  %66 = vst.msk [vmem:[%s2] sm:$0xff] %vm65, %v62
  %v67 = vld [vmem:[%s2] sm:$0xff]
  %v68 = vsel %vm65, %v67, 0.0
  %v69 = vrot.slane %v68, 4
  %v70 = vadd.f32 %v68, %v69
  %v71 = vrot.slane %v70, 2
  %v72 = vadd.f32 %v70, %v71
  %v73 = vrot.slane %v72, 1
  %v74 = vadd.f32 %v72, %v73
  %vm75 = vcmask 253952
  %76 = vst.msk [vmem:[%s3] sm:$0x1] %vm75, %v74
  %v77 = vmul.f32 %v67, %v67
  %v78 = vsel %vm65, %v77, 0.0
  %v79 = vrot.slane %v78, 4
  %v80 = vadd.f32 %v78, %v79
  %v81 = vrot.slane %v80, 2
  %v82 = vadd.f32 %v80, %v81
  %v83 = vrot.slane %v82, 1
  %v84 = vadd.f32 %v82, %v83
  %85 = vst.msk [vmem:[%s4] sm:$0x1] %vm75, %v84
  // Predicated region
  $region10: #{_lambda_.142} parent=0 // pred_check
    _
  $region11: #{_lambda_.142} parent=0 // pred_check_branch
    %87 = sbr.rel (0) target = $region13
  $region12: #{_lambda_.142} parent=0 // pred_region
    _
  $region13: #{_lambda_.142} parent=0 // pred_fallthru
    _
  // Predicated region
  $region14: #{_lambda_.142} parent=0 // pred_check
    _
  $region15: #{_lambda_.142} parent=0 // pred_check_branch
    %89 = sbr.rel (0) target = $region17
  $region16: #{_lambda_.142} parent=0 // pred_region
    _
  $region17: #{_lambda_.142} parent=0 // pred_fallthru
    _
  // Predicated region
  $region18: #{_lambda_.142} parent=0 // pred_check
    _
  $region19: #{_lambda_.142} parent=0 // pred_check_branch
    %91 = sbr.rel (0) target = $region21
  $region20: #{_lambda_.142} parent=0 // pred_region
    _
  $region21: #{_lambda_.142} parent=0 // pred_fallthru
    _
  // Predicated region
  $region22: #{_lambda_.142} parent=0 // pred_check
    _
  $region23: #{_lambda_.142} parent=0 // pred_check_branch
    %93 = sbr.rel (0) target = $region25
  $region24: #{_lambda_.142} parent=0 // pred_region
    _
  $region25: #{_lambda_.142} parent=0 // pred_fallthru
    _
  // Predicated region
  $region26: #{_lambda_.142} parent=0 // pred_check
    _
  $region27: #{_lambda_.142} parent=0 // pred_check_branch
    %95 = sbr.rel (0) target = $region29
  $region28: #{_lambda_.142} parent=0 // pred_region
    _
  $region29: #{_lambda_.142} parent=0 // pred_fallthru
    _
  // Predicated region
  $region30: #{_lambda_.142} parent=0 // pred_check
    _
  $region31: #{_lambda_.142} parent=0 // pred_check_branch
    %97 = sbr.rel (0) target = $region33
  $region32: #{_lambda_.142} parent=0 // pred_region
    _
  $region33: #{_lambda_.142} parent=0 // pred_fallthru
    _

// kernel: _lambda_.144
$region0: #{_lambda_.144}
  #allocation0 [shape = 'u32[]', space=smem, size = 0x4, offset = 0x4, fixed_abs, tag = 'smem constant byte address 0x4 - core index']
  #allocation1 [shape = 'u32[72,128]{1,0:T(1,128)}', space=vmem, size = 0x9000, scoped, tag = 'internal scratch']
  %s0 = inlined_call_operand.vmem [shape: bf16[2,288], index: 0, kind: input, shape index: {}]
  %s1 = inlined_call_operand.vmem [shape: bf16[288,32], index: 1, kind: input, shape index: {}]
  %s2 = inlined_call_operand.vmem [shape: f32[2,32], index: 2, kind: output, shape index: {0}]
  %s3 = inlined_call_operand.vmem [shape: f32[1,1,32], index: 3, kind: output, shape index: {1}]
  %s4 = inlined_call_operand.vmem [shape: f32[1,1,32], index: 4, kind: output, shape index: {2}]
  %5 = xla_tuple %s2, %s3, %s4
  %s6 = sld [smem:[#allocation0]]
  $region34: #{_lambda_.144} parent=0
    _
  %s8 = ssub.s32 1, %s6
  %s9 = scalar_select 0, %s8, %s6
  // Predicated region
  $region2: #{_lambda_.144} parent=0 // pred_check
    _
  $region3: #{_lambda_.144} parent=0 // pred_check_branch
    %11 = sbr.rel (0) target = $region5
  $region4: #{_lambda_.144} parent=0 // pred_region
    _
  $region5: #{_lambda_.144} parent=0 // pred_fallthru
    _
  // Predicated region
  $region6: #{_lambda_.144} parent=0 // pred_check
    _
  $region7: #{_lambda_.144} parent=0 // pred_check_branch
    %13 = sbr.rel (0) target = $region9
  $region8: #{_lambda_.144} parent=0 // pred_region
    _
  $region9: #{_lambda_.144} parent=0 // pred_fallthru
    _
  %v15 = vld [vmem:[%s0] sm:$0x7]
  %v16 = vld [vmem:[%s1] sm:$0xf]
  %v17 = vld [vmem:[%s1 + $0x4] sm:$0xf]
  %v18 = vld [vmem:[%s1 + $0x8] sm:$0xf]
  %v19 = vld [vmem:[%s1 + $0xc] sm:$0xf]
  %v20 = vld [vmem:[%s1 + $0x10] sm:$0xf]
  %v21 = vld [vmem:[%s1 + $0x14] sm:$0xf]
  %v22 = vld [vmem:[%s1 + $0x18] sm:$0xf]
  %v23 = vld [vmem:[%s1 + $0x1c] sm:$0xf]
  %v24 = vld [vmem:[%s1 + $0x20] sm:$0xf]
  %v25 = vld [vmem:[%s1 + $0x24] sm:$0xf]
  %v26 = vld [vmem:[%s1 + $0x28] sm:$0xf]
  %v27 = vld [vmem:[%s1 + $0x2c] sm:$0xf]
  %v28 = vld [vmem:[%s1 + $0x30] sm:$0xf]
  %v29 = vld [vmem:[%s1 + $0x34] sm:$0xf]
  %v30 = vld [vmem:[%s1 + $0x38] sm:$0xf]
  %v31 = vld [vmem:[%s1 + $0x3c] sm:$0xf]
  %v32 = vld [vmem:[%s1 + $0x40] sm:$0xf]
  %v33 = vld [vmem:[%s1 + $0x44] sm:$0xf]
  %v34 = vld [vmem:[%s1 + $0x48] sm:$0xf]
  %v35 = vld [vmem:[%s1 + $0x4c] sm:$0xf]
  %v36 = vld [vmem:[%s1 + $0x50] sm:$0xf]
  %v37 = vld [vmem:[%s1 + $0x54] sm:$0xf]
  %v38 = vld [vmem:[%s1 + $0x58] sm:$0xf]
  %v39 = vld [vmem:[%s1 + $0x5c] sm:$0xf]
  %v40 = vld [vmem:[%s1 + $0x60] sm:$0xf]
  %v41 = vld [vmem:[%s1 + $0x64] sm:$0xf]
  %v42 = vld [vmem:[%s1 + $0x68] sm:$0xf]
  %v43 = vld [vmem:[%s1 + $0x6c] sm:$0xf]
  %v44 = vld [vmem:[%s1 + $0x70] sm:$0xf]
  %v45 = vld [vmem:[%s1 + $0x74] sm:$0xf]
  %v46 = vld [vmem:[%s1 + $0x78] sm:$0xf]
  %v47 = vld [vmem:[%s1 + $0x7c] sm:$0xf]
  %v48 = vld [vmem:[%s1 + $0x80] sm:$0xf]
  %v49 = vld [vmem:[%s1 + $0x84] sm:$0xf]
  %v50 = vld [vmem:[%s1 + $0x88] sm:$0xf]
  %v51 = vld [vmem:[%s1 + $0x8c] sm:$0xf]
  %53 = vst [vmem:[#allocation1] ss:$9 sm:$0xff] %v15
  %v54 = vld [vmem:[#allocation1] sm:$0xff]
  %v55 = vld [vmem:[#allocation1 + $0x9] sm:$0xff]
  %v56 = vld [vmem:[#allocation1 + $0x12] sm:$0xff]
  %v95 = vunpack.c.l.b16 %v16
  %v96 = vunpack.c.l.b16 %v17
  %v97 = vunpack.c.l.b16 %v18
  %v98 = vunpack.c.l.b16 %v19
  %v99 = vunpack.c.l.b16 %v20
  %v100 = vunpack.c.l.b16 %v21
  %v101 = vunpack.c.l.b16 %v22
  %v102 = vunpack.c.l.b16 %v23
  %v103 = vunpack.c.l.b16 %v24
  %v104 = vunpack.c.l.b16 %v25
  %v105 = vunpack.c.l.b16 %v26
  %v106 = vunpack.c.l.b16 %v27
  %v107 = vunpack.c.l.b16 %v28
  %v108 = vunpack.c.l.b16 %v29
  %v109 = vunpack.c.l.b16 %v30
  %v110 = vunpack.c.l.b16 %v31
  %v111 = vunpack.c.l.b16 %v32
  %v112 = vunpack.c.l.b16 %v33
  %v113 = vunpack.c.l.b16 %v34
  %v114 = vunpack.c.l.b16 %v35
  %v115 = vunpack.c.l.b16 %v36
  %v116 = vunpack.c.l.b16 %v37
  %v117 = vunpack.c.l.b16 %v38
  %v118 = vunpack.c.l.b16 %v39
  %v119 = vunpack.c.l.b16 %v40
  %v120 = vunpack.c.l.b16 %v41
  %v121 = vunpack.c.l.b16 %v42
  %v122 = vunpack.c.l.b16 %v43
  %v123 = vunpack.c.l.b16 %v44
  %v124 = vunpack.c.l.b16 %v45
  %v125 = vunpack.c.l.b16 %v46
  %v126 = vunpack.c.l.b16 %v47
  %v127 = vunpack.c.l.b16 %v48
  %v128 = vunpack.c.l.b16 %v49
  %v129 = vunpack.c.l.b16 %v50
  %v130 = vunpack.c.l.b16 %v51
  %v131 = vpack.c.b16 %v96, %v95
  %v132 = vpack.c.b16 %v98, %v97
  %v133 = vpack.c.b16 %v100, %v99
  %v134 = vpack.c.b16 %v102, %v101
  %v135 = vpack.c.b16 %v104, %v103
  %v136 = vpack.c.b16 %v106, %v105
  %v137 = vpack.c.b16 %v108, %v107
  %v138 = vpack.c.b16 %v110, %v109
  %v139 = vpack.c.b16 %v112, %v111
  %v140 = vpack.c.b16 %v114, %v113
  %v141 = vpack.c.b16 %v116, %v115
  %v142 = vpack.c.b16 %v118, %v117
  %v143 = vpack.c.b16 %v120, %v119
  %v144 = vpack.c.b16 %v122, %v121
  %v145 = vpack.c.b16 %v124, %v123
  %v146 = vpack.c.b16 %v126, %v125
  %v147 = vpack.c.b16 %v128, %v127
  %v148 = vpack.c.b16 %v130, %v129
  %vm167 = vcmask 261120
  %v168 = vsel %vm167, %v56, 0
  %170 = vmatpush.bf16.msra.mxu0 %v138
  %171 = vmatpush.bf16.msra.mxu0 %v137
  %172 = vmatpush.bf16.msra.mxu0 %v136
  %173 = vmatpush.bf16.msra.mxu0 %v135
  %174 = vmatpush.bf16.msra.mxu0 %v134
  %175 = vmatpush.bf16.msra.mxu0 %v133
  %176 = vmatpush.bf16.msra.mxu0 %v132
  %177 = vmatpush.bf16.msra.mxu0 %v131
  %178 = vmatmul.bf16.gmra.mxu0 %v54
  %v179 = vpop.f32.mrf.mxu0
  %v180 = vadd.f32 0.0, %v179
  %v181 = vpop.f32.mrf.mxu0
  %182 = vdwg.mxu0
  %183 = vmatpush.bf16.msra.mxu0 %v146
  %184 = vmatpush.bf16.msra.mxu0 %v145
  %185 = vmatpush.bf16.msra.mxu0 %v144
  %186 = vmatpush.bf16.msra.mxu0 %v143
  %187 = vmatpush.bf16.msra.mxu0 %v142
  %188 = vmatpush.bf16.msra.mxu0 %v141
  %189 = vmatpush.bf16.msra.mxu0 %v140
  %190 = vmatpush.bf16.msra.mxu0 %v139
  %191 = vmatmul.bf16.gmra.mxu0 %v55
  %v192 = vpop.f32.mrf.mxu0
  %v193 = vadd.f32 %v180, %v192
  %v194 = vpop.f32.mrf.mxu0
  %195 = vdwg.mxu0
  %196 = vmatpush.bf16.msra.mxu0 0
  %197 = vmatpush.bf16.msra.mxu0 0
  %198 = vmatpush.bf16.msra.mxu0 0
  %199 = vmatpush.bf16.msra.mxu0 0
  %200 = vmatpush.bf16.msra.mxu0 0
  %201 = vmatpush.bf16.msra.mxu0 0
  %202 = vmatpush.bf16.msra.mxu0 %v148
  %203 = vmatpush.bf16.msra.mxu0 %v147
  %204 = vmatmul.bf16.gmra.mxu0 %v168
  %v205 = vpop.f32.mrf.mxu0
  %v206 = vadd.f32 %v193, %v205
  %v207 = vpop.f32.mrf.mxu0
  %208 = vdwg.mxu0
  %vm209 = vcmask 254976
  %210 = vst.msk [vmem:[%s2] sm:$0x3] %vm209, %v206
  %v211 = vld [vmem:[%s2] sm:$0x3]
  %v212 = vsel %vm209, %v211, 0.0
  %v213 = vrot.slane %v212, 4
  %v214 = vadd.f32 %v212, %v213
  %v215 = vrot.slane %v214, 2
  %v216 = vadd.f32 %v214, %v215
  %v217 = vrot.slane %v216, 1
  %v218 = vadd.f32 %v216, %v217
  %vm219 = vcmask 253952
  %220 = vst.msk [vmem:[%s3] sm:$0x1] %vm219, %v218
  %v221 = vmul.f32 %v211, %v211
  %v222 = vsel %vm209, %v221, 0.0
  %v223 = vrot.slane %v222, 4
  %v224 = vadd.f32 %v222, %v223
  %v225 = vrot.slane %v224, 2
  %v226 = vadd.f32 %v224, %v225
  %v227 = vrot.slane %v226, 1
  %v228 = vadd.f32 %v226, %v227
  %229 = vst.msk [vmem:[%s4] sm:$0x1] %vm219, %v228
  // Predicated region
  $region10: #{_lambda_.144} parent=0 // pred_check
    _
  $region11: #{_lambda_.144} parent=0 // pred_check_branch
    %231 = sbr.rel (0) target = $region13
  $region12: #{_lambda_.144} parent=0 // pred_region
    _
  $region13: #{_lambda_.144} parent=0 // pred_fallthru
    _
  // Predicated region
  $region14: #{_lambda_.144} parent=0 // pred_check
    _
  $region15: #{_lambda_.144} parent=0 // pred_check_branch
    %233 = sbr.rel (0) target = $region17
  $region16: #{_lambda_.144} parent=0 // pred_region
    _
  $region17: #{_lambda_.144} parent=0 // pred_fallthru
    _
  // Predicated region
  $region18: #{_lambda_.144} parent=0 // pred_check
    _
  $region19: #{_lambda_.144} parent=0 // pred_check_branch
    %235 = sbr.rel (0) target = $region21
  $region20: #{_lambda_.144} parent=0 // pred_region
    _
  $region21: #{_lambda_.144} parent=0 // pred_fallthru
    _
  // Predicated region
  $region22: #{_lambda_.144} parent=0 // pred_check
    _
  $region23: #{_lambda_.144} parent=0 // pred_check_branch
    %237 = sbr.rel (0) target = $region25
  $region24: #{_lambda_.144} parent=0 // pred_region
    _
  $region25: #{_lambda_.144} parent=0 // pred_fallthru
    _
  // Predicated region
  $region26: #{_lambda_.144} parent=0 // pred_check
    _
  $region27: #{_lambda_.144} parent=0 // pred_check_branch
    %239 = sbr.rel (0) target = $region29
  $region28: #{_lambda_.144} parent=0 // pred_region
    _
  $region29: #{_lambda_.144} parent=0 // pred_fallthru
    _
  // Predicated region
  $region30: #{_lambda_.144} parent=0 // pred_check
    _
  $region31: #{_lambda_.144} parent=0 // pred_check_branch
    %241 = sbr.rel (0) target = $region33
  $region32: #{_lambda_.144} parent=0 // pred_region
    _
  $region33: #{_lambda_.144} parent=0 // pred_fallthru
    _

// kernel: _lambda_.146
$region0: #{_lambda_.146}
  #allocation0 [shape = 'u32[]', space=smem, size = 0x4, offset = 0x4, fixed_abs, tag = 'smem constant byte address 0x4 - core index']
  #allocation1 [shape = 'u32[72,128]{1,0:T(1,128)}', space=vmem, size = 0x9000, scoped, tag = 'internal scratch']
  %s0 = inlined_call_operand.vmem [shape: bf16[2,32], index: 0, kind: input, shape index: {}]
  %s1 = inlined_call_operand.vmem [shape: bf16[32,128], index: 1, kind: input, shape index: {}]
  %s2 = inlined_call_operand.vmem [shape: f32[2,128], index: 2, kind: output, shape index: {0}]
  %s3 = inlined_call_operand.vmem [shape: f32[1,1,128], index: 3, kind: output, shape index: {1}]
  %s4 = inlined_call_operand.vmem [shape: f32[1,1,128], index: 4, kind: output, shape index: {2}]
  %5 = xla_tuple %s2, %s3, %s4
  %s6 = sld [smem:[#allocation0]]
  $region34: #{_lambda_.146} parent=0
    _
  %s8 = ssub.s32 1, %s6
  %s9 = scalar_select 0, %s8, %s6
  // Predicated region
  $region2: #{_lambda_.146} parent=0 // pred_check
    _
  $region3: #{_lambda_.146} parent=0 // pred_check_branch
    %11 = sbr.rel (0) target = $region5
  $region4: #{_lambda_.146} parent=0 // pred_region
    _
  $region5: #{_lambda_.146} parent=0 // pred_fallthru
    _
  // Predicated region
  $region6: #{_lambda_.146} parent=0 // pred_check
    _
  $region7: #{_lambda_.146} parent=0 // pred_check_branch
    %13 = sbr.rel (0) target = $region9
  $region8: #{_lambda_.146} parent=0 // pred_region
    _
  $region9: #{_lambda_.146} parent=0 // pred_fallthru
    _
  %v15 = vld [vmem:[%s0] sm:$0x1]
  %v16 = vld [vmem:[%s1] sm:$0xf]
  %v17 = vld [vmem:[%s1 + $0x4] sm:$0xf]
  %v18 = vld [vmem:[%s1 + $0x8] sm:$0xf]
  %v19 = vld [vmem:[%s1 + $0xc] sm:$0xf]
  %v24 = vunpack.c.l.b16 %v16
  %v25 = vunpack.c.l.b16 %v17
  %v26 = vunpack.c.l.b16 %v18
  %v27 = vunpack.c.l.b16 %v19
  %v28 = vpack.c.b16 %v25, %v24
  %v29 = vpack.c.b16 %v27, %v26
  %vm32 = vcmask 261120
  %v34 = vsel %vm32, %v15, 0
  %36 = vmatpush.bf16.msra.mxu0 0
  %37 = vmatpush.bf16.msra.mxu0 0
  %38 = vmatpush.bf16.msra.mxu0 0
  %39 = vmatpush.bf16.msra.mxu0 0
  %40 = vmatpush.bf16.msra.mxu0 0
  %41 = vmatpush.bf16.msra.mxu0 0
  %42 = vmatpush.bf16.msra.mxu0 %v29
  %43 = vmatpush.bf16.msra.mxu0 %v28
  %44 = vmatmul.bf16.gmra.mxu0 %v34
  %v45 = vpop.f32.mrf.mxu0
  %v46 = vadd.f32 0.0, %v45
  %v47 = vpop.f32.mrf.mxu0
  %48 = vdwg.mxu0
  %49 = vst [vmem:[%s2] sm:$0x3] %v46
  %v50 = vld [vmem:[%s2] sm:$0x3]
  %vm51 = vcmask 1041408
  %v52 = vsel %vm51, %v50, 0.0
  %v53 = vrot.slane %v52, 4
  %v54 = vadd.f32 %v52, %v53
  %v55 = vrot.slane %v54, 2
  %v56 = vadd.f32 %v54, %v55
  %v57 = vrot.slane %v56, 1
  %v58 = vadd.f32 %v56, %v57
  %59 = vst [vmem:[%s3] sm:$0x1] %v58
  %v60 = vmul.f32 %v50, %v50
  %v61 = vsel %vm51, %v60, 0.0
  %v62 = vrot.slane %v61, 4
  %v63 = vadd.f32 %v61, %v62
  %v64 = vrot.slane %v63, 2
  %v65 = vadd.f32 %v63, %v64
  %v66 = vrot.slane %v65, 1
  %v67 = vadd.f32 %v65, %v66
  %68 = vst [vmem:[%s4] sm:$0x1] %v67
  // Predicated region
  $region10: #{_lambda_.146} parent=0 // pred_check
    _
  $region11: #{_lambda_.146} parent=0 // pred_check_branch
    %70 = sbr.rel (0) target = $region13
  $region12: #{_lambda_.146} parent=0 // pred_region
    _
  $region13: #{_lambda_.146} parent=0 // pred_fallthru
    _
  // Predicated region
  $region14: #{_lambda_.146} parent=0 // pred_check
    _
  $region15: #{_lambda_.146} parent=0 // pred_check_branch
    %72 = sbr.rel (0) target = $region17
  $region16: #{_lambda_.146} parent=0 // pred_region
    _
  $region17: #{_lambda_.146} parent=0 // pred_fallthru
    _
  // Predicated region
  $region18: #{_lambda_.146} parent=0 // pred_check
    _
  $region19: #{_lambda_.146} parent=0 // pred_check_branch
    %74 = sbr.rel (0) target = $region21
  $region20: #{_lambda_.146} parent=0 // pred_region
    _
  $region21: #{_lambda_.146} parent=0 // pred_fallthru
    _
  // Predicated region
  $region22: #{_lambda_.146} parent=0 // pred_check
    _
  $region23: #{_lambda_.146} parent=0 // pred_check_branch
    %76 = sbr.rel (0) target = $region25
  $region24: #{_lambda_.146} parent=0 // pred_region
    _
  $region25: #{_lambda_.146} parent=0 // pred_fallthru
    _
  // Predicated region
  $region26: #{_lambda_.146} parent=0 // pred_check
    _
  $region27: #{_lambda_.146} parent=0 // pred_check_branch
    %78 = sbr.rel (0) target = $region29
  $region28: #{_lambda_.146} parent=0 // pred_region
    _
  $region29: #{_lambda_.146} parent=0 // pred_fallthru
    _
  // Predicated region
  $region30: #{_lambda_.146} parent=0 // pred_check
    _
  $region31: #{_lambda_.146} parent=0 // pred_check_branch
    %80 = sbr.rel (0) target = $region33
  $region32: #{_lambda_.146} parent=0 // pred_region
    _
  $region33: #{_lambda_.146} parent=0 // pred_fallthru
    _

// kernel: _lambda_.145
$region0: #{_lambda_.145}
  #allocation0 [shape = 'u32[]', space=smem, size = 0x4, offset = 0x4, fixed_abs, tag = 'smem constant byte address 0x4 - core index']
  #allocation1 [shape = 'u32[72,128]{1,0:T(1,128)}', space=vmem, size = 0x9000, scoped, tag = 'internal scratch']
  %s0 = inlined_call_operand.vmem [shape: f32[2,32], index: 0, kind: input, shape index: {}]
  %s1 = inlined_call_operand.vmem [shape: f32[1,32], index: 1, kind: input, shape index: {}]
  %s2 = inlined_call_operand.vmem [shape: f32[1,32], index: 2, kind: input, shape index: {}]
  %s3 = inlined_call_operand.vmem [shape: bf16[2,32], index: 3, kind: output, shape index: {}]
  %s4 = sld [smem:[#allocation0]]
  $region22: #{_lambda_.145} parent=0
    _
  %s6 = ssub.s32 1, %s4
  %s7 = scalar_select 0, %s6, %s4
  // Predicated region
  $region2: #{_lambda_.145} parent=0 // pred_check
    _
  $region3: #{_lambda_.145} parent=0 // pred_check_branch
    %9 = sbr.rel (0) target = $region5
  $region4: #{_lambda_.145} parent=0 // pred_region
    _
  $region5: #{_lambda_.145} parent=0 // pred_fallthru
    _
  // Predicated region
  $region6: #{_lambda_.145} parent=0 // pred_check
    _
  $region7: #{_lambda_.145} parent=0 // pred_check_branch
    %11 = sbr.rel (0) target = $region9
  $region8: #{_lambda_.145} parent=0 // pred_region
    _
  $region9: #{_lambda_.145} parent=0 // pred_fallthru
    _
  // Predicated region
  $region10: #{_lambda_.145} parent=0 // pred_check
    _
  $region11: #{_lambda_.145} parent=0 // pred_check_branch
    %13 = sbr.rel (0) target = $region13
  $region12: #{_lambda_.145} parent=0 // pred_region
    _
  $region13: #{_lambda_.145} parent=0 // pred_fallthru
    _
  %v14 = vld [vmem:[%s0] sm:$0x3]
  %v15 = vld [vmem:[%s1] sm:$0x1]
  %v17 = vperm.slane %v15, 0
  %v19 = vmul.f32 %v14, %v17
  %v20 = vld [vmem:[%s2] sm:$0x1]
  %v22 = vperm.slane %v20, 0
  %v24 = vadd.f32 %v19, %v22
  %v25 = vmax.f32 %v24, 0.0
  %v26 = vpack.c.bf16 %v25, %v25
  %vm27 = vcmask 253952
  %28 = vst.msk [vmem:[%s3] sm:$0x1] %vm27, %v26
  // Predicated region
  $region14: #{_lambda_.145} parent=0 // pred_check
    _
  $region15: #{_lambda_.145} parent=0 // pred_check_branch
    %30 = sbr.rel (0) target = $region17
  $region16: #{_lambda_.145} parent=0 // pred_region
    _
  $region17: #{_lambda_.145} parent=0 // pred_fallthru
    _
  // Predicated region
  $region18: #{_lambda_.145} parent=0 // pred_check
    _
  $region19: #{_lambda_.145} parent=0 // pred_check_branch
    %32 = sbr.rel (0) target = $region21
  $region20: #{_lambda_.145} parent=0 // pred_region
    _
  $region21: #{_lambda_.145} parent=0 // pred_fallthru
    _

// kernel: _lambda_.147
$region0: #{_lambda_.147}
  #allocation0 [shape = 'u32[]', space=smem, size = 0x4, offset = 0x4, fixed_abs, tag = 'smem constant byte address 0x4 - core index']
  #allocation1 [shape = 'u32[72,128]{1,0:T(1,128)}', space=vmem, size = 0x9000, scoped, tag = 'internal scratch']
  %s0 = inlined_call_operand.vmem [shape: f32[2,128], index: 0, kind: input, shape index: {}]
  %s1 = inlined_call_operand.vmem [shape: f32[1,128], index: 1, kind: input, shape index: {}]
  %s2 = inlined_call_operand.vmem [shape: f32[1,128], index: 2, kind: input, shape index: {}]
  %s3 = inlined_call_operand.vmem [shape: bf16[2,128], index: 3, kind: output, shape index: {}]
  %s4 = sld [smem:[#allocation0]]
  $region22: #{_lambda_.147} parent=0
    _
  %s6 = ssub.s32 1, %s4
  %s7 = scalar_select 0, %s6, %s4
  // Predicated region
  $region2: #{_lambda_.147} parent=0 // pred_check
    _
  $region3: #{_lambda_.147} parent=0 // pred_check_branch
    %9 = sbr.rel (0) target = $region5
  $region4: #{_lambda_.147} parent=0 // pred_region
    _
  $region5: #{_lambda_.147} parent=0 // pred_fallthru
    _
  // Predicated region
  $region6: #{_lambda_.147} parent=0 // pred_check
    _
  $region7: #{_lambda_.147} parent=0 // pred_check_branch
    %11 = sbr.rel (0) target = $region9
  $region8: #{_lambda_.147} parent=0 // pred_region
    _
  $region9: #{_lambda_.147} parent=0 // pred_fallthru
    _
  // Predicated region
  $region10: #{_lambda_.147} parent=0 // pred_check
    _
  $region11: #{_lambda_.147} parent=0 // pred_check_branch
    %13 = sbr.rel (0) target = $region13
  $region12: #{_lambda_.147} parent=0 // pred_region
    _
  $region13: #{_lambda_.147} parent=0 // pred_fallthru
    _
  %v14 = vld [vmem:[%s0] sm:$0x3]
  %v15 = vld [vmem:[%s1] sm:$0x1]
  %v17 = vperm.slane %v15, 0
  %v19 = vmul.f32 %v14, %v17
  %v20 = vld [vmem:[%s2] sm:$0x1]
  %v22 = vperm.slane %v20, 0
  %v24 = vadd.f32 %v19, %v22
  %v25 = vmax.f32 %v24, 0.0
  %v26 = vpack.c.bf16 %v25, %v25
  %27 = vst [vmem:[%s3] sm:$0x1] %v26
  // Predicated region
  $region14: #{_lambda_.147} parent=0 // pred_check
    _
  $region15: #{_lambda_.147} parent=0 // pred_check_branch
    %29 = sbr.rel (0) target = $region17
  $region16: #{_lambda_.147} parent=0 // pred_region
    _
  $region17: #{_lambda_.147} parent=0 // pred_fallthru
    _
  // Predicated region
  $region18: #{_lambda_.147} parent=0 // pred_check
    _
  $region19: #{_lambda_.147} parent=0 // pred_check_branch
    %31 = sbr.rel (0) target = $region21
  $region20: #{_lambda_.147} parent=0 // pred_region
    _
  $region21: #{_lambda_.147} parent=0 // pred_fallthru
    _

// kernel: _lambda_.148
$region0: #{_lambda_.148}
  #allocation0 [shape = 'u32[]', space=smem, size = 0x4, offset = 0x4, fixed_abs, tag = 'smem constant byte address 0x4 - core index']
  #allocation1 [shape = 'u32[72,128]{1,0:T(1,128)}', space=vmem, size = 0x9000, scoped, tag = 'internal scratch']
  %s0 = inlined_call_operand.vmem [shape: bf16[2,128], index: 0, kind: input, shape index: {}]
  %s1 = inlined_call_operand.vmem [shape: bf16[128,32], index: 1, kind: input, shape index: {}]
  %s2 = inlined_call_operand.vmem [shape: f32[2,32], index: 2, kind: output, shape index: {0}]
  %s3 = inlined_call_operand.vmem [shape: f32[1,1,32], index: 3, kind: output, shape index: {1}]
  %s4 = inlined_call_operand.vmem [shape: f32[1,1,32], index: 4, kind: output, shape index: {2}]
  %5 = xla_tuple %s2, %s3, %s4
  %s6 = sld [smem:[#allocation0]]
  $region34: #{_lambda_.148} parent=0
    _
  %s8 = ssub.s32 1, %s6
  %s9 = scalar_select 0, %s8, %s6
  // Predicated region
  $region2: #{_lambda_.148} parent=0 // pred_check
    _
  $region3: #{_lambda_.148} parent=0 // pred_check_branch
    %11 = sbr.rel (0) target = $region5
  $region4: #{_lambda_.148} parent=0 // pred_region
    _
  $region5: #{_lambda_.148} parent=0 // pred_fallthru
    _
  // Predicated region
  $region6: #{_lambda_.148} parent=0 // pred_check
    _
  $region7: #{_lambda_.148} parent=0 // pred_check_branch
    %13 = sbr.rel (0) target = $region9
  $region8: #{_lambda_.148} parent=0 // pred_region
    _
  $region9: #{_lambda_.148} parent=0 // pred_fallthru
    _
  %v14 = vld [vmem:[%s0] sm:$0x1]
  %v15 = vld [vmem:[%s1] sm:$0xf]
  %v16 = vld [vmem:[%s1 + $0x4] sm:$0xf]
  %v17 = vld [vmem:[%s1 + $0x8] sm:$0xf]
  %v18 = vld [vmem:[%s1 + $0xc] sm:$0xf]
  %v19 = vld [vmem:[%s1 + $0x10] sm:$0xf]
  %v20 = vld [vmem:[%s1 + $0x14] sm:$0xf]
  %v21 = vld [vmem:[%s1 + $0x18] sm:$0xf]
  %v22 = vld [vmem:[%s1 + $0x1c] sm:$0xf]
  %v23 = vld [vmem:[%s1 + $0x20] sm:$0xf]
  %v24 = vld [vmem:[%s1 + $0x24] sm:$0xf]
  %v25 = vld [vmem:[%s1 + $0x28] sm:$0xf]
  %v26 = vld [vmem:[%s1 + $0x2c] sm:$0xf]
  %v27 = vld [vmem:[%s1 + $0x30] sm:$0xf]
  %v28 = vld [vmem:[%s1 + $0x34] sm:$0xf]
  %v29 = vld [vmem:[%s1 + $0x38] sm:$0xf]
  %v30 = vld [vmem:[%s1 + $0x3c] sm:$0xf]
  %v47 = vunpack.c.l.b16 %v15
  %v48 = vunpack.c.l.b16 %v16
  %v49 = vunpack.c.l.b16 %v17
  %v50 = vunpack.c.l.b16 %v18
  %v51 = vunpack.c.l.b16 %v19
  %v52 = vunpack.c.l.b16 %v20
  %v53 = vunpack.c.l.b16 %v21
  %v54 = vunpack.c.l.b16 %v22
  %v55 = vunpack.c.l.b16 %v23
  %v56 = vunpack.c.l.b16 %v24
  %v57 = vunpack.c.l.b16 %v25
  %v58 = vunpack.c.l.b16 %v26
  %v59 = vunpack.c.l.b16 %v27
  %v60 = vunpack.c.l.b16 %v28
  %v61 = vunpack.c.l.b16 %v29
  %v62 = vunpack.c.l.b16 %v30
  %v63 = vpack.c.b16 %v48, %v47
  %v64 = vpack.c.b16 %v50, %v49
  %v65 = vpack.c.b16 %v52, %v51
  %v66 = vpack.c.b16 %v54, %v53
  %v67 = vpack.c.b16 %v56, %v55
  %v68 = vpack.c.b16 %v58, %v57
  %v69 = vpack.c.b16 %v60, %v59
  %v70 = vpack.c.b16 %v62, %v61
  %79 = vmatpush.bf16.msra.mxu0 %v70
  %80 = vmatpush.bf16.msra.mxu0 %v69
  %81 = vmatpush.bf16.msra.mxu0 %v68
  %82 = vmatpush.bf16.msra.mxu0 %v67
  %83 = vmatpush.bf16.msra.mxu0 %v66
  %84 = vmatpush.bf16.msra.mxu0 %v65
  %85 = vmatpush.bf16.msra.mxu0 %v64
  %86 = vmatpush.bf16.msra.mxu0 %v63
  %87 = vmatmul.bf16.gmra.mxu0 %v14
  %v88 = vpop.f32.mrf.mxu0
  %v89 = vadd.f32 0.0, %v88
  %v90 = vpop.f32.mrf.mxu0
  %91 = vdwg.mxu0
  %vm92 = vcmask 254976
  %93 = vst.msk [vmem:[%s2] sm:$0x3] %vm92, %v89
  %v94 = vld [vmem:[%s2] sm:$0x3]
  %v95 = vsel %vm92, %v94, 0.0
  %v96 = vrot.slane %v95, 4
  %v97 = vadd.f32 %v95, %v96
  %v98 = vrot.slane %v97, 2
  %v99 = vadd.f32 %v97, %v98
  %v100 = vrot.slane %v99, 1
  %v101 = vadd.f32 %v99, %v100
  %vm102 = vcmask 253952
  %103 = vst.msk [vmem:[%s3] sm:$0x1] %vm102, %v101
  %v104 = vmul.f32 %v94, %v94
  %v105 = vsel %vm92, %v104, 0.0
  %v106 = vrot.slane %v105, 4
  %v107 = vadd.f32 %v105, %v106
  %v108 = vrot.slane %v107, 2
  %v109 = vadd.f32 %v107, %v108
  %v110 = vrot.slane %v109, 1
  %v111 = vadd.f32 %v109, %v110
  %112 = vst.msk [vmem:[%s4] sm:$0x1] %vm102, %v111
  // Predicated region
  $region10: #{_lambda_.148} parent=0 // pred_check
    _
  $region11: #{_lambda_.148} parent=0 // pred_check_branch
    %114 = sbr.rel (0) target = $region13
  $region12: #{_lambda_.148} parent=0 // pred_region
    _
  $region13: #{_lambda_.148} parent=0 // pred_fallthru
    _
  // Predicated region
  $region14: #{_lambda_.148} parent=0 // pred_check
    _
  $region15: #{_lambda_.148} parent=0 // pred_check_branch
    %116 = sbr.rel (0) target = $region17
  $region16: #{_lambda_.148} parent=0 // pred_region
    _
  $region17: #{_lambda_.148} parent=0 // pred_fallthru
    _
  // Predicated region
  $region18: #{_lambda_.148} parent=0 // pred_check
    _
  $region19: #{_lambda_.148} parent=0 // pred_check_branch
    %118 = sbr.rel (0) target = $region21
  $region20: #{_lambda_.148} parent=0 // pred_region
    _
  $region21: #{_lambda_.148} parent=0 // pred_fallthru
    _
  // Predicated region
  $region22: #{_lambda_.148} parent=0 // pred_check
    _
  $region23: #{_lambda_.148} parent=0 // pred_check_branch
    %120 = sbr.rel (0) target = $region25
  $region24: #{_lambda_.148} parent=0 // pred_region
    _
  $region25: #{_lambda_.148} parent=0 // pred_fallthru
    _
  // Predicated region
  $region26: #{_lambda_.148} parent=0 // pred_check
    _
  $region27: #{_lambda_.148} parent=0 // pred_check_branch
    %122 = sbr.rel (0) target = $region29
  $region28: #{_lambda_.148} parent=0 // pred_region
    _
  $region29: #{_lambda_.148} parent=0 // pred_fallthru
    _
  // Predicated region
  $region30: #{_lambda_.148} parent=0 // pred_check
    _
  $region31: #{_lambda_.148} parent=0 // pred_check_branch
    %124 = sbr.rel (0) target = $region33
  $region32: #{_lambda_.148} parent=0 // pred_region
    _
  $region33: #{_lambda_.148} parent=0 // pred_fallthru
    _

// kernel: _lambda_.179
$region0: #{_lambda_.179}
  #allocation0 [shape = 'u32[]', space=smem, size = 0x4, offset = 0x4, fixed_abs, tag = 'smem constant byte address 0x4 - core index']
  #allocation1 [shape = 'u32[72,128]{1,0:T(1,128)}', space=vmem, size = 0x9000, scoped, tag = 'internal scratch']
  %s0 = inlined_call_operand.vmem [shape: f32[2,64], index: 0, kind: input, shape index: {}]
  %s1 = inlined_call_operand.vmem [shape: f32[1,64], index: 1, kind: input, shape index: {}]
  %s2 = inlined_call_operand.vmem [shape: f32[1,64], index: 2, kind: input, shape index: {}]
  %s3 = inlined_call_operand.vmem [shape: bf16[2,64], index: 3, kind: output, shape index: {}]
  %s4 = sld [smem:[#allocation0]]
  $region22: #{_lambda_.179} parent=0
    _
  %s6 = ssub.s32 1, %s4
  %s7 = scalar_select 0, %s6, %s4
  // Predicated region
  $region2: #{_lambda_.179} parent=0 // pred_check
    _
  $region3: #{_lambda_.179} parent=0 // pred_check_branch
    %9 = sbr.rel (0) target = $region5
  $region4: #{_lambda_.179} parent=0 // pred_region
    _
  $region5: #{_lambda_.179} parent=0 // pred_fallthru
    _
  // Predicated region
  $region6: #{_lambda_.179} parent=0 // pred_check
    _
  $region7: #{_lambda_.179} parent=0 // pred_check_branch
    %11 = sbr.rel (0) target = $region9
  $region8: #{_lambda_.179} parent=0 // pred_region
    _
  $region9: #{_lambda_.179} parent=0 // pred_fallthru
    _
  // Predicated region
  $region10: #{_lambda_.179} parent=0 // pred_check
    _
  $region11: #{_lambda_.179} parent=0 // pred_check_branch
    %13 = sbr.rel (0) target = $region13
  $region12: #{_lambda_.179} parent=0 // pred_region
    _
  $region13: #{_lambda_.179} parent=0 // pred_fallthru
    _
  %v14 = vld [vmem:[%s0] sm:$0x3]
  %v15 = vld [vmem:[%s1] sm:$0x1]
  %v17 = vperm.slane %v15, 0
  %v19 = vmul.f32 %v14, %v17
  %v20 = vld [vmem:[%s2] sm:$0x1]
  %v22 = vperm.slane %v20, 0
  %v24 = vadd.f32 %v19, %v22
  %v25 = vmax.f32 %v24, 0.0
  %v26 = vpack.c.bf16 %v25, %v25
  %vm27 = vcmask 516096
  %28 = vst.msk [vmem:[%s3] sm:$0x1] %vm27, %v26
  // Predicated region
  $region14: #{_lambda_.179} parent=0 // pred_check
    _
  $region15: #{_lambda_.179} parent=0 // pred_check_branch
    %30 = sbr.rel (0) target = $region17
  $region16: #{_lambda_.179} parent=0 // pred_region
    _
  $region17: #{_lambda_.179} parent=0 // pred_fallthru
    _
  // Predicated region
  $region18: #{_lambda_.179} parent=0 // pred_check
    _
  $region19: #{_lambda_.179} parent=0 // pred_check_branch
    %32 = sbr.rel (0) target = $region21
  $region20: #{_lambda_.179} parent=0 // pred_region
    _
  $region21: #{_lambda_.179} parent=0 // pred_fallthru
    _

// kernel: _lambda_.178
$region0: #{_lambda_.178}
  #allocation0 [shape = 'u32[]', space=smem, size = 0x4, offset = 0x4, fixed_abs, tag = 'smem constant byte address 0x4 - core index']
  #allocation1 [shape = 'u32[72,128]{1,0:T(1,128)}', space=vmem, size = 0x9000, scoped, tag = 'internal scratch']
  %s0 = inlined_call_operand.vmem [shape: bf16[2,128], index: 0, kind: input, shape index: {}]
  %s1 = inlined_call_operand.vmem [shape: bf16[128,64], index: 1, kind: input, shape index: {}]
  %s2 = inlined_call_operand.vmem [shape: f32[2,64], index: 2, kind: output, shape index: {0}]
  %s3 = inlined_call_operand.vmem [shape: f32[1,1,64], index: 3, kind: output, shape index: {1}]
  %s4 = inlined_call_operand.vmem [shape: f32[1,1,64], index: 4, kind: output, shape index: {2}]
  %5 = xla_tuple %s2, %s3, %s4
  %s6 = sld [smem:[#allocation0]]
  $region34: #{_lambda_.178} parent=0
    _
  %s8 = ssub.s32 1, %s6
  %s9 = scalar_select 0, %s8, %s6
  // Predicated region
  $region2: #{_lambda_.178} parent=0 // pred_check
    _
  $region3: #{_lambda_.178} parent=0 // pred_check_branch
    %11 = sbr.rel (0) target = $region5
  $region4: #{_lambda_.178} parent=0 // pred_region
    _
  $region5: #{_lambda_.178} parent=0 // pred_fallthru
    _
  // Predicated region
  $region6: #{_lambda_.178} parent=0 // pred_check
    _
  $region7: #{_lambda_.178} parent=0 // pred_check_branch
    %13 = sbr.rel (0) target = $region9
  $region8: #{_lambda_.178} parent=0 // pred_region
    _
  $region9: #{_lambda_.178} parent=0 // pred_fallthru
    _
  %v14 = vld [vmem:[%s0] sm:$0x1]
  %v15 = vld [vmem:[%s1] sm:$0xf]
  %v16 = vld [vmem:[%s1 + $0x4] sm:$0xf]
  %v17 = vld [vmem:[%s1 + $0x8] sm:$0xf]
  %v18 = vld [vmem:[%s1 + $0xc] sm:$0xf]
  %v19 = vld [vmem:[%s1 + $0x10] sm:$0xf]
  %v20 = vld [vmem:[%s1 + $0x14] sm:$0xf]
  %v21 = vld [vmem:[%s1 + $0x18] sm:$0xf]
  %v22 = vld [vmem:[%s1 + $0x1c] sm:$0xf]
  %v23 = vld [vmem:[%s1 + $0x20] sm:$0xf]
  %v24 = vld [vmem:[%s1 + $0x24] sm:$0xf]
  %v25 = vld [vmem:[%s1 + $0x28] sm:$0xf]
  %v26 = vld [vmem:[%s1 + $0x2c] sm:$0xf]
  %v27 = vld [vmem:[%s1 + $0x30] sm:$0xf]
  %v28 = vld [vmem:[%s1 + $0x34] sm:$0xf]
  %v29 = vld [vmem:[%s1 + $0x38] sm:$0xf]
  %v30 = vld [vmem:[%s1 + $0x3c] sm:$0xf]
  %v47 = vunpack.c.l.b16 %v15
  %v48 = vunpack.c.l.b16 %v16
  %v49 = vunpack.c.l.b16 %v17
  %v50 = vunpack.c.l.b16 %v18
  %v51 = vunpack.c.l.b16 %v19
  %v52 = vunpack.c.l.b16 %v20
  %v53 = vunpack.c.l.b16 %v21
  %v54 = vunpack.c.l.b16 %v22
  %v55 = vunpack.c.l.b16 %v23
  %v56 = vunpack.c.l.b16 %v24
  %v57 = vunpack.c.l.b16 %v25
  %v58 = vunpack.c.l.b16 %v26
  %v59 = vunpack.c.l.b16 %v27
  %v60 = vunpack.c.l.b16 %v28
  %v61 = vunpack.c.l.b16 %v29
  %v62 = vunpack.c.l.b16 %v30
  %v63 = vpack.c.b16 %v48, %v47
  %v64 = vpack.c.b16 %v50, %v49
  %v65 = vpack.c.b16 %v52, %v51
  %v66 = vpack.c.b16 %v54, %v53
  %v67 = vpack.c.b16 %v56, %v55
  %v68 = vpack.c.b16 %v58, %v57
  %v69 = vpack.c.b16 %v60, %v59
  %v70 = vpack.c.b16 %v62, %v61
  %79 = vmatpush.bf16.msra.mxu0 %v70
  %80 = vmatpush.bf16.msra.mxu0 %v69
  %81 = vmatpush.bf16.msra.mxu0 %v68
  %82 = vmatpush.bf16.msra.mxu0 %v67
  %83 = vmatpush.bf16.msra.mxu0 %v66
  %84 = vmatpush.bf16.msra.mxu0 %v65
  %85 = vmatpush.bf16.msra.mxu0 %v64
  %86 = vmatpush.bf16.msra.mxu0 %v63
  %87 = vmatmul.bf16.gmra.mxu0 %v14
  %v88 = vpop.f32.mrf.mxu0
  %v89 = vadd.f32 0.0, %v88
  %v90 = vpop.f32.mrf.mxu0
  %91 = vdwg.mxu0
  %vm92 = vcmask 517120
  %93 = vst.msk [vmem:[%s2] sm:$0x3] %vm92, %v89
  %v94 = vld [vmem:[%s2] sm:$0x3]
  %v95 = vsel %vm92, %v94, 0.0
  %v96 = vrot.slane %v95, 4
  %v97 = vadd.f32 %v95, %v96
  %v98 = vrot.slane %v97, 2
  %v99 = vadd.f32 %v97, %v98
  %v100 = vrot.slane %v99, 1
  %v101 = vadd.f32 %v99, %v100
  %vm102 = vcmask 516096
  %103 = vst.msk [vmem:[%s3] sm:$0x1] %vm102, %v101
  %v104 = vmul.f32 %v94, %v94
  %v105 = vsel %vm92, %v104, 0.0
  %v106 = vrot.slane %v105, 4
  %v107 = vadd.f32 %v105, %v106
  %v108 = vrot.slane %v107, 2
  %v109 = vadd.f32 %v107, %v108
  %v110 = vrot.slane %v109, 1
  %v111 = vadd.f32 %v109, %v110
  %112 = vst.msk [vmem:[%s4] sm:$0x1] %vm102, %v111
  // Predicated region
  $region10: #{_lambda_.178} parent=0 // pred_check
    _
  $region11: #{_lambda_.178} parent=0 // pred_check_branch
    %114 = sbr.rel (0) target = $region13
  $region12: #{_lambda_.178} parent=0 // pred_region
    _
  $region13: #{_lambda_.178} parent=0 // pred_fallthru
    _
  // Predicated region
  $region14: #{_lambda_.178} parent=0 // pred_check
    _
  $region15: #{_lambda_.178} parent=0 // pred_check_branch
    %116 = sbr.rel (0) target = $region17
  $region16: #{_lambda_.178} parent=0 // pred_region
    _
  $region17: #{_lambda_.178} parent=0 // pred_fallthru
    _
  // Predicated region
  $region18: #{_lambda_.178} parent=0 // pred_check
    _
  $region19: #{_lambda_.178} parent=0 // pred_check_branch
    %118 = sbr.rel (0) target = $region21
  $region20: #{_lambda_.178} parent=0 // pred_region
    _
  $region21: #{_lambda_.178} parent=0 // pred_fallthru
    _
  // Predicated region
  $region22: #{_lambda_.178} parent=0 // pred_check
    _
  $region23: #{_lambda_.178} parent=0 // pred_check_branch
    %120 = sbr.rel (0) target = $region25
  $region24: #{_lambda_.178} parent=0 // pred_region
    _
  $region25: #{_lambda_.178} parent=0 // pred_fallthru
    _
  // Predicated region
  $region26: #{_lambda_.178} parent=0 // pred_check
    _
  $region27: #{_lambda_.178} parent=0 // pred_check_branch
    %122 = sbr.rel (0) target = $region29
  $region28: #{_lambda_.178} parent=0 // pred_region
    _
  $region29: #{_lambda_.178} parent=0 // pred_fallthru
    _
  // Predicated region
  $region30: #{_lambda_.178} parent=0 // pred_check
    _
  $region31: #{_lambda_.178} parent=0 // pred_check_branch
    %124 = sbr.rel (0) target = $region33
  $region32: #{_lambda_.178} parent=0 // pred_region
    _
  $region33: #{_lambda_.178} parent=0 // pred_fallthru
    _

// kernel: _lambda_.182
$region0: #{_lambda_.182}
  #allocation0 [shape = 'u32[]', space=smem, size = 0x4, offset = 0x4, fixed_abs, tag = 'smem constant byte address 0x4 - core index']
  #allocation1 [shape = 'u32[72,128]{1,0:T(1,128)}', space=vmem, size = 0x9000, scoped, tag = 'internal scratch']
  %s0 = inlined_call_operand.vmem [shape: bf16[2,64], index: 0, kind: input, shape index: {}]
  %s1 = inlined_call_operand.vmem [shape: bf16[64,256], index: 1, kind: input, shape index: {}]
  %s2 = inlined_call_operand.vmem [shape: f32[2,256], index: 2, kind: output, shape index: {0}]
  %s3 = inlined_call_operand.vmem [shape: f32[1,1,256], index: 3, kind: output, shape index: {1}]
  %s4 = inlined_call_operand.vmem [shape: f32[1,1,256], index: 4, kind: output, shape index: {2}]
  %5 = xla_tuple %s2, %s3, %s4
  %s6 = sld [smem:[#allocation0]]
  $region34: #{_lambda_.182} parent=0
    _
  %s8 = ssub.s32 1, %s6
  %s9 = scalar_select 0, %s8, %s6
  // Predicated region
  $region2: #{_lambda_.182} parent=0 // pred_check
    _
  $region3: #{_lambda_.182} parent=0 // pred_check_branch
    %11 = sbr.rel (0) target = $region5
  $region4: #{_lambda_.182} parent=0 // pred_region
    _
  $region5: #{_lambda_.182} parent=0 // pred_fallthru
    _
  // Predicated region
  $region6: #{_lambda_.182} parent=0 // pred_check
    _
  $region7: #{_lambda_.182} parent=0 // pred_check_branch
    %13 = sbr.rel (0) target = $region9
  $region8: #{_lambda_.182} parent=0 // pred_region
    _
  $region9: #{_lambda_.182} parent=0 // pred_fallthru
    _
  %v15 = vld [vmem:[%s0] sm:$0x1]
  %v16 = vld [vmem:[%s1] sm:$0xff]
  %v17 = vld [vmem:[%s1 + $0x8] sm:$0xff]
  %v18 = vld [vmem:[%s1 + $0x10] sm:$0xff]
  %v19 = vld [vmem:[%s1 + $0x18] sm:$0xff]
  %v20 = vld [vmem:[%s1 + $0x20] sm:$0xff]
  %v21 = vld [vmem:[%s1 + $0x28] sm:$0xff]
  %v22 = vld [vmem:[%s1 + $0x30] sm:$0xff]
  %v23 = vld [vmem:[%s1 + $0x38] sm:$0xff]
  %v32 = vunpack.c.l.b16 %v16
  %v33 = vunpack.c.h.b16 %v16
  %v34 = vunpack.c.l.b16 %v17
  %v35 = vunpack.c.h.b16 %v17
  %v36 = vunpack.c.l.b16 %v18
  %v37 = vunpack.c.h.b16 %v18
  %v38 = vunpack.c.l.b16 %v19
  %v39 = vunpack.c.h.b16 %v19
  %v40 = vunpack.c.l.b16 %v20
  %v41 = vunpack.c.h.b16 %v20
  %v42 = vunpack.c.l.b16 %v21
  %v43 = vunpack.c.h.b16 %v21
  %v44 = vunpack.c.l.b16 %v22
  %v45 = vunpack.c.h.b16 %v22
  %v46 = vunpack.c.l.b16 %v23
  %v47 = vunpack.c.h.b16 %v23
  %v48 = vpack.c.b16 %v34, %v32
  %v49 = vpack.c.b16 %v35, %v33
  %v50 = vpack.c.b16 %v38, %v36
  %v51 = vpack.c.b16 %v39, %v37
  %v52 = vpack.c.b16 %v42, %v40
  %v53 = vpack.c.b16 %v43, %v41
  %v54 = vpack.c.b16 %v46, %v44
  %v55 = vpack.c.b16 %v47, %v45
  %vm64 = vcmask 523264
  %v66 = vsel %vm64, %v15, 0
  %68 = vmatpush.bf16.msra.mxu0 0
  %69 = vmatpush.bf16.msra.mxu0 0
  %70 = vmatpush.bf16.msra.mxu0 0
  %71 = vmatpush.bf16.msra.mxu0 0
  %72 = vmatpush.bf16.msra.mxu0 %v54
  %73 = vmatpush.bf16.msra.mxu0 %v52
  %74 = vmatpush.bf16.msra.mxu0 %v50
  %75 = vmatpush.bf16.msra.mxu0 %v48
  %76 = vmatmul.bf16.gmra.mxu0 %v66
  %v77 = vpop.f32.mrf.mxu0
  %v78 = vadd.f32 0.0, %v77
  %v79 = vpop.f32.mrf.mxu0
  %80 = vdwg.mxu0
  %81 = vmatpush.bf16.msra.mxu0 0
  %82 = vmatpush.bf16.msra.mxu0 0
  %83 = vmatpush.bf16.msra.mxu0 0
  %84 = vmatpush.bf16.msra.mxu0 0
  %85 = vmatpush.bf16.msra.mxu0 %v55
  %86 = vmatpush.bf16.msra.mxu0 %v53
  %87 = vmatpush.bf16.msra.mxu0 %v51
  %88 = vmatpush.bf16.msra.mxu0 %v49
  %89 = vmatmul.bf16.gmra.mxu0 %v66
  %v90 = vpop.f32.mrf.mxu0
  %v91 = vadd.f32 0.0, %v90
  %v92 = vpop.f32.mrf.mxu0
  %93 = vdwg.mxu0
  %v96 = vrot.slane %v91, 6
  %vm97 = vcmask 1041408
  %v98 = vsel %vm97, %v78, %v96
  %100 = vst [vmem:[%s2] sm:$0xf] %v98
  %v101 = vld [vmem:[%s2] sm:$0xf]
  %103 = vst [vmem:[#allocation1] ss:$4 sm:$0xff] %v101
  %v104 = vld.sshfl [vmem:[#allocation1] sm:$0xff pattern:$0x73625140]
  %v105 = vld.sshfl [vmem:[#allocation1 + $0x8] sm:$0xff pattern:$0x73625140]
  %v108 = vsel %vm97, %v104, 0.0
  %v109 = vrot.slane %v108, 4
  %v110 = vadd.f32 %v108, %v109
  %v111 = vrot.slane %v110, 2
  %v112 = vadd.f32 %v110, %v111
  %v113 = vrot.slane %v112, 1
  %v114 = vadd.f32 %v112, %v113
  %v115 = vsel %vm97, %v105, 0.0
  %v116 = vrot.slane %v115, 4
  %v117 = vadd.f32 %v115, %v116
  %v118 = vrot.slane %v117, 2
  %v119 = vadd.f32 %v117, %v118
  %v120 = vrot.slane %v119, 1
  %v121 = vadd.f32 %v119, %v120
  %v124 = vrot.slane %v121, 7
  %vm125 = vcmask 1040384
  %v126 = vsel %vm125, %v114, %v124
  %v128 = vlaneseq
  %vm129 = vcmp.ge.s32.totalorder %v128, 0
  %vm130 = vcmp.lt.s32.totalorder %v128, 256
  %vm131 = vmand %vm129, %vm130
  %132 = vst.msk [vmem:[%s3] sm:$0x3] %vm131, %v126
  %v133 = vmul.f32 %v101, %v101
  %135 = vst [vmem:[#allocation1] ss:$4 sm:$0xff] %v133
  %v136 = vld.sshfl [vmem:[#allocation1] sm:$0xff pattern:$0x73625140]
  %v137 = vld.sshfl [vmem:[#allocation1 + $0x8] sm:$0xff pattern:$0x73625140]
  %v140 = vsel %vm97, %v136, 0.0
  %v141 = vrot.slane %v140, 4
  %v142 = vadd.f32 %v140, %v141
  %v143 = vrot.slane %v142, 2
  %v144 = vadd.f32 %v142, %v143
  %v145 = vrot.slane %v144, 1
  %v146 = vadd.f32 %v144, %v145
  %v147 = vsel %vm97, %v137, 0.0
  %v148 = vrot.slane %v147, 4
  %v149 = vadd.f32 %v147, %v148
  %v150 = vrot.slane %v149, 2
  %v151 = vadd.f32 %v149, %v150
  %v152 = vrot.slane %v151, 1
  %v153 = vadd.f32 %v151, %v152
  %v156 = vrot.slane %v153, 7
  %v157 = vsel %vm125, %v146, %v156
  %159 = vst.msk [vmem:[%s4] sm:$0x3] %vm131, %v157
  // Predicated region
  $region10: #{_lambda_.182} parent=0 // pred_check
    _
  $region11: #{_lambda_.182} parent=0 // pred_check_branch
    %161 = sbr.rel (0) target = $region13
  $region12: #{_lambda_.182} parent=0 // pred_region
    _
  $region13: #{_lambda_.182} parent=0 // pred_fallthru
    _
  // Predicated region
  $region14: #{_lambda_.182} parent=0 // pred_check
    _
  $region15: #{_lambda_.182} parent=0 // pred_check_branch
    %163 = sbr.rel (0) target = $region17
  $region16: #{_lambda_.182} parent=0 // pred_region
    _
  $region17: #{_lambda_.182} parent=0 // pred_fallthru
    _
  // Predicated region
  $region18: #{_lambda_.182} parent=0 // pred_check
    _
  $region19: #{_lambda_.182} parent=0 // pred_check_branch
    %165 = sbr.rel (0) target = $region21
  $region20: #{_lambda_.182} parent=0 // pred_region
    _
  $region21: #{_lambda_.182} parent=0 // pred_fallthru
    _
  // Predicated region
  $region22: #{_lambda_.182} parent=0 // pred_check
    _
  $region23: #{_lambda_.182} parent=0 // pred_check_branch
    %167 = sbr.rel (0) target = $region25
  $region24: #{_lambda_.182} parent=0 // pred_region
    _
  $region25: #{_lambda_.182} parent=0 // pred_fallthru
    _
  // Predicated region
  $region26: #{_lambda_.182} parent=0 // pred_check
    _
  $region27: #{_lambda_.182} parent=0 // pred_check_branch
    %169 = sbr.rel (0) target = $region29
  $region28: #{_lambda_.182} parent=0 // pred_region
    _
  $region29: #{_lambda_.182} parent=0 // pred_fallthru
    _
  // Predicated region
  $region30: #{_lambda_.182} parent=0 // pred_check
    _
  $region31: #{_lambda_.182} parent=0 // pred_check_branch
    %171 = sbr.rel (0) target = $region33
  $region32: #{_lambda_.182} parent=0 // pred_region
    _
  $region33: #{_lambda_.182} parent=0 // pred_fallthru
    _

// kernel: _lambda_.183
$region0: #{_lambda_.183}
  #allocation0 [shape = 'u32[]', space=smem, size = 0x4, offset = 0x4, fixed_abs, tag = 'smem constant byte address 0x4 - core index']
  #allocation1 [shape = 'u32[72,128]{1,0:T(1,128)}', space=vmem, size = 0x9000, scoped, tag = 'internal scratch']
  %s0 = inlined_call_operand.vmem [shape: f32[2,256], index: 0, kind: input, shape index: {}]
  %s1 = inlined_call_operand.vmem [shape: f32[1,256], index: 1, kind: input, shape index: {}]
  %s2 = inlined_call_operand.vmem [shape: f32[1,256], index: 2, kind: input, shape index: {}]
  %s3 = inlined_call_operand.vmem [shape: bf16[2,256], index: 3, kind: output, shape index: {}]
  %s4 = sld [smem:[#allocation0]]
  $region22: #{_lambda_.183} parent=0
    _
  %s6 = ssub.s32 1, %s4
  %s7 = scalar_select 0, %s6, %s4
  // Predicated region
  $region2: #{_lambda_.183} parent=0 // pred_check
    _
  $region3: #{_lambda_.183} parent=0 // pred_check_branch
    %9 = sbr.rel (0) target = $region5
  $region4: #{_lambda_.183} parent=0 // pred_region
    _
  $region5: #{_lambda_.183} parent=0 // pred_fallthru
    _
  // Predicated region
  $region6: #{_lambda_.183} parent=0 // pred_check
    _
  $region7: #{_lambda_.183} parent=0 // pred_check_branch
    %11 = sbr.rel (0) target = $region9
  $region8: #{_lambda_.183} parent=0 // pred_region
    _
  $region9: #{_lambda_.183} parent=0 // pred_fallthru
    _
  // Predicated region
  $region10: #{_lambda_.183} parent=0 // pred_check
    _
  $region11: #{_lambda_.183} parent=0 // pred_check_branch
    %13 = sbr.rel (0) target = $region13
  $region12: #{_lambda_.183} parent=0 // pred_region
    _
  $region13: #{_lambda_.183} parent=0 // pred_fallthru
    _
  %v14 = vld [vmem:[%s0] sm:$0xf]
  %v15 = vld [vmem:[%s1] sm:$0x3]
  %v17 = vperm.slane %v15, 0
  %v18 = vperm.slane %v15, 1
  %v19 = vrot.slane %v18, 6
  %vm20 = vcmask 1041408
  %v21 = vsel %vm20, %v17, %v19
  %v23 = vmul.f32 %v14, %v21
  %v24 = vld [vmem:[%s2] sm:$0x3]
  %v26 = vperm.slane %v24, 0
  %v27 = vperm.slane %v24, 1
  %v28 = vrot.slane %v27, 6
  %v29 = vsel %vm20, %v26, %v28
  %v31 = vadd.f32 %v23, %v29
  %v32 = vmax.f32 %v31, 0.0
  %34 = vst [vmem:[#allocation1] ss:$4 sm:$0xff] %v32
  %v35 = vld.sshfl [vmem:[#allocation1] sm:$0xff pattern:$0x73625140]
  %v36 = vld.sshfl [vmem:[#allocation1 + $0x8] sm:$0xff pattern:$0x73625140]
  %v39 = vpack.c.bf16 %v36, %v35
  %v41 = vrot.slane %v39, 3
  %vm42 = vcmask 1040384
  %v45 = vsel %vm42, %v39, %v41
  %47 = vst [vmem:[%s3] sm:$0x3] %v45
  // Predicated region
  $region14: #{_lambda_.183} parent=0 // pred_check
    _
  $region15: #{_lambda_.183} parent=0 // pred_check_branch
    %49 = sbr.rel (0) target = $region17
  $region16: #{_lambda_.183} parent=0 // pred_region
    _
  $region17: #{_lambda_.183} parent=0 // pred_fallthru
    _
  // Predicated region
  $region18: #{_lambda_.183} parent=0 // pred_check
    _
  $region19: #{_lambda_.183} parent=0 // pred_check_branch
    %51 = sbr.rel (0) target = $region21
  $region20: #{_lambda_.183} parent=0 // pred_region
    _
  $region21: #{_lambda_.183} parent=0 // pred_fallthru
    _

// kernel: _lambda_.180
$region0: #{_lambda_.180}
  #allocation0 [shape = 'u32[]', space=smem, size = 0x4, offset = 0x4, fixed_abs, tag = 'smem constant byte address 0x4 - core index']
  #allocation1 [shape = 'u32[72,128]{1,0:T(1,128)}', space=vmem, size = 0x9000, scoped, tag = 'internal scratch']
  %s0 = inlined_call_operand.vmem [shape: bf16[2,576], index: 0, kind: input, shape index: {}]
  %s1 = inlined_call_operand.vmem [shape: bf16[576,64], index: 1, kind: input, shape index: {}]
  %s2 = inlined_call_operand.vmem [shape: f32[2,64], index: 2, kind: output, shape index: {0}]
  %s3 = inlined_call_operand.vmem [shape: f32[1,1,64], index: 3, kind: output, shape index: {1}]
  %s4 = inlined_call_operand.vmem [shape: f32[1,1,64], index: 4, kind: output, shape index: {2}]
  %5 = xla_tuple %s2, %s3, %s4
  %s6 = sld [smem:[#allocation0]]
  $region34: #{_lambda_.180} parent=0
    _
  %s8 = ssub.s32 1, %s6
  %s9 = scalar_select 0, %s8, %s6
  // Predicated region
  $region2: #{_lambda_.180} parent=0 // pred_check
    _
  $region3: #{_lambda_.180} parent=0 // pred_check_branch
    %11 = sbr.rel (0) target = $region5
  $region4: #{_lambda_.180} parent=0 // pred_region
    _
  $region5: #{_lambda_.180} parent=0 // pred_fallthru
    _
  // Predicated region
  $region6: #{_lambda_.180} parent=0 // pred_check
    _
  $region7: #{_lambda_.180} parent=0 // pred_check_branch
    %13 = sbr.rel (0) target = $region9
  $region8: #{_lambda_.180} parent=0 // pred_region
    _
  $region9: #{_lambda_.180} parent=0 // pred_fallthru
    _
  %v15 = vld [vmem:[%s0] sm:$0x1f]
  %v16 = vld [vmem:[%s1] sm:$0xf]
  %v17 = vld [vmem:[%s1 + $0x4] sm:$0xf]
  %v18 = vld [vmem:[%s1 + $0x8] sm:$0xf]
  %v19 = vld [vmem:[%s1 + $0xc] sm:$0xf]
  %v20 = vld [vmem:[%s1 + $0x10] sm:$0xf]
  %v21 = vld [vmem:[%s1 + $0x14] sm:$0xf]
  %v22 = vld [vmem:[%s1 + $0x18] sm:$0xf]
  %v23 = vld [vmem:[%s1 + $0x1c] sm:$0xf]
  %v24 = vld [vmem:[%s1 + $0x20] sm:$0xf]
  %v25 = vld [vmem:[%s1 + $0x24] sm:$0xf]
  %v26 = vld [vmem:[%s1 + $0x28] sm:$0xf]
  %v27 = vld [vmem:[%s1 + $0x2c] sm:$0xf]
  %v28 = vld [vmem:[%s1 + $0x30] sm:$0xf]
  %v29 = vld [vmem:[%s1 + $0x34] sm:$0xf]
  %v30 = vld [vmem:[%s1 + $0x38] sm:$0xf]
  %v31 = vld [vmem:[%s1 + $0x3c] sm:$0xf]
  %v32 = vld [vmem:[%s1 + $0x40] sm:$0xf]
  %v33 = vld [vmem:[%s1 + $0x44] sm:$0xf]
  %v34 = vld [vmem:[%s1 + $0x48] sm:$0xf]
  %v35 = vld [vmem:[%s1 + $0x4c] sm:$0xf]
  %v36 = vld [vmem:[%s1 + $0x50] sm:$0xf]
  %v37 = vld [vmem:[%s1 + $0x54] sm:$0xf]
  %v38 = vld [vmem:[%s1 + $0x58] sm:$0xf]
  %v39 = vld [vmem:[%s1 + $0x5c] sm:$0xf]
  %v40 = vld [vmem:[%s1 + $0x60] sm:$0xf]
  %v41 = vld [vmem:[%s1 + $0x64] sm:$0xf]
  %v42 = vld [vmem:[%s1 + $0x68] sm:$0xf]
  %v43 = vld [vmem:[%s1 + $0x6c] sm:$0xf]
  %v44 = vld [vmem:[%s1 + $0x70] sm:$0xf]
  %v45 = vld [vmem:[%s1 + $0x74] sm:$0xf]
  %v46 = vld [vmem:[%s1 + $0x78] sm:$0xf]
  %v47 = vld [vmem:[%s1 + $0x7c] sm:$0xf]
  %v48 = vld [vmem:[%s1 + $0x80] sm:$0xf]
  %v49 = vld [vmem:[%s1 + $0x84] sm:$0xf]
  %v50 = vld [vmem:[%s1 + $0x88] sm:$0xf]
  %v51 = vld [vmem:[%s1 + $0x8c] sm:$0xf]
  %v52 = vld [vmem:[%s1 + $0x90] sm:$0xf]
  %v53 = vld [vmem:[%s1 + $0x94] sm:$0xf]
  %v54 = vld [vmem:[%s1 + $0x98] sm:$0xf]
  %v55 = vld [vmem:[%s1 + $0x9c] sm:$0xf]
  %v56 = vld [vmem:[%s1 + $0xa0] sm:$0xf]
  %v57 = vld [vmem:[%s1 + $0xa4] sm:$0xf]
  %v58 = vld [vmem:[%s1 + $0xa8] sm:$0xf]
  %v59 = vld [vmem:[%s1 + $0xac] sm:$0xf]
  %v60 = vld [vmem:[%s1 + $0xb0] sm:$0xf]
  %v61 = vld [vmem:[%s1 + $0xb4] sm:$0xf]
  %v62 = vld [vmem:[%s1 + $0xb8] sm:$0xf]
  %v63 = vld [vmem:[%s1 + $0xbc] sm:$0xf]
  %v64 = vld [vmem:[%s1 + $0xc0] sm:$0xf]
  %v65 = vld [vmem:[%s1 + $0xc4] sm:$0xf]
  %v66 = vld [vmem:[%s1 + $0xc8] sm:$0xf]
  %v67 = vld [vmem:[%s1 + $0xcc] sm:$0xf]
  %v68 = vld [vmem:[%s1 + $0xd0] sm:$0xf]
  %v69 = vld [vmem:[%s1 + $0xd4] sm:$0xf]
  %v70 = vld [vmem:[%s1 + $0xd8] sm:$0xf]
  %v71 = vld [vmem:[%s1 + $0xdc] sm:$0xf]
  %v72 = vld [vmem:[%s1 + $0xe0] sm:$0xf]
  %v73 = vld [vmem:[%s1 + $0xe4] sm:$0xf]
  %v74 = vld [vmem:[%s1 + $0xe8] sm:$0xf]
  %v75 = vld [vmem:[%s1 + $0xec] sm:$0xf]
  %v76 = vld [vmem:[%s1 + $0xf0] sm:$0xf]
  %v77 = vld [vmem:[%s1 + $0xf4] sm:$0xf]
  %v78 = vld [vmem:[%s1 + $0xf8] sm:$0xf]
  %v79 = vld [vmem:[%s1 + $0xfc] sm:$0xf]
  %v80 = vld [vmem:[%s1 + $0x100] sm:$0xf]
  %v81 = vld [vmem:[%s1 + $0x104] sm:$0xf]
  %v82 = vld [vmem:[%s1 + $0x108] sm:$0xf]
  %v83 = vld [vmem:[%s1 + $0x10c] sm:$0xf]
  %v84 = vld [vmem:[%s1 + $0x110] sm:$0xf]
  %v85 = vld [vmem:[%s1 + $0x114] sm:$0xf]
  %v86 = vld [vmem:[%s1 + $0x118] sm:$0xf]
  %v87 = vld [vmem:[%s1 + $0x11c] sm:$0xf]
  %89 = vst [vmem:[#allocation1] ss:$9 sm:$0xff] %v15
  %v90 = vld [vmem:[#allocation1] sm:$0xff]
  %v91 = vld [vmem:[#allocation1 + $0x9] sm:$0xff]
  %v92 = vld [vmem:[#allocation1 + $0x12] sm:$0xff]
  %v93 = vld [vmem:[#allocation1 + $0x1b] sm:$0xff]
  %v94 = vld [vmem:[#allocation1 + $0x24] sm:$0xff]
  %v171 = vunpack.c.l.b16 %v16
  %v172 = vunpack.c.l.b16 %v17
  %v173 = vunpack.c.l.b16 %v18
  %v174 = vunpack.c.l.b16 %v19
  %v175 = vunpack.c.l.b16 %v20
  %v176 = vunpack.c.l.b16 %v21
  %v177 = vunpack.c.l.b16 %v22
  %v178 = vunpack.c.l.b16 %v23
  %v179 = vunpack.c.l.b16 %v24
  %v180 = vunpack.c.l.b16 %v25
  %v181 = vunpack.c.l.b16 %v26
  %v182 = vunpack.c.l.b16 %v27
  %v183 = vunpack.c.l.b16 %v28
  %v184 = vunpack.c.l.b16 %v29
  %v185 = vunpack.c.l.b16 %v30
  %v186 = vunpack.c.l.b16 %v31
  %v187 = vunpack.c.l.b16 %v32
  %v188 = vunpack.c.l.b16 %v33
  %v189 = vunpack.c.l.b16 %v34
  %v190 = vunpack.c.l.b16 %v35
  %v191 = vunpack.c.l.b16 %v36
  %v192 = vunpack.c.l.b16 %v37
  %v193 = vunpack.c.l.b16 %v38
  %v194 = vunpack.c.l.b16 %v39
  %v195 = vunpack.c.l.b16 %v40
  %v196 = vunpack.c.l.b16 %v41
  %v197 = vunpack.c.l.b16 %v42
  %v198 = vunpack.c.l.b16 %v43
  %v199 = vunpack.c.l.b16 %v44
  %v200 = vunpack.c.l.b16 %v45
  %v201 = vunpack.c.l.b16 %v46
  %v202 = vunpack.c.l.b16 %v47
  %v203 = vunpack.c.l.b16 %v48
  %v204 = vunpack.c.l.b16 %v49
  %v205 = vunpack.c.l.b16 %v50
  %v206 = vunpack.c.l.b16 %v51
  %v207 = vunpack.c.l.b16 %v52
  %v208 = vunpack.c.l.b16 %v53
  %v209 = vunpack.c.l.b16 %v54
  %v210 = vunpack.c.l.b16 %v55
  %v211 = vunpack.c.l.b16 %v56
  %v212 = vunpack.c.l.b16 %v57
  %v213 = vunpack.c.l.b16 %v58
  %v214 = vunpack.c.l.b16 %v59
  %v215 = vunpack.c.l.b16 %v60
  %v216 = vunpack.c.l.b16 %v61
  %v217 = vunpack.c.l.b16 %v62
  %v218 = vunpack.c.l.b16 %v63
  %v219 = vunpack.c.l.b16 %v64
  %v220 = vunpack.c.l.b16 %v65
  %v221 = vunpack.c.l.b16 %v66
  %v222 = vunpack.c.l.b16 %v67
  %v223 = vunpack.c.l.b16 %v68
  %v224 = vunpack.c.l.b16 %v69
  %v225 = vunpack.c.l.b16 %v70
  %v226 = vunpack.c.l.b16 %v71
  %v227 = vunpack.c.l.b16 %v72
  %v228 = vunpack.c.l.b16 %v73
  %v229 = vunpack.c.l.b16 %v74
  %v230 = vunpack.c.l.b16 %v75
  %v231 = vunpack.c.l.b16 %v76
  %v232 = vunpack.c.l.b16 %v77
  %v233 = vunpack.c.l.b16 %v78
  %v234 = vunpack.c.l.b16 %v79
  %v235 = vunpack.c.l.b16 %v80
  %v236 = vunpack.c.l.b16 %v81
  %v237 = vunpack.c.l.b16 %v82
  %v238 = vunpack.c.l.b16 %v83
  %v239 = vunpack.c.l.b16 %v84
  %v240 = vunpack.c.l.b16 %v85
  %v241 = vunpack.c.l.b16 %v86
  %v242 = vunpack.c.l.b16 %v87
  %v243 = vpack.c.b16 %v172, %v171
  %v244 = vpack.c.b16 %v174, %v173
  %v245 = vpack.c.b16 %v176, %v175
  %v246 = vpack.c.b16 %v178, %v177
  %v247 = vpack.c.b16 %v180, %v179
  %v248 = vpack.c.b16 %v182, %v181
  %v249 = vpack.c.b16 %v184, %v183
  %v250 = vpack.c.b16 %v186, %v185
  %v251 = vpack.c.b16 %v188, %v187
  %v252 = vpack.c.b16 %v190, %v189
  %v253 = vpack.c.b16 %v192, %v191
  %v254 = vpack.c.b16 %v194, %v193
  %v255 = vpack.c.b16 %v196, %v195
  %v256 = vpack.c.b16 %v198, %v197
  %v257 = vpack.c.b16 %v200, %v199
  %v258 = vpack.c.b16 %v202, %v201
  %v259 = vpack.c.b16 %v204, %v203
  %v260 = vpack.c.b16 %v206, %v205
  %v261 = vpack.c.b16 %v208, %v207
  %v262 = vpack.c.b16 %v210, %v209
  %v263 = vpack.c.b16 %v212, %v211
  %v264 = vpack.c.b16 %v214, %v213
  %v265 = vpack.c.b16 %v216, %v215
  %v266 = vpack.c.b16 %v218, %v217
  %v267 = vpack.c.b16 %v220, %v219
  %v268 = vpack.c.b16 %v222, %v221
  %v269 = vpack.c.b16 %v224, %v223
  %v270 = vpack.c.b16 %v226, %v225
  %v271 = vpack.c.b16 %v228, %v227
  %v272 = vpack.c.b16 %v230, %v229
  %v273 = vpack.c.b16 %v232, %v231
  %v274 = vpack.c.b16 %v234, %v233
  %v275 = vpack.c.b16 %v236, %v235
  %v276 = vpack.c.b16 %v238, %v237
  %v277 = vpack.c.b16 %v240, %v239
  %v278 = vpack.c.b16 %v242, %v241
  %vm315 = vcmask 523264
  %v316 = vsel %vm315, %v94, 0
  %318 = vmatpush.bf16.msra.mxu0 %v250
  %319 = vmatpush.bf16.msra.mxu0 %v249
  %320 = vmatpush.bf16.msra.mxu0 %v248
  %321 = vmatpush.bf16.msra.mxu0 %v247
  %322 = vmatpush.bf16.msra.mxu0 %v246
  %323 = vmatpush.bf16.msra.mxu0 %v245
  %324 = vmatpush.bf16.msra.mxu0 %v244
  %325 = vmatpush.bf16.msra.mxu0 %v243
  %326 = vmatmul.bf16.gmra.mxu0 %v90
  %v327 = vpop.f32.mrf.mxu0
  %v328 = vadd.f32 0.0, %v327
  %v329 = vpop.f32.mrf.mxu0
  %330 = vdwg.mxu0
  %331 = vmatpush.bf16.msra.mxu0 %v258
  %332 = vmatpush.bf16.msra.mxu0 %v257
  %333 = vmatpush.bf16.msra.mxu0 %v256
  %334 = vmatpush.bf16.msra.mxu0 %v255
  %335 = vmatpush.bf16.msra.mxu0 %v254
  %336 = vmatpush.bf16.msra.mxu0 %v253
  %337 = vmatpush.bf16.msra.mxu0 %v252
  %338 = vmatpush.bf16.msra.mxu0 %v251
  %339 = vmatmul.bf16.gmra.mxu0 %v91
  %v340 = vpop.f32.mrf.mxu0
  %v341 = vadd.f32 %v328, %v340
  %v342 = vpop.f32.mrf.mxu0
  %343 = vdwg.mxu0
  %344 = vmatpush.bf16.msra.mxu0 %v266
  %345 = vmatpush.bf16.msra.mxu0 %v265
  %346 = vmatpush.bf16.msra.mxu0 %v264
  %347 = vmatpush.bf16.msra.mxu0 %v263
  %348 = vmatpush.bf16.msra.mxu0 %v262
  %349 = vmatpush.bf16.msra.mxu0 %v261
  %350 = vmatpush.bf16.msra.mxu0 %v260
  %351 = vmatpush.bf16.msra.mxu0 %v259
  %352 = vmatmul.bf16.gmra.mxu0 %v92
  %v353 = vpop.f32.mrf.mxu0
  %v354 = vadd.f32 %v341, %v353
  %v355 = vpop.f32.mrf.mxu0
  %356 = vdwg.mxu0
  %357 = vmatpush.bf16.msra.mxu0 %v274
  %358 = vmatpush.bf16.msra.mxu0 %v273
  %359 = vmatpush.bf16.msra.mxu0 %v272
  %360 = vmatpush.bf16.msra.mxu0 %v271
  %361 = vmatpush.bf16.msra.mxu0 %v270
  %362 = vmatpush.bf16.msra.mxu0 %v269
  %363 = vmatpush.bf16.msra.mxu0 %v268
  %364 = vmatpush.bf16.msra.mxu0 %v267
  %365 = vmatmul.bf16.gmra.mxu0 %v93
  %v366 = vpop.f32.mrf.mxu0
  %v367 = vadd.f32 %v354, %v366
  %v368 = vpop.f32.mrf.mxu0
  %369 = vdwg.mxu0
  %370 = vmatpush.bf16.msra.mxu0 0
  %371 = vmatpush.bf16.msra.mxu0 0
  %372 = vmatpush.bf16.msra.mxu0 0
  %373 = vmatpush.bf16.msra.mxu0 0
  %374 = vmatpush.bf16.msra.mxu0 %v278
  %375 = vmatpush.bf16.msra.mxu0 %v277
  %376 = vmatpush.bf16.msra.mxu0 %v276
  %377 = vmatpush.bf16.msra.mxu0 %v275
  %378 = vmatmul.bf16.gmra.mxu0 %v316
  %v379 = vpop.f32.mrf.mxu0
  %v380 = vadd.f32 %v367, %v379
  %v381 = vpop.f32.mrf.mxu0
  %382 = vdwg.mxu0
  %vm383 = vcmask 517120
  %384 = vst.msk [vmem:[%s2] sm:$0x3] %vm383, %v380
  %v385 = vld [vmem:[%s2] sm:$0x3]
  %v386 = vsel %vm383, %v385, 0.0
  %v387 = vrot.slane %v386, 4
  %v388 = vadd.f32 %v386, %v387
  %v389 = vrot.slane %v388, 2
  %v390 = vadd.f32 %v388, %v389
  %v391 = vrot.slane %v390, 1
  %v392 = vadd.f32 %v390, %v391
  %vm393 = vcmask 516096
  %394 = vst.msk [vmem:[%s3] sm:$0x1] %vm393, %v392
  %v395 = vmul.f32 %v385, %v385
  %v396 = vsel %vm383, %v395, 0.0
  %v397 = vrot.slane %v396, 4
  %v398 = vadd.f32 %v396, %v397
  %v399 = vrot.slane %v398, 2
  %v400 = vadd.f32 %v398, %v399
  %v401 = vrot.slane %v400, 1
  %v402 = vadd.f32 %v400, %v401
  %403 = vst.msk [vmem:[%s4] sm:$0x1] %vm393, %v402
  // Predicated region
  $region10: #{_lambda_.180} parent=0 // pred_check
    _
  $region11: #{_lambda_.180} parent=0 // pred_check_branch
    %405 = sbr.rel (0) target = $region13
  $region12: #{_lambda_.180} parent=0 // pred_region
    _
  $region13: #{_lambda_.180} parent=0 // pred_fallthru
    _
  // Predicated region
  $region14: #{_lambda_.180} parent=0 // pred_check
    _
  $region15: #{_lambda_.180} parent=0 // pred_check_branch
    %407 = sbr.rel (0) target = $region17
  $region16: #{_lambda_.180} parent=0 // pred_region
    _
  $region17: #{_lambda_.180} parent=0 // pred_fallthru
    _
  // Predicated region
  $region18: #{_lambda_.180} parent=0 // pred_check
    _
  $region19: #{_lambda_.180} parent=0 // pred_check_branch
    %409 = sbr.rel (0) target = $region21
  $region20: #{_lambda_.180} parent=0 // pred_region
    _
  $region21: #{_lambda_.180} parent=0 // pred_fallthru
    _
  // Predicated region
  $region22: #{_lambda_.180} parent=0 // pred_check
    _
  $region23: #{_lambda_.180} parent=0 // pred_check_branch
    %411 = sbr.rel (0) target = $region25
  $region24: #{_lambda_.180} parent=0 // pred_region
    _
  $region25: #{_lambda_.180} parent=0 // pred_fallthru
    _
  // Predicated region
  $region26: #{_lambda_.180} parent=0 // pred_check
    _
  $region27: #{_lambda_.180} parent=0 // pred_check_branch
    %413 = sbr.rel (0) target = $region29
  $region28: #{_lambda_.180} parent=0 // pred_region
    _
  $region29: #{_lambda_.180} parent=0 // pred_fallthru
    _
  // Predicated region
  $region30: #{_lambda_.180} parent=0 // pred_check
    _
  $region31: #{_lambda_.180} parent=0 // pred_check_branch
    %415 = sbr.rel (0) target = $region33
  $region32: #{_lambda_.180} parent=0 // pred_region
    _
  $region33: #{_lambda_.180} parent=0 // pred_fallthru
    _

// kernel: _lambda_.184
$region0: #{_lambda_.184}
  #allocation0 [shape = 'u32[]', space=smem, size = 0x4, offset = 0x4, fixed_abs, tag = 'smem constant byte address 0x4 - core index']
  #allocation1 [shape = 'u32[72,128]{1,0:T(1,128)}', space=vmem, size = 0x9000, scoped, tag = 'internal scratch']
  %s0 = inlined_call_operand.vmem [shape: bf16[2,256], index: 0, kind: input, shape index: {}]
  %s1 = inlined_call_operand.vmem [shape: bf16[256,64], index: 1, kind: input, shape index: {}]
  %s2 = inlined_call_operand.vmem [shape: f32[2,64], index: 2, kind: output, shape index: {0}]
  %s3 = inlined_call_operand.vmem [shape: f32[1,1,64], index: 3, kind: output, shape index: {1}]
  %s4 = inlined_call_operand.vmem [shape: f32[1,1,64], index: 4, kind: output, shape index: {2}]
  %5 = xla_tuple %s2, %s3, %s4
  %s6 = sld [smem:[#allocation0]]
  $region34: #{_lambda_.184} parent=0
    _
  %s8 = ssub.s32 1, %s6
  %s9 = scalar_select 0, %s8, %s6
  // Predicated region
  $region2: #{_lambda_.184} parent=0 // pred_check
    _
  $region3: #{_lambda_.184} parent=0 // pred_check_branch
    %11 = sbr.rel (0) target = $region5
  $region4: #{_lambda_.184} parent=0 // pred_region
    _
  $region5: #{_lambda_.184} parent=0 // pred_fallthru
    _
  // Predicated region
  $region6: #{_lambda_.184} parent=0 // pred_check
    _
  $region7: #{_lambda_.184} parent=0 // pred_check_branch
    %13 = sbr.rel (0) target = $region9
  $region8: #{_lambda_.184} parent=0 // pred_region
    _
  $region9: #{_lambda_.184} parent=0 // pred_fallthru
    _
  %v14 = vld [vmem:[%s0] sm:$0x3]
  %v15 = vld [vmem:[%s1] sm:$0xf]
  %v16 = vld [vmem:[%s1 + $0x4] sm:$0xf]
  %v17 = vld [vmem:[%s1 + $0x8] sm:$0xf]
  %v18 = vld [vmem:[%s1 + $0xc] sm:$0xf]
  %v19 = vld [vmem:[%s1 + $0x10] sm:$0xf]
  %v20 = vld [vmem:[%s1 + $0x14] sm:$0xf]
  %v21 = vld [vmem:[%s1 + $0x18] sm:$0xf]
  %v22 = vld [vmem:[%s1 + $0x1c] sm:$0xf]
  %v23 = vld [vmem:[%s1 + $0x20] sm:$0xf]
  %v24 = vld [vmem:[%s1 + $0x24] sm:$0xf]
  %v25 = vld [vmem:[%s1 + $0x28] sm:$0xf]
  %v26 = vld [vmem:[%s1 + $0x2c] sm:$0xf]
  %v27 = vld [vmem:[%s1 + $0x30] sm:$0xf]
  %v28 = vld [vmem:[%s1 + $0x34] sm:$0xf]
  %v29 = vld [vmem:[%s1 + $0x38] sm:$0xf]
  %v30 = vld [vmem:[%s1 + $0x3c] sm:$0xf]
  %v31 = vld [vmem:[%s1 + $0x40] sm:$0xf]
  %v32 = vld [vmem:[%s1 + $0x44] sm:$0xf]
  %v33 = vld [vmem:[%s1 + $0x48] sm:$0xf]
  %v34 = vld [vmem:[%s1 + $0x4c] sm:$0xf]
  %v35 = vld [vmem:[%s1 + $0x50] sm:$0xf]
  %v36 = vld [vmem:[%s1 + $0x54] sm:$0xf]
  %v37 = vld [vmem:[%s1 + $0x58] sm:$0xf]
  %v38 = vld [vmem:[%s1 + $0x5c] sm:$0xf]
  %v39 = vld [vmem:[%s1 + $0x60] sm:$0xf]
  %v40 = vld [vmem:[%s1 + $0x64] sm:$0xf]
  %v41 = vld [vmem:[%s1 + $0x68] sm:$0xf]
  %v42 = vld [vmem:[%s1 + $0x6c] sm:$0xf]
  %v43 = vld [vmem:[%s1 + $0x70] sm:$0xf]
  %v44 = vld [vmem:[%s1 + $0x74] sm:$0xf]
  %v45 = vld [vmem:[%s1 + $0x78] sm:$0xf]
  %v46 = vld [vmem:[%s1 + $0x7c] sm:$0xf]
  %48 = vst [vmem:[#allocation1] ss:$9 sm:$0xff] %v14
  %v49 = vld [vmem:[#allocation1] sm:$0xff]
  %v50 = vld [vmem:[#allocation1 + $0x9] sm:$0xff]
  %v85 = vunpack.c.l.b16 %v15
  %v86 = vunpack.c.l.b16 %v16
  %v87 = vunpack.c.l.b16 %v17
  %v88 = vunpack.c.l.b16 %v18
  %v89 = vunpack.c.l.b16 %v19
  %v90 = vunpack.c.l.b16 %v20
  %v91 = vunpack.c.l.b16 %v21
  %v92 = vunpack.c.l.b16 %v22
  %v93 = vunpack.c.l.b16 %v23
  %v94 = vunpack.c.l.b16 %v24
  %v95 = vunpack.c.l.b16 %v25
  %v96 = vunpack.c.l.b16 %v26
  %v97 = vunpack.c.l.b16 %v27
  %v98 = vunpack.c.l.b16 %v28
  %v99 = vunpack.c.l.b16 %v29
  %v100 = vunpack.c.l.b16 %v30
  %v101 = vunpack.c.l.b16 %v31
  %v102 = vunpack.c.l.b16 %v32
  %v103 = vunpack.c.l.b16 %v33
  %v104 = vunpack.c.l.b16 %v34
  %v105 = vunpack.c.l.b16 %v35
  %v106 = vunpack.c.l.b16 %v36
  %v107 = vunpack.c.l.b16 %v37
  %v108 = vunpack.c.l.b16 %v38
  %v109 = vunpack.c.l.b16 %v39
  %v110 = vunpack.c.l.b16 %v40
  %v111 = vunpack.c.l.b16 %v41
  %v112 = vunpack.c.l.b16 %v42
  %v113 = vunpack.c.l.b16 %v43
  %v114 = vunpack.c.l.b16 %v44
  %v115 = vunpack.c.l.b16 %v45
  %v116 = vunpack.c.l.b16 %v46
  %v117 = vpack.c.b16 %v86, %v85
  %v118 = vpack.c.b16 %v88, %v87
  %v119 = vpack.c.b16 %v90, %v89
  %v120 = vpack.c.b16 %v92, %v91
  %v121 = vpack.c.b16 %v94, %v93
  %v122 = vpack.c.b16 %v96, %v95
  %v123 = vpack.c.b16 %v98, %v97
  %v124 = vpack.c.b16 %v100, %v99
  %v125 = vpack.c.b16 %v102, %v101
  %v126 = vpack.c.b16 %v104, %v103
  %v127 = vpack.c.b16 %v106, %v105
  %v128 = vpack.c.b16 %v108, %v107
  %v129 = vpack.c.b16 %v110, %v109
  %v130 = vpack.c.b16 %v112, %v111
  %v131 = vpack.c.b16 %v114, %v113
  %v132 = vpack.c.b16 %v116, %v115
  %149 = vmatpush.bf16.msra.mxu0 %v124
  %150 = vmatpush.bf16.msra.mxu0 %v123
  %151 = vmatpush.bf16.msra.mxu0 %v122
  %152 = vmatpush.bf16.msra.mxu0 %v121
  %153 = vmatpush.bf16.msra.mxu0 %v120
  %154 = vmatpush.bf16.msra.mxu0 %v119
  %155 = vmatpush.bf16.msra.mxu0 %v118
  %156 = vmatpush.bf16.msra.mxu0 %v117
  %157 = vmatmul.bf16.gmra.mxu0 %v49
  %v158 = vpop.f32.mrf.mxu0
  %v159 = vadd.f32 0.0, %v158
  %v160 = vpop.f32.mrf.mxu0
  %161 = vdwg.mxu0
  %162 = vmatpush.bf16.msra.mxu0 %v132
  %163 = vmatpush.bf16.msra.mxu0 %v131
  %164 = vmatpush.bf16.msra.mxu0 %v130
  %165 = vmatpush.bf16.msra.mxu0 %v129
  %166 = vmatpush.bf16.msra.mxu0 %v128
  %167 = vmatpush.bf16.msra.mxu0 %v127
  %168 = vmatpush.bf16.msra.mxu0 %v126
  %169 = vmatpush.bf16.msra.mxu0 %v125
  %170 = vmatmul.bf16.gmra.mxu0 %v50
  %v171 = vpop.f32.mrf.mxu0
  %v172 = vadd.f32 %v159, %v171
  %v173 = vpop.f32.mrf.mxu0
  %174 = vdwg.mxu0
  %vm175 = vcmask 517120
  %176 = vst.msk [vmem:[%s2] sm:$0x3] %vm175, %v172
  %v177 = vld [vmem:[%s2] sm:$0x3]
  %v178 = vsel %vm175, %v177, 0.0
  %v179 = vrot.slane %v178, 4
  %v180 = vadd.f32 %v178, %v179
  %v181 = vrot.slane %v180, 2
  %v182 = vadd.f32 %v180, %v181
  %v183 = vrot.slane %v182, 1
  %v184 = vadd.f32 %v182, %v183
  %vm185 = vcmask 516096
  %186 = vst.msk [vmem:[%s3] sm:$0x1] %vm185, %v184
  %v187 = vmul.f32 %v177, %v177
  %v188 = vsel %vm175, %v187, 0.0
  %v189 = vrot.slane %v188, 4
  %v190 = vadd.f32 %v188, %v189
  %v191 = vrot.slane %v190, 2
  %v192 = vadd.f32 %v190, %v191
  %v193 = vrot.slane %v192, 1
  %v194 = vadd.f32 %v192, %v193
  %195 = vst.msk [vmem:[%s4] sm:$0x1] %vm185, %v194
  // Predicated region
  $region10: #{_lambda_.184} parent=0 // pred_check
    _
  $region11: #{_lambda_.184} parent=0 // pred_check_branch
    %197 = sbr.rel (0) target = $region13
  $region12: #{_lambda_.184} parent=0 // pred_region
    _
  $region13: #{_lambda_.184} parent=0 // pred_fallthru
    _
  // Predicated region
  $region14: #{_lambda_.184} parent=0 // pred_check
    _
  $region15: #{_lambda_.184} parent=0 // pred_check_branch
    %199 = sbr.rel (0) target = $region17
  $region16: #{_lambda_.184} parent=0 // pred_region
    _
  $region17: #{_lambda_.184} parent=0 // pred_fallthru
    _
  // Predicated region
  $region18: #{_lambda_.184} parent=0 // pred_check
    _
  $region19: #{_lambda_.184} parent=0 // pred_check_branch
    %201 = sbr.rel (0) target = $region21
  $region20: #{_lambda_.184} parent=0 // pred_region
    _
  $region21: #{_lambda_.184} parent=0 // pred_fallthru
    _
  // Predicated region
  $region22: #{_lambda_.184} parent=0 // pred_check
    _
  $region23: #{_lambda_.184} parent=0 // pred_check_branch
    %203 = sbr.rel (0) target = $region25
  $region24: #{_lambda_.184} parent=0 // pred_region
    _
  $region25: #{_lambda_.184} parent=0 // pred_fallthru
    _
  // Predicated region
  $region26: #{_lambda_.184} parent=0 // pred_check
    _
  $region27: #{_lambda_.184} parent=0 // pred_check_branch
    %205 = sbr.rel (0) target = $region29
  $region28: #{_lambda_.184} parent=0 // pred_region
    _
  $region29: #{_lambda_.184} parent=0 // pred_fallthru
    _
  // Predicated region
  $region30: #{_lambda_.184} parent=0 // pred_check
    _
  $region31: #{_lambda_.184} parent=0 // pred_check_branch
    %207 = sbr.rel (0) target = $region33
  $region32: #{_lambda_.184} parent=0 // pred_region
    _
  $region33: #{_lambda_.184} parent=0 // pred_fallthru
    _

</llo_original>
